<compile_context>
chip_gen: v7x
topology: tpu7x:2x2x1
jax: 0.10.0
libtpu: 0.0.40
codegen_flags: <defaults>
</compile_context>

<pallas_src>
import functools

import jax
import jax.numpy as jnp
from jax.experimental import pallas as pl
from jax.experimental.pallas import tpu as pltpu


# ----------------------------------------------------------------------------
# Fused TransitionDown kernel: conv3x3 -> (maxpool2x2 | stride-2) -> affine(BN)
# ----------------------------------------------------------------------------
def _transition_down_kernel(x0_ref, x1_ref, x2_ref, w_ref, scale_ref, shift_ref,
                            o_ref, acc_ref, *, H, W, pool):
    # x{dj}_ref : ((H+2)*W, Cin) bf16, column-shift dj of the zero-padded input,
    #             rows ordered (padded_row h, col w); tap (di, dj) of the 3x3
    #             conv is the contiguous, sublane-aligned row window
    #             [di*W, di*W + H*W) of x{dj}_ref.
    # w_ref     : (9, Cin, Cout) bf16, tap index t = di*3 + dj.
    # scale_ref/shift_ref : (1, Cout) f32 folded conv-bias + eval-BatchNorm.
    # o_ref     : (H//2, W//2, Cout) f32 output block (batch dim squeezed).
    # acc_ref   : (H*W, Cout) f32 VMEM accumulator scratch.
    Hp, Wp = H // 2, W // 2
    xs = (x0_ref, x1_ref, x2_ref)

    # 3x3 conv = 9 shifted-window matmuls (bf16 x bf16 -> f32 on the MXU),
    # accumulated in the f32 scratch — this is the K-reduction loop.
    acc_ref[...] = jnp.zeros_like(acc_ref)
    for di in range(3):
        for dj in range(3):
            lhs = xs[dj][pl.ds(di * W, H * W), :]            # (H*W, Cin) bf16
            acc_ref[...] += jnp.dot(lhs, w_ref[di * 3 + dj],
                                    preferred_element_type=jnp.float32)

    # Fused epilogue: 2x2 max-pool (pool=True) or stride-2 phase-(0,0)
    # subsampling (pool=False), then the folded conv-bias + BatchNorm affine.
    # acc rows are ordered (conv_row h, conv_col w); the strided reads pick the
    # even/odd columns, pooled row pairs are read at offsets base / base + W.
    scale = scale_ref[...]                                   # (1, Cout) f32
    shift = shift_ref[...]
    for p in range(Hp):
        base = 2 * p * W
        v = acc_ref[pl.ds(base, Wp, 2), :]                   # row 2p,   even cols
        if pool:
            v = jnp.maximum(v, acc_ref[pl.ds(base + 1, Wp, 2), :])      # row 2p,   odd cols
            v = jnp.maximum(v, acc_ref[pl.ds(base + W, Wp, 2), :])      # row 2p+1, even cols
            v = jnp.maximum(v, acc_ref[pl.ds(base + W + 1, Wp, 2), :])  # row 2p+1, odd cols
        o_ref[p] = (v * scale + shift).astype(o_ref.dtype)


def transition_down_pallas(x_nchw, params, *, original=True, eps=1e-5):
    """TransitionDown forward (eval mode).  x_nchw: (N, C, H, W) f32 -> (N, C//2, H//2, W//2)."""
    N, C, H, W = x_nchw.shape
    Cout = C // 2
    Hp, Wp = H // 2, W // 2
    assert H % 2 == 0 and W % 2 == 0, "spatial dims must be even"
    # W multiple of 8 keeps every in-kernel row slice sublane-aligned.
    assert W % 8 == 0, "TODO(synk): generalize to W not a multiple of 8"

    # NCHW -> NHWC, zero-pad by 1, bf16 operands for the MXU.
    x = jnp.transpose(x_nchw, (0, 2, 3, 1)).astype(jnp.float32)
    x_pad = jnp.pad(x, ((0, 0), (1, 1), (1, 1), (0, 0))).astype(jnp.bfloat16)
    # Three column-shifted, row-flattened copies of the padded input:
    #   xs[dj][n, h*W + w, :] == x_pad[n, h, w + dj, :]
    # (3x the input read instead of a 9x im2col slab; no in-kernel unaligned slices).
    xs = [x_pad[:, :, dj:dj + W, :].reshape(N, (H + 2) * W, C) for dj in range(3)]

    if original:
        w_conv = params['conv_w']                       # (Cout, C, 3, 3)
        bias = params['conv_b']
    else:
        # Grouped conv (groups = C//2, 2 input channels per group) expanded to an
        # equivalent block-diagonal dense weight.
        # TODO(synk): dense contraction wastes MXU columns on the zero blocks;
        #             a VPU grouped formulation would avoid this.
        w_g = params['dw_w']                            # (Cout, 2, 3, 3)
        g = jnp.arange(Cout)
        ci = 2 * g[:, None] + jnp.arange(2)[None, :]
        w_conv = jnp.zeros((Cout, C, 3, 3), w_g.dtype).at[g[:, None], ci].set(w_g)
        bias = params['dw_b']

    # (Cout, C, kh, kw) -> (9, C, Cout), tap index t = di*3 + dj.
    w9 = jnp.transpose(w_conv, (2, 3, 1, 0)).reshape(9, C, Cout).astype(jnp.bfloat16)

    # Fold conv bias + eval-mode BatchNorm into one post-pool affine
    # (a per-channel bias commutes with the spatial max).
    bn = params['bn']
    scale = (bn['gamma'] * jax.lax.rsqrt(bn['var'] + eps)).astype(jnp.float32)
    shift = (bn['beta'] - bn['mean'] * scale + scale * bias).astype(jnp.float32)

    kern = functools.partial(_transition_down_kernel, H=H, W=W, pool=original)
    out = pl.pallas_call(
        kern,
        out_shape=jax.ShapeDtypeStruct((N, Hp, Wp, Cout), jnp.float32),
        grid=(N,),
        in_specs=[
            pl.BlockSpec((None, (H + 2) * W, C), lambda n: (n, 0, 0)),
            pl.BlockSpec((None, (H + 2) * W, C), lambda n: (n, 0, 0)),
            pl.BlockSpec((None, (H + 2) * W, C), lambda n: (n, 0, 0)),
            pl.BlockSpec((9, C, Cout), lambda n: (0, 0, 0)),
            pl.BlockSpec((1, Cout), lambda n: (0, 0)),
            pl.BlockSpec((1, Cout), lambda n: (0, 0)),
        ],
        out_specs=pl.BlockSpec((None, Hp, Wp, Cout), lambda n: (n, 0, 0, 0)),
        scratch_shapes=[pltpu.VMEM((H * W, Cout), jnp.float32)],
        compiler_params=pltpu.CompilerParams(
            dimension_semantics=("parallel",),
            vmem_limit_bytes=32 * 1024 * 1024,
        ),
    )(xs[0], xs[1], xs[2], w9, scale.reshape(1, Cout), shift.reshape(1, Cout))

    return jnp.transpose(out, (0, 3, 1, 2))             # NHWC -> NCHW


# ----------------------------------------------------------------------------
# Pure-JAX reference (same bf16-cast operands, f32 math) for correctness check
# ----------------------------------------------------------------------------
def transition_down_reference(x_nchw, params, *, original=True, eps=1e-5):
    C = x_nchw.shape[1]
    x = x_nchw.astype(jnp.bfloat16).astype(jnp.float32)
    if original:
        w = params['conv_w'].astype(jnp.bfloat16).astype(jnp.float32)
        b = params['conv_b']
        y = jax.lax.conv_general_dilated(
            x, w, window_strides=(1, 1), padding=((1, 1), (1, 1)),
            dimension_numbers=('NCHW', 'OIHW', 'NCHW'),
            precision=jax.lax.Precision.HIGHEST)
        y = y + b[None, :, None, None]
        N, Co, H, W = y.shape
        y = jnp.max(y.reshape(N, Co, H // 2, 2, W // 2, 2), axis=(3, 5))
        # F.dropout(p=0.2, training=False) -> identity
    else:
        w = params['dw_w'].astype(jnp.bfloat16).astype(jnp.float32)
        b = params['dw_b']
        y = jax.lax.conv_general_dilated(
            x, w, window_strides=(2, 2), padding=((1, 1), (1, 1)),
            dimension_numbers=('NCHW', 'OIHW', 'NCHW'),
            feature_group_count=C // 2,
            precision=jax.lax.Precision.HIGHEST)
        y = y + b[None, :, None, None]
    bn = params['bn']
    scale = bn['gamma'] * jax.lax.rsqrt(bn['var'] + eps)
    shift = bn['beta'] - bn['mean'] * scale
    return y * scale[None, :, None, None] + shift[None, :, None, None]


# ----------------------------------------------------------------------------
# Main
# ----------------------------------------------------------------------------
if __name__ == "__main__":
    N, C, H, W = 2, 256, 16, 16               # in_channels=256 -> C_out=128 (lane-dense)
    Cout, Hp, Wp = C // 2, H // 2, W // 2

    keys = jax.random.split(jax.random.PRNGKey(0), 10)
    x = jax.random.normal(keys[0], (N, C, H, W), jnp.float32)
    params = {
        'conv_w': jax.random.normal(keys[1], (Cout, C, 3, 3), jnp.float32)
                  * (1.0 / (3.0 * (C ** 0.5))),
        'conv_b': jax.random.normal(keys[2], (Cout,), jnp.float32) * 0.1,
        'dw_w': jax.random.normal(keys[3], (Cout, 2, 3, 3), jnp.float32) * 0.2,
        'dw_b': jax.random.normal(keys[4], (Cout,), jnp.float32) * 0.1,
        'bn': {
            'gamma': jax.random.uniform(keys[5], (Cout,), jnp.float32, 0.5, 1.5),
            'beta': jax.random.normal(keys[6], (Cout,), jnp.float32) * 0.1,
            'mean': jax.random.normal(keys[7], (Cout,), jnp.float32) * 0.1,
            'var': jax.random.uniform(keys[8], (Cout,), jnp.float32, 0.5, 1.5),
        },
    }

    for original in (True, False):
        fwd = jax.jit(functools.partial(transition_down_pallas, original=original))
        y = jax.block_until_ready(fwd(x, params))
        assert y.shape == (N, Cout, Hp, Wp), y.shape
        y_ref = transition_down_reference(x, params, original=original)
        err = float(jnp.max(jnp.abs(y - y_ref)))
        assert err < 2e-3, f"original={original}: max abs err {err}"

    print("KERNEL_OK")
</pallas_src>

<mosaic_0001>
module attributes {stable_mosaic.version = 11 : i64} {
  func.func @_transition_down_kernel(%arg0: i32, %arg1: memref<1x288x256xbf16, #tpu.memory_space<vmem>>, %arg2: memref<1x288x256xbf16, #tpu.memory_space<vmem>>, %arg3: memref<1x288x256xbf16, #tpu.memory_space<vmem>>, %arg4: memref<9x256x128xbf16, #tpu.memory_space<vmem>>, %arg5: memref<1x128xf32, #tpu.memory_space<vmem>>, %arg6: memref<1x128xf32, #tpu.memory_space<vmem>>, %arg7: memref<1x8x8x128xf32, #tpu.memory_space<vmem>>, %arg8: memref<256x128xf32, #tpu.memory_space<vmem>>) attributes {dimension_semantics = [#tpu.dimension_semantics<parallel>], iteration_bounds = array<i64: 2>, scalar_prefetch = 0 : i64, scratch_operands = 1 : i64, tpu.core_type = #tpu.core_type<tc>, window_params = [{transform_indices = @transform_0, window_bounds = array<i64: 1, 288, 256>}, {transform_indices = @transform_1, window_bounds = array<i64: 1, 288, 256>}, {transform_indices = @transform_2, window_bounds = array<i64: 1, 288, 256>}, {pipeline_mode = #tpu.pipeline_mode<synchronous>, transform_indices = @transform_3, window_bounds = array<i64: 9, 256, 128>}, {pipeline_mode = #tpu.pipeline_mode<synchronous>, transform_indices = @transform_4, window_bounds = array<i64: 1, 128>}, {pipeline_mode = #tpu.pipeline_mode<synchronous>, transform_indices = @transform_5, window_bounds = array<i64: 1, 128>}, {transform_indices = @transform_6, window_bounds = array<i64: 1, 8, 8, 128>}]} {
    %cst = arith.constant 0.000000e+00 : f32
    %0 = vector.broadcast %cst : f32 to vector<256x128xf32>
    %c0 = arith.constant 0 : index
    %c0_0 = arith.constant 0 : index
    %1 = vector.load %arg8[%c0, %c0_0] : memref<256x128xf32, #tpu.memory_space<vmem>>, vector<256x128xf32>
    tpu.vector_store %arg8[%c0, %c0_0], %0 {strides = array<i32>} : memref<256x128xf32, #tpu.memory_space<vmem>>, vector<256x128xf32>,
    %c0_1 = arith.constant 0 : index
    %c0_2 = arith.constant 0 : index
    %c0_3 = arith.constant 0 : index
    %2 = vector.load %arg1[%c0_1, %c0_2, %c0_3] : memref<1x288x256xbf16, #tpu.memory_space<vmem>>, vector<1x256x256xbf16>
    %3 = vector.shape_cast %2 : vector<1x256x256xbf16> to vector<256x256xbf16>
    %c0_4 = arith.constant 0 : index
    %c0_5 = arith.constant 0 : index
    %4 = vector.load %arg8[%c0_4, %c0_5] : memref<256x128xf32, #tpu.memory_space<vmem>>, vector<256x128xf32>
    %c0_6 = arith.constant 0 : index
    %c0_7 = arith.constant 0 : index
    %c0_8 = arith.constant 0 : index
    %5 = vector.load %arg4[%c0_6, %c0_7, %c0_8] : memref<9x256x128xbf16, #tpu.memory_space<vmem>>, vector<1x256x128xbf16>
    %6 = vector.shape_cast %5 : vector<1x256x128xbf16> to vector<256x128xbf16>
    %cst_9 = arith.constant dense<0.000000e+00> : vector<256x128xf32>
    %7 = tpu.matmul %3, %6, %cst_9 {dimension_numbers = #tpu.dot_dimension_numbers<[1], [0], [0], [1], [0, 0, 1, 1], [], []>} : vector<256x256xbf16>, vector<256x128xbf16>, vector<256x128xf32> -> vector<256x128xf32>
    %8 = arith.addf %4, %7 : vector<256x128xf32>
    %c0_10 = arith.constant 0 : index
    %c0_11 = arith.constant 0 : index
    %9 = vector.load %arg8[%c0_10, %c0_11] : memref<256x128xf32, #tpu.memory_space<vmem>>, vector<256x128xf32>
    tpu.vector_store %arg8[%c0_10, %c0_11], %8 {strides = array<i32>} : memref<256x128xf32, #tpu.memory_space<vmem>>, vector<256x128xf32>,
    %c0_12 = arith.constant 0 : index
    %c0_13 = arith.constant 0 : index
    %c0_14 = arith.constant 0 : index
    %10 = vector.load %arg2[%c0_12, %c0_13, %c0_14] : memref<1x288x256xbf16, #tpu.memory_space<vmem>>, vector<1x256x256xbf16>
    %11 = vector.shape_cast %10 : vector<1x256x256xbf16> to vector<256x256xbf16>
    %c0_15 = arith.constant 0 : index
    %c0_16 = arith.constant 0 : index
    %12 = vector.load %arg8[%c0_15, %c0_16] : memref<256x128xf32, #tpu.memory_space<vmem>>, vector<256x128xf32>
    %c1 = arith.constant 1 : index
    %c0_17 = arith.constant 0 : index
    %c0_18 = arith.constant 0 : index
    %13 = vector.load %arg4[%c1, %c0_17, %c0_18] : memref<9x256x128xbf16, #tpu.memory_space<vmem>>, vector<1x256x128xbf16>
    %14 = vector.shape_cast %13 : vector<1x256x128xbf16> to vector<256x128xbf16>
    %cst_19 = arith.constant dense<0.000000e+00> : vector<256x128xf32>
    %15 = tpu.matmul %11, %14, %cst_19 {dimension_numbers = #tpu.dot_dimension_numbers<[1], [0], [0], [1], [0, 0, 1, 1], [], []>} : vector<256x256xbf16>, vector<256x128xbf16>, vector<256x128xf32> -> vector<256x128xf32>
    %16 = arith.addf %12, %15 : vector<256x128xf32>
    %c0_20 = arith.constant 0 : index
    %c0_21 = arith.constant 0 : index
    %17 = vector.load %arg8[%c0_20, %c0_21] : memref<256x128xf32, #tpu.memory_space<vmem>>, vector<256x128xf32>
    tpu.vector_store %arg8[%c0_20, %c0_21], %16 {strides = array<i32>} : memref<256x128xf32, #tpu.memory_space<vmem>>, vector<256x128xf32>,
    %c0_22 = arith.constant 0 : index
    %c0_23 = arith.constant 0 : index
    %c0_24 = arith.constant 0 : index
    %18 = vector.load %arg3[%c0_22, %c0_23, %c0_24] : memref<1x288x256xbf16, #tpu.memory_space<vmem>>, vector<1x256x256xbf16>
    %19 = vector.shape_cast %18 : vector<1x256x256xbf16> to vector<256x256xbf16>
    %c0_25 = arith.constant 0 : index
    %c0_26 = arith.constant 0 : index
    %20 = vector.load %arg8[%c0_25, %c0_26] : memref<256x128xf32, #tpu.memory_space<vmem>>, vector<256x128xf32>
    %c2 = arith.constant 2 : index
    %c0_27 = arith.constant 0 : index
    %c0_28 = arith.constant 0 : index
    %21 = vector.load %arg4[%c2, %c0_27, %c0_28] : memref<9x256x128xbf16, #tpu.memory_space<vmem>>, vector<1x256x128xbf16>
    %22 = vector.shape_cast %21 : vector<1x256x128xbf16> to vector<256x128xbf16>
    %cst_29 = arith.constant dense<0.000000e+00> : vector<256x128xf32>
    %23 = tpu.matmul %19, %22, %cst_29 {dimension_numbers = #tpu.dot_dimension_numbers<[1], [0], [0], [1], [0, 0, 1, 1], [], []>} : vector<256x256xbf16>, vector<256x128xbf16>, vector<256x128xf32> -> vector<256x128xf32>
    %24 = arith.addf %20, %23 : vector<256x128xf32>
    %c0_30 = arith.constant 0 : index
    %c0_31 = arith.constant 0 : index
    %25 = vector.load %arg8[%c0_30, %c0_31] : memref<256x128xf32, #tpu.memory_space<vmem>>, vector<256x128xf32>
    tpu.vector_store %arg8[%c0_30, %c0_31], %24 {strides = array<i32>} : memref<256x128xf32, #tpu.memory_space<vmem>>, vector<256x128xf32>,
    %c0_32 = arith.constant 0 : index
    %c16 = arith.constant 16 : index
    %c0_33 = arith.constant 0 : index
    %26 = vector.load %arg1[%c0_32, %c16, %c0_33] : memref<1x288x256xbf16, #tpu.memory_space<vmem>>, vector<1x256x256xbf16>
    %27 = vector.shape_cast %26 : vector<1x256x256xbf16> to vector<256x256xbf16>
    %c0_34 = arith.constant 0 : index
    %c0_35 = arith.constant 0 : index
    %28 = vector.load %arg8[%c0_34, %c0_35] : memref<256x128xf32, #tpu.memory_space<vmem>>, vector<256x128xf32>
    %c3 = arith.constant 3 : index
    %c0_36 = arith.constant 0 : index
    %c0_37 = arith.constant 0 : index
    %29 = vector.load %arg4[%c3, %c0_36, %c0_37] : memref<9x256x128xbf16, #tpu.memory_space<vmem>>, vector<1x256x128xbf16>
    %30 = vector.shape_cast %29 : vector<1x256x128xbf16> to vector<256x128xbf16>
    %cst_38 = arith.constant dense<0.000000e+00> : vector<256x128xf32>
    %31 = tpu.matmul %27, %30, %cst_38 {dimension_numbers = #tpu.dot_dimension_numbers<[1], [0], [0], [1], [0, 0, 1, 1], [], []>} : vector<256x256xbf16>, vector<256x128xbf16>, vector<256x128xf32> -> vector<256x128xf32>
    %32 = arith.addf %28, %31 : vector<256x128xf32>
    %c0_39 = arith.constant 0 : index
    %c0_40 = arith.constant 0 : index
    %33 = vector.load %arg8[%c0_39, %c0_40] : memref<256x128xf32, #tpu.memory_space<vmem>>, vector<256x128xf32>
    tpu.vector_store %arg8[%c0_39, %c0_40], %32 {strides = array<i32>} : memref<256x128xf32, #tpu.memory_space<vmem>>, vector<256x128xf32>,
    %c0_41 = arith.constant 0 : index
    %c16_42 = arith.constant 16 : index
    %c0_43 = arith.constant 0 : index
    %34 = vector.load %arg2[%c0_41, %c16_42, %c0_43] : memref<1x288x256xbf16, #tpu.memory_space<vmem>>, vector<1x256x256xbf16>
    %35 = vector.shape_cast %34 : vector<1x256x256xbf16> to vector<256x256xbf16>
    %c0_44 = arith.constant 0 : index
    %c0_45 = arith.constant 0 : index
    %36 = vector.load %arg8[%c0_44, %c0_45] : memref<256x128xf32, #tpu.memory_space<vmem>>, vector<256x128xf32>
    %c4 = arith.constant 4 : index
    %c0_46 = arith.constant 0 : index
    %c0_47 = arith.constant 0 : index
    %37 = vector.load %arg4[%c4, %c0_46, %c0_47] : memref<9x256x128xbf16, #tpu.memory_space<vmem>>, vector<1x256x128xbf16>
    %38 = vector.shape_cast %37 : vector<1x256x128xbf16> to vector<256x128xbf16>
    %cst_48 = arith.constant dense<0.000000e+00> : vector<256x128xf32>
    %39 = tpu.matmul %35, %38, %cst_48 {dimension_numbers = #tpu.dot_dimension_numbers<[1], [0], [0], [1], [0, 0, 1, 1], [], []>} : vector<256x256xbf16>, vector<256x128xbf16>, vector<256x128xf32> -> vector<256x128xf32>
    %40 = arith.addf %36, %39 : vector<256x128xf32>
    %c0_49 = arith.constant 0 : index
    %c0_50 = arith.constant 0 : index
    %41 = vector.load %arg8[%c0_49, %c0_50] : memref<256x128xf32, #tpu.memory_space<vmem>>, vector<256x128xf32>
    tpu.vector_store %arg8[%c0_49, %c0_50], %40 {strides = array<i32>} : memref<256x128xf32, #tpu.memory_space<vmem>>, vector<256x128xf32>,
    %c0_51 = arith.constant 0 : index
    %c16_52 = arith.constant 16 : index
    %c0_53 = arith.constant 0 : index
    %42 = vector.load %arg3[%c0_51, %c16_52, %c0_53] : memref<1x288x256xbf16, #tpu.memory_space<vmem>>, vector<1x256x256xbf16>
    %43 = vector.shape_cast %42 : vector<1x256x256xbf16> to vector<256x256xbf16>
    %c0_54 = arith.constant 0 : index
    %c0_55 = arith.constant 0 : index
    %44 = vector.load %arg8[%c0_54, %c0_55] : memref<256x128xf32, #tpu.memory_space<vmem>>, vector<256x128xf32>
    %c5 = arith.constant 5 : index
    %c0_56 = arith.constant 0 : index
    %c0_57 = arith.constant 0 : index
    %45 = vector.load %arg4[%c5, %c0_56, %c0_57] : memref<9x256x128xbf16, #tpu.memory_space<vmem>>, vector<1x256x128xbf16>
    %46 = vector.shape_cast %45 : vector<1x256x128xbf16> to vector<256x128xbf16>
    %cst_58 = arith.constant dense<0.000000e+00> : vector<256x128xf32>
    %47 = tpu.matmul %43, %46, %cst_58 {dimension_numbers = #tpu.dot_dimension_numbers<[1], [0], [0], [1], [0, 0, 1, 1], [], []>} : vector<256x256xbf16>, vector<256x128xbf16>, vector<256x128xf32> -> vector<256x128xf32>
    %48 = arith.addf %44, %47 : vector<256x128xf32>
    %c0_59 = arith.constant 0 : index
    %c0_60 = arith.constant 0 : index
    %49 = vector.load %arg8[%c0_59, %c0_60] : memref<256x128xf32, #tpu.memory_space<vmem>>, vector<256x128xf32>
    tpu.vector_store %arg8[%c0_59, %c0_60], %48 {strides = array<i32>} : memref<256x128xf32, #tpu.memory_space<vmem>>, vector<256x128xf32>,
    %c0_61 = arith.constant 0 : index
    %c32 = arith.constant 32 : index
    %c0_62 = arith.constant 0 : index
    %50 = vector.load %arg1[%c0_61, %c32, %c0_62] : memref<1x288x256xbf16, #tpu.memory_space<vmem>>, vector<1x256x256xbf16>
    %51 = vector.shape_cast %50 : vector<1x256x256xbf16> to vector<256x256xbf16>
    %c0_63 = arith.constant 0 : index
    %c0_64 = arith.constant 0 : index
    %52 = vector.load %arg8[%c0_63, %c0_64] : memref<256x128xf32, #tpu.memory_space<vmem>>, vector<256x128xf32>
    %c6 = arith.constant 6 : index
    %c0_65 = arith.constant 0 : index
    %c0_66 = arith.constant 0 : index
    %53 = vector.load %arg4[%c6, %c0_65, %c0_66] : memref<9x256x128xbf16, #tpu.memory_space<vmem>>, vector<1x256x128xbf16>
    %54 = vector.shape_cast %53 : vector<1x256x128xbf16> to vector<256x128xbf16>
    %cst_67 = arith.constant dense<0.000000e+00> : vector<256x128xf32>
    %55 = tpu.matmul %51, %54, %cst_67 {dimension_numbers = #tpu.dot_dimension_numbers<[1], [0], [0], [1], [0, 0, 1, 1], [], []>} : vector<256x256xbf16>, vector<256x128xbf16>, vector<256x128xf32> -> vector<256x128xf32>
    %56 = arith.addf %52, %55 : vector<256x128xf32>
    %c0_68 = arith.constant 0 : index
    %c0_69 = arith.constant 0 : index
    %57 = vector.load %arg8[%c0_68, %c0_69] : memref<256x128xf32, #tpu.memory_space<vmem>>, vector<256x128xf32>
    tpu.vector_store %arg8[%c0_68, %c0_69], %56 {strides = array<i32>} : memref<256x128xf32, #tpu.memory_space<vmem>>, vector<256x128xf32>,
    %c0_70 = arith.constant 0 : index
    %c32_71 = arith.constant 32 : index
    %c0_72 = arith.constant 0 : index
    %58 = vector.load %arg2[%c0_70, %c32_71, %c0_72] : memref<1x288x256xbf16, #tpu.memory_space<vmem>>, vector<1x256x256xbf16>
    %59 = vector.shape_cast %58 : vector<1x256x256xbf16> to vector<256x256xbf16>
    %c0_73 = arith.constant 0 : index
    %c0_74 = arith.constant 0 : index
    %60 = vector.load %arg8[%c0_73, %c0_74] : memref<256x128xf32, #tpu.memory_space<vmem>>, vector<256x128xf32>
    %c7 = arith.constant 7 : index
    %c0_75 = arith.constant 0 : index
    %c0_76 = arith.constant 0 : index
    %61 = vector.load %arg4[%c7, %c0_75, %c0_76] : memref<9x256x128xbf16, #tpu.memory_space<vmem>>, vector<1x256x128xbf16>
    %62 = vector.shape_cast %61 : vector<1x256x128xbf16> to vector<256x128xbf16>
    %cst_77 = arith.constant dense<0.000000e+00> : vector<256x128xf32>
    %63 = tpu.matmul %59, %62, %cst_77 {dimension_numbers = #tpu.dot_dimension_numbers<[1], [0], [0], [1], [0, 0, 1, 1], [], []>} : vector<256x256xbf16>, vector<256x128xbf16>, vector<256x128xf32> -> vector<256x128xf32>
    %64 = arith.addf %60, %63 : vector<256x128xf32>
    %c0_78 = arith.constant 0 : index
    %c0_79 = arith.constant 0 : index
    %65 = vector.load %arg8[%c0_78, %c0_79] : memref<256x128xf32, #tpu.memory_space<vmem>>, vector<256x128xf32>
    tpu.vector_store %arg8[%c0_78, %c0_79], %64 {strides = array<i32>} : memref<256x128xf32, #tpu.memory_space<vmem>>, vector<256x128xf32>,
    %c0_80 = arith.constant 0 : index
    %c32_81 = arith.constant 32 : index
    %c0_82 = arith.constant 0 : index
    %66 = vector.load %arg3[%c0_80, %c32_81, %c0_82] : memref<1x288x256xbf16, #tpu.memory_space<vmem>>, vector<1x256x256xbf16>
    %67 = vector.shape_cast %66 : vector<1x256x256xbf16> to vector<256x256xbf16>
    %c0_83 = arith.constant 0 : index
    %c0_84 = arith.constant 0 : index
    %68 = vector.load %arg8[%c0_83, %c0_84] : memref<256x128xf32, #tpu.memory_space<vmem>>, vector<256x128xf32>
    %c8 = arith.constant 8 : index
    %c0_85 = arith.constant 0 : index
    %c0_86 = arith.constant 0 : index
    %69 = vector.load %arg4[%c8, %c0_85, %c0_86] : memref<9x256x128xbf16, #tpu.memory_space<vmem>>, vector<1x256x128xbf16>
    %70 = vector.shape_cast %69 : vector<1x256x128xbf16> to vector<256x128xbf16>
    %cst_87 = arith.constant dense<0.000000e+00> : vector<256x128xf32>
    %71 = tpu.matmul %67, %70, %cst_87 {dimension_numbers = #tpu.dot_dimension_numbers<[1], [0], [0], [1], [0, 0, 1, 1], [], []>} : vector<256x256xbf16>, vector<256x128xbf16>, vector<256x128xf32> -> vector<256x128xf32>
    %72 = arith.addf %68, %71 : vector<256x128xf32>
    %c0_88 = arith.constant 0 : index
    %c0_89 = arith.constant 0 : index
    %73 = vector.load %arg8[%c0_88, %c0_89] : memref<256x128xf32, #tpu.memory_space<vmem>>, vector<256x128xf32>
    tpu.vector_store %arg8[%c0_88, %c0_89], %72 {strides = array<i32>} : memref<256x128xf32, #tpu.memory_space<vmem>>, vector<256x128xf32>,
    %c0_90 = arith.constant 0 : index
    %c0_91 = arith.constant 0 : index
    %74 = vector.load %arg5[%c0_90, %c0_91] : memref<1x128xf32, #tpu.memory_space<vmem>>, vector<1x128xf32>
    %c0_92 = arith.constant 0 : index
    %c0_93 = arith.constant 0 : index
    %75 = vector.load %arg6[%c0_92, %c0_93] : memref<1x128xf32, #tpu.memory_space<vmem>>, vector<1x128xf32>
    %c0_94 = arith.constant 0 : index
    %c0_95 = arith.constant 0 : index
    %76 = tpu.strided_load %arg8[%c0_94, %c0_95] {strides = array<i32: 2, 1>} : memref<256x128xf32, #tpu.memory_space<vmem>>, vector<8x128xf32>
    %c1_96 = arith.constant 1 : index
    %c0_97 = arith.constant 0 : index
    %77 = tpu.strided_load %arg8[%c1_96, %c0_97] {strides = array<i32: 2, 1>} : memref<256x128xf32, #tpu.memory_space<vmem>>, vector<8x128xf32>
    %78 = arith.maximumf %76, %77 : vector<8x128xf32>
    %c16_98 = arith.constant 16 : index
    %c0_99 = arith.constant 0 : index
    %79 = tpu.strided_load %arg8[%c16_98, %c0_99] {strides = array<i32: 2, 1>} : memref<256x128xf32, #tpu.memory_space<vmem>>, vector<8x128xf32>
    %80 = arith.maximumf %78, %79 : vector<8x128xf32>
    %c17 = arith.constant 17 : index
    %c0_100 = arith.constant 0 : index
    %81 = tpu.strided_load %arg8[%c17, %c0_100] {strides = array<i32: 2, 1>} : memref<256x128xf32, #tpu.memory_space<vmem>>, vector<8x128xf32>
    %82 = arith.maximumf %80, %81 : vector<8x128xf32>
    %83 = vector.broadcast %74 : vector<1x128xf32> to vector<8x128xf32>
    %84 = arith.mulf %82, %83 : vector<8x128xf32>
    %85 = vector.broadcast %75 : vector<1x128xf32> to vector<8x128xf32>
    %86 = arith.addf %84, %85 : vector<8x128xf32>
    %c0_101 = arith.constant 0 : index
    %c0_102 = arith.constant 0 : index
    %c0_103 = arith.constant 0 : index
    %c0_104 = arith.constant 0 : index
    %87 = vector.load %arg7[%c0_101, %c0_102, %c0_103, %c0_104] : memref<1x8x8x128xf32, #tpu.memory_space<vmem>>, vector<1x1x8x128xf32>
    %88 = vector.shape_cast %87 : vector<1x1x8x128xf32> to vector<8x128xf32>
    %89 = vector.shape_cast %86 : vector<8x128xf32> to vector<1x1x8x128xf32>
    tpu.vector_store %arg7[%c0_101, %c0_102, %c0_103, %c0_104], %89 {strides = array<i32>} : memref<1x8x8x128xf32, #tpu.memory_space<vmem>>, vector<1x1x8x128xf32>,
    %c32_105 = arith.constant 32 : index
    %c0_106 = arith.constant 0 : index
    %90 = tpu.strided_load %arg8[%c32_105, %c0_106] {strides = array<i32: 2, 1>} : memref<256x128xf32, #tpu.memory_space<vmem>>, vector<8x128xf32>
    %c33 = arith.constant 33 : index
    %c0_107 = arith.constant 0 : index
    %91 = tpu.strided_load %arg8[%c33, %c0_107] {strides = array<i32: 2, 1>} : memref<256x128xf32, #tpu.memory_space<vmem>>, vector<8x128xf32>
    %92 = arith.maximumf %90, %91 : vector<8x128xf32>
    %c48 = arith.constant 48 : index
    %c0_108 = arith.constant 0 : index
    %93 = tpu.strided_load %arg8[%c48, %c0_108] {strides = array<i32: 2, 1>} : memref<256x128xf32, #tpu.memory_space<vmem>>, vector<8x128xf32>
    %94 = arith.maximumf %92, %93 : vector<8x128xf32>
    %c49 = arith.constant 49 : index
    %c0_109 = arith.constant 0 : index
    %95 = tpu.strided_load %arg8[%c49, %c0_109] {strides = array<i32: 2, 1>} : memref<256x128xf32, #tpu.memory_space<vmem>>, vector<8x128xf32>
    %96 = arith.maximumf %94, %95 : vector<8x128xf32>
    %97 = vector.broadcast %74 : vector<1x128xf32> to vector<8x128xf32>
    %98 = arith.mulf %96, %97 : vector<8x128xf32>
    %99 = vector.broadcast %75 : vector<1x128xf32> to vector<8x128xf32>
    %100 = arith.addf %98, %99 : vector<8x128xf32>
    %c0_110 = arith.constant 0 : index
    %c1_111 = arith.constant 1 : index
    %c0_112 = arith.constant 0 : index
    %c0_113 = arith.constant 0 : index
    %101 = vector.load %arg7[%c0_110, %c1_111, %c0_112, %c0_113] : memref<1x8x8x128xf32, #tpu.memory_space<vmem>>, vector<1x1x8x128xf32>
    %102 = vector.shape_cast %101 : vector<1x1x8x128xf32> to vector<8x128xf32>
    %103 = vector.shape_cast %100 : vector<8x128xf32> to vector<1x1x8x128xf32>
    tpu.vector_store %arg7[%c0_110, %c1_111, %c0_112, %c0_113], %103 {strides = array<i32>} : memref<1x8x8x128xf32, #tpu.memory_space<vmem>>, vector<1x1x8x128xf32>,
    %c64 = arith.constant 64 : index
    %c0_114 = arith.constant 0 : index
    %104 = tpu.strided_load %arg8[%c64, %c0_114] {strides = array<i32: 2, 1>} : memref<256x128xf32, #tpu.memory_space<vmem>>, vector<8x128xf32>
    %c65 = arith.constant 65 : index
    %c0_115 = arith.constant 0 : index
    %105 = tpu.strided_load %arg8[%c65, %c0_115] {strides = array<i32: 2, 1>} : memref<256x128xf32, #tpu.memory_space<vmem>>, vector<8x128xf32>
    %106 = arith.maximumf %104, %105 : vector<8x128xf32>
    %c80 = arith.constant 80 : index
    %c0_116 = arith.constant 0 : index
    %107 = tpu.strided_load %arg8[%c80, %c0_116] {strides = array<i32: 2, 1>} : memref<256x128xf32, #tpu.memory_space<vmem>>, vector<8x128xf32>
    %108 = arith.maximumf %106, %107 : vector<8x128xf32>
    %c81 = arith.constant 81 : index
    %c0_117 = arith.constant 0 : index
    %109 = tpu.strided_load %arg8[%c81, %c0_117] {strides = array<i32: 2, 1>} : memref<256x128xf32, #tpu.memory_space<vmem>>, vector<8x128xf32>
    %110 = arith.maximumf %108, %109 : vector<8x128xf32>
    %111 = vector.broadcast %74 : vector<1x128xf32> to vector<8x128xf32>
    %112 = arith.mulf %110, %111 : vector<8x128xf32>
    %113 = vector.broadcast %75 : vector<1x128xf32> to vector<8x128xf32>
    %114 = arith.addf %112, %113 : vector<8x128xf32>
    %c0_118 = arith.constant 0 : index
    %c2_119 = arith.constant 2 : index
    %c0_120 = arith.constant 0 : index
    %c0_121 = arith.constant 0 : index
    %115 = vector.load %arg7[%c0_118, %c2_119, %c0_120, %c0_121] : memref<1x8x8x128xf32, #tpu.memory_space<vmem>>, vector<1x1x8x128xf32>
    %116 = vector.shape_cast %115 : vector<1x1x8x128xf32> to vector<8x128xf32>
    %117 = vector.shape_cast %114 : vector<8x128xf32> to vector<1x1x8x128xf32>
    tpu.vector_store %arg7[%c0_118, %c2_119, %c0_120, %c0_121], %117 {strides = array<i32>} : memref<1x8x8x128xf32, #tpu.memory_space<vmem>>, vector<1x1x8x128xf32>,
    %c96 = arith.constant 96 : index
    %c0_122 = arith.constant 0 : index
    %118 = tpu.strided_load %arg8[%c96, %c0_122] {strides = array<i32: 2, 1>} : memref<256x128xf32, #tpu.memory_space<vmem>>, vector<8x128xf32>
    %c97 = arith.constant 97 : index
    %c0_123 = arith.constant 0 : index
    %119 = tpu.strided_load %arg8[%c97, %c0_123] {strides = array<i32: 2, 1>} : memref<256x128xf32, #tpu.memory_space<vmem>>, vector<8x128xf32>
    %120 = arith.maximumf %118, %119 : vector<8x128xf32>
    %c112 = arith.constant 112 : index
    %c0_124 = arith.constant 0 : index
    %121 = tpu.strided_load %arg8[%c112, %c0_124] {strides = array<i32: 2, 1>} : memref<256x128xf32, #tpu.memory_space<vmem>>, vector<8x128xf32>
    %122 = arith.maximumf %120, %121 : vector<8x128xf32>
    %c113 = arith.constant 113 : index
    %c0_125 = arith.constant 0 : index
    %123 = tpu.strided_load %arg8[%c113, %c0_125] {strides = array<i32: 2, 1>} : memref<256x128xf32, #tpu.memory_space<vmem>>, vector<8x128xf32>
    %124 = arith.maximumf %122, %123 : vector<8x128xf32>
    %125 = vector.broadcast %74 : vector<1x128xf32> to vector<8x128xf32>
    %126 = arith.mulf %124, %125 : vector<8x128xf32>
    %127 = vector.broadcast %75 : vector<1x128xf32> to vector<8x128xf32>
    %128 = arith.addf %126, %127 : vector<8x128xf32>
    %c0_126 = arith.constant 0 : index
    %c3_127 = arith.constant 3 : index
    %c0_128 = arith.constant 0 : index
    %c0_129 = arith.constant 0 : index
    %129 = vector.load %arg7[%c0_126, %c3_127, %c0_128, %c0_129] : memref<1x8x8x128xf32, #tpu.memory_space<vmem>>, vector<1x1x8x128xf32>
    %130 = vector.shape_cast %129 : vector<1x1x8x128xf32> to vector<8x128xf32>
    %131 = vector.shape_cast %128 : vector<8x128xf32> to vector<1x1x8x128xf32>
    tpu.vector_store %arg7[%c0_126, %c3_127, %c0_128, %c0_129], %131 {strides = array<i32>} : memref<1x8x8x128xf32, #tpu.memory_space<vmem>>, vector<1x1x8x128xf32>,
    %c128 = arith.constant 128 : index
    %c0_130 = arith.constant 0 : index
    %132 = tpu.strided_load %arg8[%c128, %c0_130] {strides = array<i32: 2, 1>} : memref<256x128xf32, #tpu.memory_space<vmem>>, vector<8x128xf32>
    %c129 = arith.constant 129 : index
    %c0_131 = arith.constant 0 : index
    %133 = tpu.strided_load %arg8[%c129, %c0_131] {strides = array<i32: 2, 1>} : memref<256x128xf32, #tpu.memory_space<vmem>>, vector<8x128xf32>
    %134 = arith.maximumf %132, %133 : vector<8x128xf32>
    %c144 = arith.constant 144 : index
    %c0_132 = arith.constant 0 : index
    %135 = tpu.strided_load %arg8[%c144, %c0_132] {strides = array<i32: 2, 1>} : memref<256x128xf32, #tpu.memory_space<vmem>>, vector<8x128xf32>
    %136 = arith.maximumf %134, %135 : vector<8x128xf32>
    %c145 = arith.constant 145 : index
    %c0_133 = arith.constant 0 : index
    %137 = tpu.strided_load %arg8[%c145, %c0_133] {strides = array<i32: 2, 1>} : memref<256x128xf32, #tpu.memory_space<vmem>>, vector<8x128xf32>
    %138 = arith.maximumf %136, %137 : vector<8x128xf32>
    %139 = vector.broadcast %74 : vector<1x128xf32> to vector<8x128xf32>
    %140 = arith.mulf %138, %139 : vector<8x128xf32>
    %141 = vector.broadcast %75 : vector<1x128xf32> to vector<8x128xf32>
    %142 = arith.addf %140, %141 : vector<8x128xf32>
    %c0_134 = arith.constant 0 : index
    %c4_135 = arith.constant 4 : index
    %c0_136 = arith.constant 0 : index
    %c0_137 = arith.constant 0 : index
    %143 = vector.load %arg7[%c0_134, %c4_135, %c0_136, %c0_137] : memref<1x8x8x128xf32, #tpu.memory_space<vmem>>, vector<1x1x8x128xf32>
    %144 = vector.shape_cast %143 : vector<1x1x8x128xf32> to vector<8x128xf32>
    %145 = vector.shape_cast %142 : vector<8x128xf32> to vector<1x1x8x128xf32>
    tpu.vector_store %arg7[%c0_134, %c4_135, %c0_136, %c0_137], %145 {strides = array<i32>} : memref<1x8x8x128xf32, #tpu.memory_space<vmem>>, vector<1x1x8x128xf32>,
    %c160 = arith.constant 160 : index
    %c0_138 = arith.constant 0 : index
    %146 = tpu.strided_load %arg8[%c160, %c0_138] {strides = array<i32: 2, 1>} : memref<256x128xf32, #tpu.memory_space<vmem>>, vector<8x128xf32>
    %c161 = arith.constant 161 : index
    %c0_139 = arith.constant 0 : index
    %147 = tpu.strided_load %arg8[%c161, %c0_139] {strides = array<i32: 2, 1>} : memref<256x128xf32, #tpu.memory_space<vmem>>, vector<8x128xf32>
    %148 = arith.maximumf %146, %147 : vector<8x128xf32>
    %c176 = arith.constant 176 : index
    %c0_140 = arith.constant 0 : index
    %149 = tpu.strided_load %arg8[%c176, %c0_140] {strides = array<i32: 2, 1>} : memref<256x128xf32, #tpu.memory_space<vmem>>, vector<8x128xf32>
    %150 = arith.maximumf %148, %149 : vector<8x128xf32>
    %c177 = arith.constant 177 : index
    %c0_141 = arith.constant 0 : index
    %151 = tpu.strided_load %arg8[%c177, %c0_141] {strides = array<i32: 2, 1>} : memref<256x128xf32, #tpu.memory_space<vmem>>, vector<8x128xf32>
    %152 = arith.maximumf %150, %151 : vector<8x128xf32>
    %153 = vector.broadcast %74 : vector<1x128xf32> to vector<8x128xf32>
    %154 = arith.mulf %152, %153 : vector<8x128xf32>
    %155 = vector.broadcast %75 : vector<1x128xf32> to vector<8x128xf32>
    %156 = arith.addf %154, %155 : vector<8x128xf32>
    %c0_142 = arith.constant 0 : index
    %c5_143 = arith.constant 5 : index
    %c0_144 = arith.constant 0 : index
    %c0_145 = arith.constant 0 : index
    %157 = vector.load %arg7[%c0_142, %c5_143, %c0_144, %c0_145] : memref<1x8x8x128xf32, #tpu.memory_space<vmem>>, vector<1x1x8x128xf32>
    %158 = vector.shape_cast %157 : vector<1x1x8x128xf32> to vector<8x128xf32>
    %159 = vector.shape_cast %156 : vector<8x128xf32> to vector<1x1x8x128xf32>
    tpu.vector_store %arg7[%c0_142, %c5_143, %c0_144, %c0_145], %159 {strides = array<i32>} : memref<1x8x8x128xf32, #tpu.memory_space<vmem>>, vector<1x1x8x128xf32>,
    %c192 = arith.constant 192 : index
    %c0_146 = arith.constant 0 : index
    %160 = tpu.strided_load %arg8[%c192, %c0_146] {strides = array<i32: 2, 1>} : memref<256x128xf32, #tpu.memory_space<vmem>>, vector<8x128xf32>
    %c193 = arith.constant 193 : index
    %c0_147 = arith.constant 0 : index
    %161 = tpu.strided_load %arg8[%c193, %c0_147] {strides = array<i32: 2, 1>} : memref<256x128xf32, #tpu.memory_space<vmem>>, vector<8x128xf32>
    %162 = arith.maximumf %160, %161 : vector<8x128xf32>
    %c208 = arith.constant 208 : index
    %c0_148 = arith.constant 0 : index
    %163 = tpu.strided_load %arg8[%c208, %c0_148] {strides = array<i32: 2, 1>} : memref<256x128xf32, #tpu.memory_space<vmem>>, vector<8x128xf32>
    %164 = arith.maximumf %162, %163 : vector<8x128xf32>
    %c209 = arith.constant 209 : index
    %c0_149 = arith.constant 0 : index
    %165 = tpu.strided_load %arg8[%c209, %c0_149] {strides = array<i32: 2, 1>} : memref<256x128xf32, #tpu.memory_space<vmem>>, vector<8x128xf32>
    %166 = arith.maximumf %164, %165 : vector<8x128xf32>
    %167 = vector.broadcast %74 : vector<1x128xf32> to vector<8x128xf32>
    %168 = arith.mulf %166, %167 : vector<8x128xf32>
    %169 = vector.broadcast %75 : vector<1x128xf32> to vector<8x128xf32>
    %170 = arith.addf %168, %169 : vector<8x128xf32>
    %c0_150 = arith.constant 0 : index
    %c6_151 = arith.constant 6 : index
    %c0_152 = arith.constant 0 : index
    %c0_153 = arith.constant 0 : index
    %171 = vector.load %arg7[%c0_150, %c6_151, %c0_152, %c0_153] : memref<1x8x8x128xf32, #tpu.memory_space<vmem>>, vector<1x1x8x128xf32>
    %172 = vector.shape_cast %171 : vector<1x1x8x128xf32> to vector<8x128xf32>
    %173 = vector.shape_cast %170 : vector<8x128xf32> to vector<1x1x8x128xf32>
    tpu.vector_store %arg7[%c0_150, %c6_151, %c0_152, %c0_153], %173 {strides = array<i32>} : memref<1x8x8x128xf32, #tpu.memory_space<vmem>>, vector<1x1x8x128xf32>,
    %c224 = arith.constant 224 : index
    %c0_154 = arith.constant 0 : index
    %174 = tpu.strided_load %arg8[%c224, %c0_154] {strides = array<i32: 2, 1>} : memref<256x128xf32, #tpu.memory_space<vmem>>, vector<8x128xf32>
    %c225 = arith.constant 225 : index
    %c0_155 = arith.constant 0 : index
    %175 = tpu.strided_load %arg8[%c225, %c0_155] {strides = array<i32: 2, 1>} : memref<256x128xf32, #tpu.memory_space<vmem>>, vector<8x128xf32>
    %176 = arith.maximumf %174, %175 : vector<8x128xf32>
    %c240 = arith.constant 240 : index
    %c0_156 = arith.constant 0 : index
    %177 = tpu.strided_load %arg8[%c240, %c0_156] {strides = array<i32: 2, 1>} : memref<256x128xf32, #tpu.memory_space<vmem>>, vector<8x128xf32>
    %178 = arith.maximumf %176, %177 : vector<8x128xf32>
    %c241 = arith.constant 241 : index
    %c0_157 = arith.constant 0 : index
    %179 = tpu.strided_load %arg8[%c241, %c0_157] {strides = array<i32: 2, 1>} : memref<256x128xf32, #tpu.memory_space<vmem>>, vector<8x128xf32>
    %180 = arith.maximumf %178, %179 : vector<8x128xf32>
    %181 = vector.broadcast %74 : vector<1x128xf32> to vector<8x128xf32>
    %182 = arith.mulf %180, %181 : vector<8x128xf32>
    %183 = vector.broadcast %75 : vector<1x128xf32> to vector<8x128xf32>
    %184 = arith.addf %182, %183 : vector<8x128xf32>
    %c0_158 = arith.constant 0 : index
    %c7_159 = arith.constant 7 : index
    %c0_160 = arith.constant 0 : index
    %c0_161 = arith.constant 0 : index
    %185 = vector.load %arg7[%c0_158, %c7_159, %c0_160, %c0_161] : memref<1x8x8x128xf32, #tpu.memory_space<vmem>>, vector<1x1x8x128xf32>
    %186 = vector.shape_cast %185 : vector<1x1x8x128xf32> to vector<8x128xf32>
    %187 = vector.shape_cast %184 : vector<8x128xf32> to vector<1x1x8x128xf32>
    tpu.vector_store %arg7[%c0_158, %c7_159, %c0_160, %c0_161], %187 {strides = array<i32>} : memref<1x8x8x128xf32, #tpu.memory_space<vmem>>, vector<1x1x8x128xf32>,
    return
  }
  func.func @transform_0(%arg0: i32) -> (i32, i32, i32) {
    %c0_i32 = arith.constant 0 : i32
    %c0_i32_0 = arith.constant 0 : i32
    %c0_i32_1 = arith.constant 0 : i32
    return %arg0, %c0_i32, %c0_i32_0 : i32, i32, i32
  }
  func.func @transform_1(%arg0: i32) -> (i32, i32, i32) {
    %c0_i32 = arith.constant 0 : i32
    %c0_i32_0 = arith.constant 0 : i32
    %c0_i32_1 = arith.constant 0 : i32
    return %arg0, %c0_i32, %c0_i32_0 : i32, i32, i32
  }
  func.func @transform_2(%arg0: i32) -> (i32, i32, i32) {
    %c0_i32 = arith.constant 0 : i32
    %c0_i32_0 = arith.constant 0 : i32
    %c0_i32_1 = arith.constant 0 : i32
    return %arg0, %c0_i32, %c0_i32_0 : i32, i32, i32
  }
  func.func @transform_3(%arg0: i32) -> (i32, i32, i32) {
    %c0_i32 = arith.constant 0 : i32
    %c0_i32_0 = arith.constant 0 : i32
    %c0_i32_1 = arith.constant 0 : i32
    %c0_i32_2 = arith.constant 0 : i32
    return %c0_i32, %c0_i32_0, %c0_i32_1 : i32, i32, i32
  }
  func.func @transform_4(%arg0: i32) -> (i32, i32) {
    %c0_i32 = arith.constant 0 : i32
    %c0_i32_0 = arith.constant 0 : i32
    %c0_i32_1 = arith.constant 0 : i32
    return %c0_i32, %c0_i32_0 : i32, i32
  }
  func.func @transform_5(%arg0: i32) -> (i32, i32) {
    %c0_i32 = arith.constant 0 : i32
    %c0_i32_0 = arith.constant 0 : i32
    %c0_i32_1 = arith.constant 0 : i32
    return %c0_i32, %c0_i32_0 : i32, i32
  }
  func.func @transform_6(%arg0: i32) -> (i32, i32, i32, i32) {
    %c0_i32 = arith.constant 0 : i32
    %c0_i32_0 = arith.constant 0 : i32
    %c0_i32_1 = arith.constant 0 : i32
    %c0_i32_2 = arith.constant 0 : i32
    return %arg0, %c0_i32, %c0_i32_0, %c0_i32_1 : i32, i32, i32, i32
  }
}

</mosaic_0001>

<llo_original>
// kernel: transition_down_pallas.1
$region0: #{transition_down_pallas.1}
  #allocation0 [shape = 'u32[]', space=smem, size = 0x4, offset = 0x4, fixed_abs, tag = 'smem constant byte address 0x4 - core index']
  #allocation1 [shape = 'u32[144,128]{1,0:T(1,128)}', space=vmem, size = 0x12000, scoped, tag = 'internal scratch']
  #allocation2 [shape = 'f32[256,128]{1,0:T(8,128)}', space=vmem, size = 0x20000, scoped, tag = 'scratch operand']
  %s0 = inlined_call_operand.vmem [shape: bf16[2,288,256], index: 0, kind: input, shape index: {}]
  %s1 = inlined_call_operand.vmem [shape: bf16[2,288,256], index: 1, kind: input, shape index: {}]
  %s2 = inlined_call_operand.vmem [shape: bf16[2,288,256], index: 2, kind: input, shape index: {}]
  %s3 = inlined_call_operand.vmem [shape: bf16[9,256,128], index: 3, kind: input, shape index: {}]
  %s4 = inlined_call_operand.vmem [shape: f32[1,128], index: 4, kind: input, shape index: {}]
  %s5 = inlined_call_operand.vmem [shape: f32[1,128], index: 5, kind: input, shape index: {}]
  %s6 = inlined_call_operand.hbm [shape: f32[2,8,8,128], index: 6, kind: output, shape index: {}]
  %s7 = sld [smem:[#allocation0]]
  $region57: #{transition_down_pallas.1} parent=0
    _
  %s9 = ssub.s32 1, %s7
  %s10 = scalar_select 0, %s9, %s7
  $region1: #{transition_down_pallas.1} parent=0
    #allocation3 [shape = 'u8[65536]{0}', space=vmem, size = 0x10000, scoped, tag = 'output window, operand 0']
    #allocation4 [shape = 's32[2]{0}', space=sflag, size = 0x8, scoped, tag = 'scoped memory for transition_down_pallas.1']
    %11 = vsyncpa [#allocation4], 0
    %s12 = scalar_lea.sflag [#allocation4], 1
    %13 = vsyncpa %s12, 0
    loop: start=0, step=1, limit=4
    $region2: #{transition_down_pallas.1} parent=1 // loop_pre_header
      _
    $region3: #{transition_down_pallas.1} parent=1 // loop_header
      %s15 = sphi 0, %s19
      %p16 = scmp.ge.s32.totalorder %s15, 4
      %s25 = sphi 0, %s27
      %s28 = sphi 0, %s25
      %s29 = sphi 0, %s28
      %s45 = sphi 0, %s29
      %s51 = sphi 0, %s53
      %s54 = sphi 0, %s51
      %s55 = sphi 0, %s54
      %s71 = sphi 0, %s55
      %s77 = sphi 0, %s79
      %s80 = sphi 0, %s77
      %s81 = sphi 0, %s80
      %s97 = sphi 0, %s81
      %s101 = sphi 0, %s101
      %s103 = sphi 0, %s101
      %s104 = sphi 0, %s103
      %s118 = sphi 0, %s104
      %s122 = sphi 0, %s122
      %s124 = sphi 0, %s122
      %s125 = sphi 0, %s124
      %s139 = sphi 0, %s125
      %s143 = sphi 0, %s143
      %s145 = sphi 0, %s143
      %s146 = sphi 0, %s145
      %s160 = sphi 0, %s146
      %s166 = sphi 0, %s168
      %s169 = sphi 0, %s166
      %s170 = sphi 0, %s169
      %s186 = sphi 0, %s170
    $region4: #{transition_down_pallas.1} parent=1 // loop_header_branch
      %18 = sbr.rel (%p16) target = $region8
    $region5: #{transition_down_pallas.1} parent=1 // loop_body
      %s20 = ssub.s32 %s15, 1
      %s21 = ssub.s32 %s15, 2
      %s22 = sadd.s32 %s15, 1
      %s23 = ssub.s32 %s15, %s22
      %p24 = scmp.eq.s32.totalorder %s23, 0
      %s26 = sadd.s32 %s25, 1
      %s27 = scalar_select %p24, %s25, %s26
      %p30 = pneg %p24
      %p31 = scmp.eq.s32.totalorder %s15, 1
      %p32 = por %p30, %p31
      %p33 = scmp.ne.s32.totalorder %s25, %s28
      %p34 = scmp.eq.s32.totalorder %s15, 0
      %p35 = por %p33, %p34
      %p36 = scmp.ne.s32.totalorder %s25, %s28
      %p37 = scmp.eq.s32.totalorder %s20, 1
      %p38 = por %p36, %p37
      %p39 = scmp.ne.s32.totalorder %s28, %s29
      %p40 = scmp.eq.s32.totalorder %s20, 0
      %p41 = por %p39, %p40
      %p42 = scmp.ne.s32.totalorder %s28, %s29
      %p43 = scmp.eq.s32.totalorder %s21, 1
      %p44 = por %p42, %p43
      %p46 = scmp.ne.s32.totalorder %s29, %s45
      %p47 = scmp.eq.s32.totalorder %s21, 0
      %p48 = por %p46, %p47
      %s49 = ssub.s32 %s15, %s22
      %p50 = scmp.eq.s32.totalorder %s49, 0
      %s52 = sadd.s32 %s51, 1
      %s53 = scalar_select %p50, %s51, %s52
      %p56 = pneg %p50
      %p57 = scmp.eq.s32.totalorder %s15, 1
      %p58 = por %p56, %p57
      %p59 = scmp.ne.s32.totalorder %s51, %s54
      %p60 = scmp.eq.s32.totalorder %s15, 0
      %p61 = por %p59, %p60
      %p62 = scmp.ne.s32.totalorder %s51, %s54
      %p63 = scmp.eq.s32.totalorder %s20, 1
      %p64 = por %p62, %p63
      %p65 = scmp.ne.s32.totalorder %s54, %s55
      %p66 = scmp.eq.s32.totalorder %s20, 0
      %p67 = por %p65, %p66
      %p68 = scmp.ne.s32.totalorder %s54, %s55
      %p69 = scmp.eq.s32.totalorder %s21, 1
      %p70 = por %p68, %p69
      %p72 = scmp.ne.s32.totalorder %s55, %s71
      %p73 = scmp.eq.s32.totalorder %s21, 0
      %p74 = por %p72, %p73
      %s75 = ssub.s32 %s15, %s22
      %p76 = scmp.eq.s32.totalorder %s75, 0
      %s78 = sadd.s32 %s77, 1
      %s79 = scalar_select %p76, %s77, %s78
      %p82 = pneg %p76
      %p83 = scmp.eq.s32.totalorder %s15, 1
      %p84 = por %p82, %p83
      %p85 = scmp.ne.s32.totalorder %s77, %s80
      %p86 = scmp.eq.s32.totalorder %s15, 0
      %p87 = por %p85, %p86
      %p88 = scmp.ne.s32.totalorder %s77, %s80
      %p89 = scmp.eq.s32.totalorder %s20, 1
      %p90 = por %p88, %p89
      %p91 = scmp.ne.s32.totalorder %s80, %s81
      %p92 = scmp.eq.s32.totalorder %s20, 0
      %p93 = por %p91, %p92
      %p94 = scmp.ne.s32.totalorder %s80, %s81
      %p95 = scmp.eq.s32.totalorder %s21, 1
      %p96 = por %p94, %p95
      %p98 = scmp.ne.s32.totalorder %s81, %s97
      %p99 = scmp.eq.s32.totalorder %s21, 0
      %p100 = por %p98, %p99
      %s102 = sadd.s32 %s101, 1
      %p105 = scmp.eq.s32.totalorder %s15, 1
      %p106 = scmp.ne.s32.totalorder %s101, %s103
      %p107 = scmp.eq.s32.totalorder %s15, 0
      %p108 = por %p106, %p107
      %p109 = scmp.ne.s32.totalorder %s101, %s103
      %p110 = scmp.eq.s32.totalorder %s20, 1
      %p111 = por %p109, %p110
      %p112 = scmp.ne.s32.totalorder %s103, %s104
      %p113 = scmp.eq.s32.totalorder %s20, 0
      %p114 = por %p112, %p113
      %p115 = scmp.ne.s32.totalorder %s103, %s104
      %p116 = scmp.eq.s32.totalorder %s21, 1
      %p117 = por %p115, %p116
      %p119 = scmp.ne.s32.totalorder %s104, %s118
      %p120 = scmp.eq.s32.totalorder %s21, 0
      %p121 = por %p119, %p120
      %s123 = sadd.s32 %s122, 1
      %p126 = scmp.eq.s32.totalorder %s15, 1
      %p127 = scmp.ne.s32.totalorder %s122, %s124
      %p128 = scmp.eq.s32.totalorder %s15, 0
      %p129 = por %p127, %p128
      %p130 = scmp.ne.s32.totalorder %s122, %s124
      %p131 = scmp.eq.s32.totalorder %s20, 1
      %p132 = por %p130, %p131
      %p133 = scmp.ne.s32.totalorder %s124, %s125
      %p134 = scmp.eq.s32.totalorder %s20, 0
      %p135 = por %p133, %p134
      %p136 = scmp.ne.s32.totalorder %s124, %s125
      %p137 = scmp.eq.s32.totalorder %s21, 1
      %p138 = por %p136, %p137
      %p140 = scmp.ne.s32.totalorder %s125, %s139
      %p141 = scmp.eq.s32.totalorder %s21, 0
      %p142 = por %p140, %p141
      %s144 = sadd.s32 %s143, 1
      %p147 = scmp.eq.s32.totalorder %s15, 1
      %p148 = scmp.ne.s32.totalorder %s143, %s145
      %p149 = scmp.eq.s32.totalorder %s15, 0
      %p150 = por %p148, %p149
      %p151 = scmp.ne.s32.totalorder %s143, %s145
      %p152 = scmp.eq.s32.totalorder %s20, 1
      %p153 = por %p151, %p152
      %p154 = scmp.ne.s32.totalorder %s145, %s146
      %p155 = scmp.eq.s32.totalorder %s20, 0
      %p156 = por %p154, %p155
      %p157 = scmp.ne.s32.totalorder %s145, %s146
      %p158 = scmp.eq.s32.totalorder %s21, 1
      %p159 = por %p157, %p158
      %p161 = scmp.ne.s32.totalorder %s146, %s160
      %p162 = scmp.eq.s32.totalorder %s21, 0
      %p163 = por %p161, %p162
      %s164 = ssub.s32 %s15, %s22
      %p165 = scmp.eq.s32.totalorder %s164, 0
      %s167 = sadd.s32 %s166, 1
      %s168 = scalar_select %p165, %s166, %s167
      %p171 = pneg %p165
      %p172 = scmp.eq.s32.totalorder %s15, 1
      %p173 = por %p171, %p172
      %p174 = scmp.ne.s32.totalorder %s166, %s169
      %p175 = scmp.eq.s32.totalorder %s15, 0
      %p176 = por %p174, %p175
      %p177 = scmp.ne.s32.totalorder %s166, %s169
      %p178 = scmp.eq.s32.totalorder %s20, 1
      %p179 = por %p177, %p178
      %p180 = scmp.ne.s32.totalorder %s169, %s170
      %p181 = scmp.eq.s32.totalorder %s20, 0
      %p182 = por %p180, %p181
      %p183 = scmp.ne.s32.totalorder %s169, %s170
      %p184 = scmp.eq.s32.totalorder %s21, 1
      %p185 = por %p183, %p184
      %p187 = scmp.ne.s32.totalorder %s170, %s186
      %p188 = scmp.eq.s32.totalorder %s21, 0
      %p189 = por %p187, %p188
      %p190 = scmp.le.s32.totalorder 1, %s15
      %p191 = scmp.lt.s32.totalorder %s15, 3
      %p192 = pnand %p190, %p191
      %p193 = pneg %p192
      // Predicated region
      $region9: #{transition_down_pallas.1} parent=5 // pred_check
        _
      $region10: #{transition_down_pallas.1} parent=5 // pred_check_branch
        %195 = sbr.rel (%p192) target = $region12
      $region11: #{transition_down_pallas.1} parent=5 // pred_region
        %s196 = ssub.s32 %s15, 1
        // Predicated region
        $region13: #{transition_down_pallas.1} parent=11 // pred_check
          %p197 = pneg %p114
        $region14: #{transition_down_pallas.1} parent=11 // pred_check_branch
          %199 = sbr.rel (%p197) target = $region16
        $region15: #{transition_down_pallas.1} parent=11 // pred_region
          _
        $region16: #{transition_down_pallas.1} parent=11 // pred_fallthru
          _
        // Predicated region
        $region17: #{transition_down_pallas.1} parent=11 // pred_check
          %p200 = pneg %p135
        $region18: #{transition_down_pallas.1} parent=11 // pred_check_branch
          %202 = sbr.rel (%p200) target = $region20
        $region19: #{transition_down_pallas.1} parent=11 // pred_region
          _
        $region20: #{transition_down_pallas.1} parent=11 // pred_fallthru
          _
        // Predicated region
        $region21: #{transition_down_pallas.1} parent=11 // pred_check
          %p203 = pneg %p156
        $region22: #{transition_down_pallas.1} parent=11 // pred_check_branch
          %205 = sbr.rel (%p203) target = $region24
        $region23: #{transition_down_pallas.1} parent=11 // pred_region
          _
        $region24: #{transition_down_pallas.1} parent=11 // pred_fallthru
          _
      $region12: #{transition_down_pallas.1} parent=5 // pred_fallthru
        _
      %p206 = scmp.lt.s32.totalorder %s15, 2
      // Predicated region
      $region25: #{transition_down_pallas.1} parent=5 // pred_check
        %p207 = pneg %p206
      $region26: #{transition_down_pallas.1} parent=5 // pred_check_branch
        %209 = sbr.rel (%p207) target = $region28
      $region27: #{transition_down_pallas.1} parent=5 // pred_region
        // Predicated region
        $region29: #{transition_down_pallas.1} parent=27 // pred_check
          %p210 = pneg %p35
        $region30: #{transition_down_pallas.1} parent=27 // pred_check_branch
          %212 = sbr.rel (%p210) target = $region32
        $region31: #{transition_down_pallas.1} parent=27 // pred_region
          %p213 = scmp.lt.s32.totalorder %s15, 1
          %s214 = scalar_select %p213, %s15, 1
          %s215 = smul.addr %s214, 72
          %s216 = smul.addr %s215, 4
          %s217 = scalar_lea.vmem %s0, %s216
        $region32: #{transition_down_pallas.1} parent=27 // pred_fallthru
          _
        // Predicated region
        $region33: #{transition_down_pallas.1} parent=27 // pred_check
          %p218 = pneg %p61
        $region34: #{transition_down_pallas.1} parent=27 // pred_check_branch
          %220 = sbr.rel (%p218) target = $region36
        $region35: #{transition_down_pallas.1} parent=27 // pred_region
          %p221 = scmp.lt.s32.totalorder %s15, 1
          %s222 = scalar_select %p221, %s15, 1
          %s223 = smul.addr %s222, 72
          %s224 = smul.addr %s223, 4
          %s225 = scalar_lea.vmem %s1, %s224
        $region36: #{transition_down_pallas.1} parent=27 // pred_fallthru
          _
        // Predicated region
        $region37: #{transition_down_pallas.1} parent=27 // pred_check
          %p226 = pneg %p87
        $region38: #{transition_down_pallas.1} parent=27 // pred_check_branch
          %228 = sbr.rel (%p226) target = $region40
        $region39: #{transition_down_pallas.1} parent=27 // pred_region
          %p229 = scmp.lt.s32.totalorder %s15, 1
          %s230 = scalar_select %p229, %s15, 1
          %s231 = smul.addr %s230, 72
          %s232 = smul.addr %s231, 4
          %s233 = scalar_lea.vmem %s2, %s232
        $region40: #{transition_down_pallas.1} parent=27 // pred_fallthru
          _
      $region28: #{transition_down_pallas.1} parent=5 // pred_fallthru
        _
      %p234 = scmp.le.s32.totalorder 1, %s15
      %p235 = scmp.lt.s32.totalorder %s15, 3
      %p236 = pnand %p234, %p235
      %p237 = pneg %p236
      // Predicated region
      $region41: #{transition_down_pallas.1} parent=5 // pred_check
        _
      $region42: #{transition_down_pallas.1} parent=5 // pred_check_branch
        %239 = sbr.rel (%p236) target = $region44
      $region43: #{transition_down_pallas.1} parent=5 // pred_region
        %s240 = ssub.s32 %s15, 1
        %p241 = scmp.lt.s32.totalorder %s20, 1
        %s242 = scalar_select %p241, %s20, 1
        %s243 = smul.addr %s242, 72
        %s244 = smul.addr %s243, 4
        %s245 = scalar_lea.vmem %s0, %s244
        %p246 = pneg %p41
        %p247 = pneg %p38
        %p248 = scmp.lt.s32.totalorder %s20, 1
        %s249 = scalar_select %p248, %s20, 1
        %s250 = smul.addr %s249, 72
        %s251 = smul.addr %s250, 4
        %s252 = scalar_lea.vmem %s1, %s251
        %p253 = pneg %p67
        %p254 = pneg %p64
        %p255 = scmp.lt.s32.totalorder %s20, 1
        %s256 = scalar_select %p255, %s20, 1
        %s257 = smul.addr %s256, 72
        %s258 = smul.addr %s257, 4
        %s259 = scalar_lea.vmem %s2, %s258
        %p260 = pneg %p93
        %p261 = pneg %p90
        %p262 = pneg %p114
        %p263 = pneg %p111
        %p264 = pneg %p135
        %p265 = pneg %p132
        %p266 = pneg %p156
        %p267 = pneg %p153
        %p268 = pneg %p182
        %p269 = pneg %p179
        %s270 = sand.u32 %s169, 1
        %s271 = scalar_lea.sflag [#allocation4], %s270
        %s272 = sand.u32 %s169, 1
        %s273 = smul.addr %s272, 64
        %s274 = scalar_lea.vmem [#allocation3], %s273
        %p275 = scmp.lt.s32.totalorder %s20, 1
        %s276 = scalar_select %p275, %s20, 1
        %s277 = smul.addr %s276, 72
        %s278 = smul.addr %s277, 4
        %s279 = scalar_lea.vmem %s0, %s278
        %p280 = scmp.lt.s32.totalorder %s20, 1
        %s281 = scalar_select %p280, %s20, 1
        %s282 = smul.addr %s281, 72
        %s283 = smul.addr %s282, 4
        %s284 = scalar_lea.vmem %s1, %s283
        %p285 = scmp.lt.s32.totalorder %s20, 1
        %s286 = scalar_select %p285, %s20, 1
        %s287 = smul.addr %s286, 72
        %s288 = smul.addr %s287, 4
        %s289 = scalar_lea.vmem %s2, %s288
        %291 = vst [vmem:[#allocation2] sm:$0xff] 0.0
        %292 = vst [vmem:[#allocation2 + $0x8] sm:$0xff] 0.0
        %293 = vst [vmem:[#allocation2 + $0x10] sm:$0xff] 0.0
        %294 = vst [vmem:[#allocation2 + $0x18] sm:$0xff] 0.0
        %295 = vst [vmem:[#allocation2 + $0x20] sm:$0xff] 0.0
        %296 = vst [vmem:[#allocation2 + $0x28] sm:$0xff] 0.0
        %297 = vst [vmem:[#allocation2 + $0x30] sm:$0xff] 0.0
        %298 = vst [vmem:[#allocation2 + $0x38] sm:$0xff] 0.0
        %299 = vst [vmem:[#allocation2 + $0x40] sm:$0xff] 0.0
        %300 = vst [vmem:[#allocation2 + $0x48] sm:$0xff] 0.0
        %301 = vst [vmem:[#allocation2 + $0x50] sm:$0xff] 0.0
        %302 = vst [vmem:[#allocation2 + $0x58] sm:$0xff] 0.0
        %303 = vst [vmem:[#allocation2 + $0x60] sm:$0xff] 0.0
        %304 = vst [vmem:[#allocation2 + $0x68] sm:$0xff] 0.0
        %305 = vst [vmem:[#allocation2 + $0x70] sm:$0xff] 0.0
        %306 = vst [vmem:[#allocation2 + $0x78] sm:$0xff] 0.0
        %307 = vst [vmem:[#allocation2 + $0x80] sm:$0xff] 0.0
        %308 = vst [vmem:[#allocation2 + $0x88] sm:$0xff] 0.0
        %309 = vst [vmem:[#allocation2 + $0x90] sm:$0xff] 0.0
        %310 = vst [vmem:[#allocation2 + $0x98] sm:$0xff] 0.0
        %311 = vst [vmem:[#allocation2 + $0xa0] sm:$0xff] 0.0
        %312 = vst [vmem:[#allocation2 + $0xa8] sm:$0xff] 0.0
        %313 = vst [vmem:[#allocation2 + $0xb0] sm:$0xff] 0.0
        %314 = vst [vmem:[#allocation2 + $0xb8] sm:$0xff] 0.0
        %315 = vst [vmem:[#allocation2 + $0xc0] sm:$0xff] 0.0
        %316 = vst [vmem:[#allocation2 + $0xc8] sm:$0xff] 0.0
        %317 = vst [vmem:[#allocation2 + $0xd0] sm:$0xff] 0.0
        %318 = vst [vmem:[#allocation2 + $0xd8] sm:$0xff] 0.0
        %319 = vst [vmem:[#allocation2 + $0xe0] sm:$0xff] 0.0
        %320 = vst [vmem:[#allocation2 + $0xe8] sm:$0xff] 0.0
        %321 = vst [vmem:[#allocation2 + $0xf0] sm:$0xff] 0.0
        %322 = vst [vmem:[#allocation2 + $0xf8] sm:$0xff] 0.0
        %v323 = vld [vmem:[%s279] sm:$0xff]
        %v324 = vld [vmem:[%s279 + $0x8] sm:$0xff]
        %v325 = vld [vmem:[%s279 + $0x10] sm:$0xff]
        %v326 = vld [vmem:[%s279 + $0x18] sm:$0xff]
        %v327 = vld [vmem:[%s279 + $0x20] sm:$0xff]
        %v328 = vld [vmem:[%s279 + $0x28] sm:$0xff]
        %v329 = vld [vmem:[%s279 + $0x30] sm:$0xff]
        %v330 = vld [vmem:[%s279 + $0x38] sm:$0xff]
        %v331 = vld [vmem:[%s279 + $0x40] sm:$0xff]
        %v332 = vld [vmem:[%s279 + $0x48] sm:$0xff]
        %v333 = vld [vmem:[%s279 + $0x50] sm:$0xff]
        %v334 = vld [vmem:[%s279 + $0x58] sm:$0xff]
        %v335 = vld [vmem:[%s279 + $0x60] sm:$0xff]
        %v336 = vld [vmem:[%s279 + $0x68] sm:$0xff]
        %v337 = vld [vmem:[%s279 + $0x70] sm:$0xff]
        %v338 = vld [vmem:[%s279 + $0x78] sm:$0xff]
        %v339 = vld [vmem:[%s279 + $0x80] sm:$0xff]
        %v340 = vld [vmem:[%s279 + $0x88] sm:$0xff]
        %v341 = vld [vmem:[%s279 + $0x90] sm:$0xff]
        %v342 = vld [vmem:[%s279 + $0x98] sm:$0xff]
        %v343 = vld [vmem:[%s279 + $0xa0] sm:$0xff]
        %v344 = vld [vmem:[%s279 + $0xa8] sm:$0xff]
        %v345 = vld [vmem:[%s279 + $0xb0] sm:$0xff]
        %v346 = vld [vmem:[%s279 + $0xb8] sm:$0xff]
        %v347 = vld [vmem:[%s279 + $0xc0] sm:$0xff]
        %v348 = vld [vmem:[%s279 + $0xc8] sm:$0xff]
        %v349 = vld [vmem:[%s279 + $0xd0] sm:$0xff]
        %v350 = vld [vmem:[%s279 + $0xd8] sm:$0xff]
        %v351 = vld [vmem:[%s279 + $0xe0] sm:$0xff]
        %v352 = vld [vmem:[%s279 + $0xe8] sm:$0xff]
        %v353 = vld [vmem:[%s279 + $0xf0] sm:$0xff]
        %v354 = vld [vmem:[%s279 + $0xf8] sm:$0xff]
        %v355 = vld [vmem:[#allocation2] sm:$0xff]
        %v356 = vld [vmem:[#allocation2 + $0x8] sm:$0xff]
        %v357 = vld [vmem:[#allocation2 + $0x10] sm:$0xff]
        %v358 = vld [vmem:[#allocation2 + $0x18] sm:$0xff]
        %v359 = vld [vmem:[#allocation2 + $0x20] sm:$0xff]
        %v360 = vld [vmem:[#allocation2 + $0x28] sm:$0xff]
        %v361 = vld [vmem:[#allocation2 + $0x30] sm:$0xff]
        %v362 = vld [vmem:[#allocation2 + $0x38] sm:$0xff]
        %v363 = vld [vmem:[#allocation2 + $0x40] sm:$0xff]
        %v364 = vld [vmem:[#allocation2 + $0x48] sm:$0xff]
        %v365 = vld [vmem:[#allocation2 + $0x50] sm:$0xff]
        %v366 = vld [vmem:[#allocation2 + $0x58] sm:$0xff]
        %v367 = vld [vmem:[#allocation2 + $0x60] sm:$0xff]
        %v368 = vld [vmem:[#allocation2 + $0x68] sm:$0xff]
        %v369 = vld [vmem:[#allocation2 + $0x70] sm:$0xff]
        %v370 = vld [vmem:[#allocation2 + $0x78] sm:$0xff]
        %v371 = vld [vmem:[#allocation2 + $0x80] sm:$0xff]
        %v372 = vld [vmem:[#allocation2 + $0x88] sm:$0xff]
        %v373 = vld [vmem:[#allocation2 + $0x90] sm:$0xff]
        %v374 = vld [vmem:[#allocation2 + $0x98] sm:$0xff]
        %v375 = vld [vmem:[#allocation2 + $0xa0] sm:$0xff]
        %v376 = vld [vmem:[#allocation2 + $0xa8] sm:$0xff]
        %v377 = vld [vmem:[#allocation2 + $0xb0] sm:$0xff]
        %v378 = vld [vmem:[#allocation2 + $0xb8] sm:$0xff]
        %v379 = vld [vmem:[#allocation2 + $0xc0] sm:$0xff]
        %v380 = vld [vmem:[#allocation2 + $0xc8] sm:$0xff]
        %v381 = vld [vmem:[#allocation2 + $0xd0] sm:$0xff]
        %v382 = vld [vmem:[#allocation2 + $0xd8] sm:$0xff]
        %v383 = vld [vmem:[#allocation2 + $0xe0] sm:$0xff]
        %v384 = vld [vmem:[#allocation2 + $0xe8] sm:$0xff]
        %v385 = vld [vmem:[#allocation2 + $0xf0] sm:$0xff]
        %v386 = vld [vmem:[#allocation2 + $0xf8] sm:$0xff]
        %v387 = vld [vmem:[%s3] sm:$0xf]
        %v388 = vld [vmem:[%s3 + $0x4] sm:$0xf]
        %v389 = vld [vmem:[%s3 + $0x8] sm:$0xf]
        %v390 = vld [vmem:[%s3 + $0xc] sm:$0xf]
        %v391 = vld [vmem:[%s3 + $0x10] sm:$0xf]
        %v392 = vld [vmem:[%s3 + $0x14] sm:$0xf]
        %v393 = vld [vmem:[%s3 + $0x18] sm:$0xf]
        %v394 = vld [vmem:[%s3 + $0x1c] sm:$0xf]
        %v395 = vld [vmem:[%s3 + $0x20] sm:$0xf]
        %v396 = vld [vmem:[%s3 + $0x24] sm:$0xf]
        %v397 = vld [vmem:[%s3 + $0x28] sm:$0xf]
        %v398 = vld [vmem:[%s3 + $0x2c] sm:$0xf]
        %v399 = vld [vmem:[%s3 + $0x30] sm:$0xf]
        %v400 = vld [vmem:[%s3 + $0x34] sm:$0xf]
        %v401 = vld [vmem:[%s3 + $0x38] sm:$0xf]
        %v402 = vld [vmem:[%s3 + $0x3c] sm:$0xf]
        %v403 = vld [vmem:[%s3 + $0x40] sm:$0xf]
        %v404 = vld [vmem:[%s3 + $0x44] sm:$0xf]
        %v405 = vld [vmem:[%s3 + $0x48] sm:$0xf]
        %v406 = vld [vmem:[%s3 + $0x4c] sm:$0xf]
        %v407 = vld [vmem:[%s3 + $0x50] sm:$0xf]
        %v408 = vld [vmem:[%s3 + $0x54] sm:$0xf]
        %v409 = vld [vmem:[%s3 + $0x58] sm:$0xf]
        %v410 = vld [vmem:[%s3 + $0x5c] sm:$0xf]
        %v411 = vld [vmem:[%s3 + $0x60] sm:$0xf]
        %v412 = vld [vmem:[%s3 + $0x64] sm:$0xf]
        %v413 = vld [vmem:[%s3 + $0x68] sm:$0xf]
        %v414 = vld [vmem:[%s3 + $0x6c] sm:$0xf]
        %v415 = vld [vmem:[%s3 + $0x70] sm:$0xf]
        %v416 = vld [vmem:[%s3 + $0x74] sm:$0xf]
        %v417 = vld [vmem:[%s3 + $0x78] sm:$0xf]
        %v418 = vld [vmem:[%s3 + $0x7c] sm:$0xf]
        %v451 = vunpack.c.l.b16 %v323
        %v452 = vunpack.c.h.b16 %v323
        %v453 = vunpack.c.l.b16 %v324
        %v454 = vunpack.c.h.b16 %v324
        %v455 = vunpack.c.l.b16 %v325
        %v456 = vunpack.c.h.b16 %v325
        %v457 = vunpack.c.l.b16 %v326
        %v458 = vunpack.c.h.b16 %v326
        %v459 = vunpack.c.l.b16 %v327
        %v460 = vunpack.c.h.b16 %v327
        %v461 = vunpack.c.l.b16 %v328
        %v462 = vunpack.c.h.b16 %v328
        %v463 = vunpack.c.l.b16 %v329
        %v464 = vunpack.c.h.b16 %v329
        %v465 = vunpack.c.l.b16 %v330
        %v466 = vunpack.c.h.b16 %v330
        %v467 = vunpack.c.l.b16 %v331
        %v468 = vunpack.c.h.b16 %v331
        %v469 = vunpack.c.l.b16 %v332
        %v470 = vunpack.c.h.b16 %v332
        %v471 = vunpack.c.l.b16 %v333
        %v472 = vunpack.c.h.b16 %v333
        %v473 = vunpack.c.l.b16 %v334
        %v474 = vunpack.c.h.b16 %v334
        %v475 = vunpack.c.l.b16 %v335
        %v476 = vunpack.c.h.b16 %v335
        %v477 = vunpack.c.l.b16 %v336
        %v478 = vunpack.c.h.b16 %v336
        %v479 = vunpack.c.l.b16 %v337
        %v480 = vunpack.c.h.b16 %v337
        %v481 = vunpack.c.l.b16 %v338
        %v482 = vunpack.c.h.b16 %v338
        %v483 = vunpack.c.l.b16 %v339
        %v484 = vunpack.c.h.b16 %v339
        %v485 = vunpack.c.l.b16 %v340
        %v486 = vunpack.c.h.b16 %v340
        %v487 = vunpack.c.l.b16 %v341
        %v488 = vunpack.c.h.b16 %v341
        %v489 = vunpack.c.l.b16 %v342
        %v490 = vunpack.c.h.b16 %v342
        %v491 = vunpack.c.l.b16 %v343
        %v492 = vunpack.c.h.b16 %v343
        %v493 = vunpack.c.l.b16 %v344
        %v494 = vunpack.c.h.b16 %v344
        %v495 = vunpack.c.l.b16 %v345
        %v496 = vunpack.c.h.b16 %v345
        %v497 = vunpack.c.l.b16 %v346
        %v498 = vunpack.c.h.b16 %v346
        %v499 = vunpack.c.l.b16 %v347
        %v500 = vunpack.c.h.b16 %v347
        %v501 = vunpack.c.l.b16 %v348
        %v502 = vunpack.c.h.b16 %v348
        %v503 = vunpack.c.l.b16 %v349
        %v504 = vunpack.c.h.b16 %v349
        %v505 = vunpack.c.l.b16 %v350
        %v506 = vunpack.c.h.b16 %v350
        %v507 = vunpack.c.l.b16 %v351
        %v508 = vunpack.c.h.b16 %v351
        %v509 = vunpack.c.l.b16 %v352
        %v510 = vunpack.c.h.b16 %v352
        %v511 = vunpack.c.l.b16 %v353
        %v512 = vunpack.c.h.b16 %v353
        %v513 = vunpack.c.l.b16 %v354
        %v514 = vunpack.c.h.b16 %v354
        %v515 = vpack.c.b16 %v453, %v451
        %v516 = vpack.c.b16 %v454, %v452
        %v517 = vpack.c.b16 %v457, %v455
        %v518 = vpack.c.b16 %v458, %v456
        %v519 = vpack.c.b16 %v461, %v459
        %v520 = vpack.c.b16 %v462, %v460
        %v521 = vpack.c.b16 %v465, %v463
        %v522 = vpack.c.b16 %v466, %v464
        %v523 = vpack.c.b16 %v469, %v467
        %v524 = vpack.c.b16 %v470, %v468
        %v525 = vpack.c.b16 %v473, %v471
        %v526 = vpack.c.b16 %v474, %v472
        %v527 = vpack.c.b16 %v477, %v475
        %v528 = vpack.c.b16 %v478, %v476
        %v529 = vpack.c.b16 %v481, %v479
        %v530 = vpack.c.b16 %v482, %v480
        %v531 = vpack.c.b16 %v485, %v483
        %v532 = vpack.c.b16 %v486, %v484
        %v533 = vpack.c.b16 %v489, %v487
        %v534 = vpack.c.b16 %v490, %v488
        %v535 = vpack.c.b16 %v493, %v491
        %v536 = vpack.c.b16 %v494, %v492
        %v537 = vpack.c.b16 %v497, %v495
        %v538 = vpack.c.b16 %v498, %v496
        %v539 = vpack.c.b16 %v501, %v499
        %v540 = vpack.c.b16 %v502, %v500
        %v541 = vpack.c.b16 %v505, %v503
        %v542 = vpack.c.b16 %v506, %v504
        %v543 = vpack.c.b16 %v509, %v507
        %v544 = vpack.c.b16 %v510, %v508
        %v545 = vpack.c.b16 %v513, %v511
        %v546 = vpack.c.b16 %v514, %v512
        %v611 = vunpack.c.l.b16 %v387
        %v612 = vunpack.c.l.b16 %v388
        %v613 = vunpack.c.l.b16 %v389
        %v614 = vunpack.c.l.b16 %v390
        %v615 = vunpack.c.l.b16 %v391
        %v616 = vunpack.c.l.b16 %v392
        %v617 = vunpack.c.l.b16 %v393
        %v618 = vunpack.c.l.b16 %v394
        %v619 = vunpack.c.l.b16 %v395
        %v620 = vunpack.c.l.b16 %v396
        %v621 = vunpack.c.l.b16 %v397
        %v622 = vunpack.c.l.b16 %v398
        %v623 = vunpack.c.l.b16 %v399
        %v624 = vunpack.c.l.b16 %v400
        %v625 = vunpack.c.l.b16 %v401
        %v626 = vunpack.c.l.b16 %v402
        %v627 = vunpack.c.l.b16 %v403
        %v628 = vunpack.c.l.b16 %v404
        %v629 = vunpack.c.l.b16 %v405
        %v630 = vunpack.c.l.b16 %v406
        %v631 = vunpack.c.l.b16 %v407
        %v632 = vunpack.c.l.b16 %v408
        %v633 = vunpack.c.l.b16 %v409
        %v634 = vunpack.c.l.b16 %v410
        %v635 = vunpack.c.l.b16 %v411
        %v636 = vunpack.c.l.b16 %v412
        %v637 = vunpack.c.l.b16 %v413
        %v638 = vunpack.c.l.b16 %v414
        %v639 = vunpack.c.l.b16 %v415
        %v640 = vunpack.c.l.b16 %v416
        %v641 = vunpack.c.l.b16 %v417
        %v642 = vunpack.c.l.b16 %v418
        %v643 = vpack.c.b16 %v612, %v611
        %v644 = vpack.c.b16 %v614, %v613
        %v645 = vpack.c.b16 %v616, %v615
        %v646 = vpack.c.b16 %v618, %v617
        %v647 = vpack.c.b16 %v620, %v619
        %v648 = vpack.c.b16 %v622, %v621
        %v649 = vpack.c.b16 %v624, %v623
        %v650 = vpack.c.b16 %v626, %v625
        %v651 = vpack.c.b16 %v628, %v627
        %v652 = vpack.c.b16 %v630, %v629
        %v653 = vpack.c.b16 %v632, %v631
        %v654 = vpack.c.b16 %v634, %v633
        %v655 = vpack.c.b16 %v636, %v635
        %v656 = vpack.c.b16 %v638, %v637
        %v657 = vpack.c.b16 %v640, %v639
        %v658 = vpack.c.b16 %v642, %v641
        %675 = vmatprep.subr.bf16.mxu0 0
        %676 = vmatpush1.bf16.msra.mxu0 %v643
        %677 = vmatprep.subr.bf16.mxu0 0
        %678 = vmatpush1.bf16.msra.mxu0 %v644
        %679 = vmatprep.subr.bf16.mxu0 0
        %680 = vmatpush1.bf16.msra.mxu0 %v645
        %681 = vmatprep.subr.bf16.mxu0 0
        %682 = vmatpush1.bf16.msra.mxu0 %v646
        %683 = vmatprep.subr.bf16.mxu0 0
        %684 = vmatpush1.bf16.msra.mxu0 %v647
        %685 = vmatprep.subr.bf16.mxu0 0
        %686 = vmatpush1.bf16.msra.mxu0 %v648
        %687 = vmatprep.subr.bf16.mxu0 0
        %688 = vmatpush1.bf16.msra.mxu0 %v649
        %689 = vmatprep.subr.bf16.mxu0 0
        %690 = vmatpush1.bf16.msra.mxu0 %v650
        %691 = vmatprep.subr.bf16.mxu0 0
        %692 = vmatpush1.bf16.msra.mxu0 %v651
        %693 = vmatprep.subr.bf16.mxu0 0
        %694 = vmatpush1.bf16.msra.mxu0 %v652
        %695 = vmatprep.subr.bf16.mxu0 0
        %696 = vmatpush1.bf16.msra.mxu0 %v653
        %697 = vmatprep.subr.bf16.mxu0 0
        %698 = vmatpush1.bf16.msra.mxu0 %v654
        %699 = vmatprep.subr.bf16.mxu0 0
        %700 = vmatpush1.bf16.msra.mxu0 %v655
        %701 = vmatprep.subr.bf16.mxu0 0
        %702 = vmatpush1.bf16.msra.mxu0 %v656
        %703 = vmatprep.subr.bf16.mxu0 0
        %704 = vmatpush1.bf16.msra.mxu0 %v657
        %705 = vmatprep.subr.bf16.mxu0 0
        %706 = vmatpush1.bf16.msra.mxu0 %v658
        %707 = vmatprep.mubr.bf16.mxu0 %v516
        %708 = vmatmul.mubr.bf16.gmra.mrb[0].mxu0 %v515
        %v709 = vpop.f32.mrb[0].mxu0
        %v710 = vadd.f32 0.0, %v709
        %v711 = vpop.f32.mrb[0].mxu0
        %v712 = vpop.f32.mrb[0].mxu0
        %v713 = vadd.f32 0.0, %v712
        %v714 = vpop.f32.mrb[0].mxu0
        %715 = vmatprep.mubr.bf16.mxu0 %v518
        %716 = vmatmul.mubr.bf16.gmra.mrb[0].mxu0 %v517
        %v717 = vpop.f32.mrb[0].mxu0
        %v718 = vadd.f32 0.0, %v717
        %v719 = vpop.f32.mrb[0].mxu0
        %v720 = vpop.f32.mrb[0].mxu0
        %v721 = vadd.f32 0.0, %v720
        %v722 = vpop.f32.mrb[0].mxu0
        %723 = vmatprep.mubr.bf16.mxu0 %v520
        %724 = vmatmul.mubr.bf16.gmra.mrb[0].mxu0 %v519
        %v725 = vpop.f32.mrb[0].mxu0
        %v726 = vadd.f32 0.0, %v725
        %v727 = vpop.f32.mrb[0].mxu0
        %v728 = vpop.f32.mrb[0].mxu0
        %v729 = vadd.f32 0.0, %v728
        %v730 = vpop.f32.mrb[0].mxu0
        %731 = vmatprep.mubr.bf16.mxu0 %v522
        %732 = vmatmul.mubr.bf16.gmra.mrb[0].mxu0 %v521
        %v733 = vpop.f32.mrb[0].mxu0
        %v734 = vadd.f32 0.0, %v733
        %v735 = vpop.f32.mrb[0].mxu0
        %v736 = vpop.f32.mrb[0].mxu0
        %v737 = vadd.f32 0.0, %v736
        %v738 = vpop.f32.mrb[0].mxu0
        %739 = vmatprep.mubr.bf16.mxu0 %v524
        %740 = vmatmul.mubr.bf16.gmra.mrb[0].mxu0 %v523
        %v741 = vpop.f32.mrb[0].mxu0
        %v742 = vadd.f32 0.0, %v741
        %v743 = vpop.f32.mrb[0].mxu0
        %v744 = vpop.f32.mrb[0].mxu0
        %v745 = vadd.f32 0.0, %v744
        %v746 = vpop.f32.mrb[0].mxu0
        %747 = vmatprep.mubr.bf16.mxu0 %v526
        %748 = vmatmul.mubr.bf16.gmra.mrb[0].mxu0 %v525
        %v749 = vpop.f32.mrb[0].mxu0
        %v750 = vadd.f32 0.0, %v749
        %v751 = vpop.f32.mrb[0].mxu0
        %v752 = vpop.f32.mrb[0].mxu0
        %v753 = vadd.f32 0.0, %v752
        %v754 = vpop.f32.mrb[0].mxu0
        %755 = vmatprep.mubr.bf16.mxu0 %v528
        %756 = vmatmul.mubr.bf16.gmra.mrb[0].mxu0 %v527
        %v757 = vpop.f32.mrb[0].mxu0
        %v758 = vadd.f32 0.0, %v757
        %v759 = vpop.f32.mrb[0].mxu0
        %v760 = vpop.f32.mrb[0].mxu0
        %v761 = vadd.f32 0.0, %v760
        %v762 = vpop.f32.mrb[0].mxu0
        %763 = vmatprep.mubr.bf16.mxu0 %v530
        %764 = vmatmul.mubr.bf16.gmra.mrb[0].mxu0 %v529
        %v765 = vpop.f32.mrb[0].mxu0
        %v766 = vadd.f32 0.0, %v765
        %v767 = vpop.f32.mrb[0].mxu0
        %v768 = vpop.f32.mrb[0].mxu0
        %v769 = vadd.f32 0.0, %v768
        %v770 = vpop.f32.mrb[0].mxu0
        %771 = vmatprep.mubr.bf16.mxu0 %v532
        %772 = vmatmul.mubr.bf16.gmra.mrb[0].mxu0 %v531
        %v773 = vpop.f32.mrb[0].mxu0
        %v774 = vadd.f32 0.0, %v773
        %v775 = vpop.f32.mrb[0].mxu0
        %v776 = vpop.f32.mrb[0].mxu0
        %v777 = vadd.f32 0.0, %v776
        %v778 = vpop.f32.mrb[0].mxu0
        %779 = vmatprep.mubr.bf16.mxu0 %v534
        %780 = vmatmul.mubr.bf16.gmra.mrb[0].mxu0 %v533
        %v781 = vpop.f32.mrb[0].mxu0
        %v782 = vadd.f32 0.0, %v781
        %v783 = vpop.f32.mrb[0].mxu0
        %v784 = vpop.f32.mrb[0].mxu0
        %v785 = vadd.f32 0.0, %v784
        %v786 = vpop.f32.mrb[0].mxu0
        %787 = vmatprep.mubr.bf16.mxu0 %v536
        %788 = vmatmul.mubr.bf16.gmra.mrb[0].mxu0 %v535
        %v789 = vpop.f32.mrb[0].mxu0
        %v790 = vadd.f32 0.0, %v789
        %v791 = vpop.f32.mrb[0].mxu0
        %v792 = vpop.f32.mrb[0].mxu0
        %v793 = vadd.f32 0.0, %v792
        %v794 = vpop.f32.mrb[0].mxu0
        %795 = vmatprep.mubr.bf16.mxu0 %v538
        %796 = vmatmul.mubr.bf16.gmra.mrb[0].mxu0 %v537
        %v797 = vpop.f32.mrb[0].mxu0
        %v798 = vadd.f32 0.0, %v797
        %v799 = vpop.f32.mrb[0].mxu0
        %v800 = vpop.f32.mrb[0].mxu0
        %v801 = vadd.f32 0.0, %v800
        %v802 = vpop.f32.mrb[0].mxu0
        %803 = vmatprep.mubr.bf16.mxu0 %v540
        %804 = vmatmul.mubr.bf16.gmra.mrb[0].mxu0 %v539
        %v805 = vpop.f32.mrb[0].mxu0
        %v806 = vadd.f32 0.0, %v805
        %v807 = vpop.f32.mrb[0].mxu0
        %v808 = vpop.f32.mrb[0].mxu0
        %v809 = vadd.f32 0.0, %v808
        %v810 = vpop.f32.mrb[0].mxu0
        %811 = vmatprep.mubr.bf16.mxu0 %v542
        %812 = vmatmul.mubr.bf16.gmra.mrb[0].mxu0 %v541
        %v813 = vpop.f32.mrb[0].mxu0
        %v814 = vadd.f32 0.0, %v813
        %v815 = vpop.f32.mrb[0].mxu0
        %v816 = vpop.f32.mrb[0].mxu0
        %v817 = vadd.f32 0.0, %v816
        %v818 = vpop.f32.mrb[0].mxu0
        %819 = vmatprep.mubr.bf16.mxu0 %v544
        %820 = vmatmul.mubr.bf16.gmra.mrb[0].mxu0 %v543
        %v821 = vpop.f32.mrb[0].mxu0
        %v822 = vadd.f32 0.0, %v821
        %v823 = vpop.f32.mrb[0].mxu0
        %v824 = vpop.f32.mrb[0].mxu0
        %v825 = vadd.f32 0.0, %v824
        %v826 = vpop.f32.mrb[0].mxu0
        %827 = vmatprep.mubr.bf16.mxu0 %v546
        %828 = vmatmul.mubr.bf16.gmra.mrb[0].mxu0 %v545
        %v829 = vpop.f32.mrb[0].mxu0
        %v830 = vadd.f32 0.0, %v829
        %v831 = vpop.f32.mrb[0].mxu0
        %v832 = vpop.f32.mrb[0].mxu0
        %v833 = vadd.f32 0.0, %v832
        %v834 = vpop.f32.mrb[0].mxu0
        %835 = vdwg.mxu0
        %v836 = vadd.f32 %v355, %v710
        %v837 = vadd.f32 %v356, %v713
        %v838 = vadd.f32 %v357, %v718
        %v839 = vadd.f32 %v358, %v721
        %v840 = vadd.f32 %v359, %v726
        %v841 = vadd.f32 %v360, %v729
        %v842 = vadd.f32 %v361, %v734
        %v843 = vadd.f32 %v362, %v737
        %v844 = vadd.f32 %v363, %v742
        %v845 = vadd.f32 %v364, %v745
        %v846 = vadd.f32 %v365, %v750
        %v847 = vadd.f32 %v366, %v753
        %v848 = vadd.f32 %v367, %v758
        %v849 = vadd.f32 %v368, %v761
        %v850 = vadd.f32 %v369, %v766
        %v851 = vadd.f32 %v370, %v769
        %v852 = vadd.f32 %v371, %v774
        %v853 = vadd.f32 %v372, %v777
        %v854 = vadd.f32 %v373, %v782
        %v855 = vadd.f32 %v374, %v785
        %v856 = vadd.f32 %v375, %v790
        %v857 = vadd.f32 %v376, %v793
        %v858 = vadd.f32 %v377, %v798
        %v859 = vadd.f32 %v378, %v801
        %v860 = vadd.f32 %v379, %v806
        %v861 = vadd.f32 %v380, %v809
        %v862 = vadd.f32 %v381, %v814
        %v863 = vadd.f32 %v382, %v817
        %v864 = vadd.f32 %v383, %v822
        %v865 = vadd.f32 %v384, %v825
        %v866 = vadd.f32 %v385, %v830
        %v867 = vadd.f32 %v386, %v833
        %868 = vst [vmem:[#allocation2] sm:$0xff] %v836
        %869 = vst [vmem:[#allocation2 + $0x8] sm:$0xff] %v837
        %870 = vst [vmem:[#allocation2 + $0x10] sm:$0xff] %v838
        %871 = vst [vmem:[#allocation2 + $0x18] sm:$0xff] %v839
        %872 = vst [vmem:[#allocation2 + $0x20] sm:$0xff] %v840
        %873 = vst [vmem:[#allocation2 + $0x28] sm:$0xff] %v841
        %874 = vst [vmem:[#allocation2 + $0x30] sm:$0xff] %v842
        %875 = vst [vmem:[#allocation2 + $0x38] sm:$0xff] %v843
        %876 = vst [vmem:[#allocation2 + $0x40] sm:$0xff] %v844
        %877 = vst [vmem:[#allocation2 + $0x48] sm:$0xff] %v845
        %878 = vst [vmem:[#allocation2 + $0x50] sm:$0xff] %v846
        %879 = vst [vmem:[#allocation2 + $0x58] sm:$0xff] %v847
        %880 = vst [vmem:[#allocation2 + $0x60] sm:$0xff] %v848
        %881 = vst [vmem:[#allocation2 + $0x68] sm:$0xff] %v849
        %882 = vst [vmem:[#allocation2 + $0x70] sm:$0xff] %v850
        %883 = vst [vmem:[#allocation2 + $0x78] sm:$0xff] %v851
        %884 = vst [vmem:[#allocation2 + $0x80] sm:$0xff] %v852
        %885 = vst [vmem:[#allocation2 + $0x88] sm:$0xff] %v853
        %886 = vst [vmem:[#allocation2 + $0x90] sm:$0xff] %v854
        %887 = vst [vmem:[#allocation2 + $0x98] sm:$0xff] %v855
        %888 = vst [vmem:[#allocation2 + $0xa0] sm:$0xff] %v856
        %889 = vst [vmem:[#allocation2 + $0xa8] sm:$0xff] %v857
        %890 = vst [vmem:[#allocation2 + $0xb0] sm:$0xff] %v858
        %891 = vst [vmem:[#allocation2 + $0xb8] sm:$0xff] %v859
        %892 = vst [vmem:[#allocation2 + $0xc0] sm:$0xff] %v860
        %893 = vst [vmem:[#allocation2 + $0xc8] sm:$0xff] %v861
        %894 = vst [vmem:[#allocation2 + $0xd0] sm:$0xff] %v862
        %895 = vst [vmem:[#allocation2 + $0xd8] sm:$0xff] %v863
        %896 = vst [vmem:[#allocation2 + $0xe0] sm:$0xff] %v864
        %897 = vst [vmem:[#allocation2 + $0xe8] sm:$0xff] %v865
        %898 = vst [vmem:[#allocation2 + $0xf0] sm:$0xff] %v866
        %899 = vst [vmem:[#allocation2 + $0xf8] sm:$0xff] %v867
        %v900 = vld [vmem:[%s284] sm:$0xff]
        %v901 = vld [vmem:[%s284 + $0x8] sm:$0xff]
        %v902 = vld [vmem:[%s284 + $0x10] sm:$0xff]
        %v903 = vld [vmem:[%s284 + $0x18] sm:$0xff]
        %v904 = vld [vmem:[%s284 + $0x20] sm:$0xff]
        %v905 = vld [vmem:[%s284 + $0x28] sm:$0xff]
        %v906 = vld [vmem:[%s284 + $0x30] sm:$0xff]
        %v907 = vld [vmem:[%s284 + $0x38] sm:$0xff]
        %v908 = vld [vmem:[%s284 + $0x40] sm:$0xff]
        %v909 = vld [vmem:[%s284 + $0x48] sm:$0xff]
        %v910 = vld [vmem:[%s284 + $0x50] sm:$0xff]
        %v911 = vld [vmem:[%s284 + $0x58] sm:$0xff]
        %v912 = vld [vmem:[%s284 + $0x60] sm:$0xff]
        %v913 = vld [vmem:[%s284 + $0x68] sm:$0xff]
        %v914 = vld [vmem:[%s284 + $0x70] sm:$0xff]
        %v915 = vld [vmem:[%s284 + $0x78] sm:$0xff]
        %v916 = vld [vmem:[%s284 + $0x80] sm:$0xff]
        %v917 = vld [vmem:[%s284 + $0x88] sm:$0xff]
        %v918 = vld [vmem:[%s284 + $0x90] sm:$0xff]
        %v919 = vld [vmem:[%s284 + $0x98] sm:$0xff]
        %v920 = vld [vmem:[%s284 + $0xa0] sm:$0xff]
        %v921 = vld [vmem:[%s284 + $0xa8] sm:$0xff]
        %v922 = vld [vmem:[%s284 + $0xb0] sm:$0xff]
        %v923 = vld [vmem:[%s284 + $0xb8] sm:$0xff]
        %v924 = vld [vmem:[%s284 + $0xc0] sm:$0xff]
        %v925 = vld [vmem:[%s284 + $0xc8] sm:$0xff]
        %v926 = vld [vmem:[%s284 + $0xd0] sm:$0xff]
        %v927 = vld [vmem:[%s284 + $0xd8] sm:$0xff]
        %v928 = vld [vmem:[%s284 + $0xe0] sm:$0xff]
        %v929 = vld [vmem:[%s284 + $0xe8] sm:$0xff]
        %v930 = vld [vmem:[%s284 + $0xf0] sm:$0xff]
        %v931 = vld [vmem:[%s284 + $0xf8] sm:$0xff]
        %v932 = vld [vmem:[#allocation2] sm:$0xff]
        %v933 = vld [vmem:[#allocation2 + $0x8] sm:$0xff]
        %v934 = vld [vmem:[#allocation2 + $0x10] sm:$0xff]
        %v935 = vld [vmem:[#allocation2 + $0x18] sm:$0xff]
        %v936 = vld [vmem:[#allocation2 + $0x20] sm:$0xff]
        %v937 = vld [vmem:[#allocation2 + $0x28] sm:$0xff]
        %v938 = vld [vmem:[#allocation2 + $0x30] sm:$0xff]
        %v939 = vld [vmem:[#allocation2 + $0x38] sm:$0xff]
        %v940 = vld [vmem:[#allocation2 + $0x40] sm:$0xff]
        %v941 = vld [vmem:[#allocation2 + $0x48] sm:$0xff]
        %v942 = vld [vmem:[#allocation2 + $0x50] sm:$0xff]
        %v943 = vld [vmem:[#allocation2 + $0x58] sm:$0xff]
        %v944 = vld [vmem:[#allocation2 + $0x60] sm:$0xff]
        %v945 = vld [vmem:[#allocation2 + $0x68] sm:$0xff]
        %v946 = vld [vmem:[#allocation2 + $0x70] sm:$0xff]
        %v947 = vld [vmem:[#allocation2 + $0x78] sm:$0xff]
        %v948 = vld [vmem:[#allocation2 + $0x80] sm:$0xff]
        %v949 = vld [vmem:[#allocation2 + $0x88] sm:$0xff]
        %v950 = vld [vmem:[#allocation2 + $0x90] sm:$0xff]
        %v951 = vld [vmem:[#allocation2 + $0x98] sm:$0xff]
        %v952 = vld [vmem:[#allocation2 + $0xa0] sm:$0xff]
        %v953 = vld [vmem:[#allocation2 + $0xa8] sm:$0xff]
        %v954 = vld [vmem:[#allocation2 + $0xb0] sm:$0xff]
        %v955 = vld [vmem:[#allocation2 + $0xb8] sm:$0xff]
        %v956 = vld [vmem:[#allocation2 + $0xc0] sm:$0xff]
        %v957 = vld [vmem:[#allocation2 + $0xc8] sm:$0xff]
        %v958 = vld [vmem:[#allocation2 + $0xd0] sm:$0xff]
        %v959 = vld [vmem:[#allocation2 + $0xd8] sm:$0xff]
        %v960 = vld [vmem:[#allocation2 + $0xe0] sm:$0xff]
        %v961 = vld [vmem:[#allocation2 + $0xe8] sm:$0xff]
        %v962 = vld [vmem:[#allocation2 + $0xf0] sm:$0xff]
        %v963 = vld [vmem:[#allocation2 + $0xf8] sm:$0xff]
        %s964 = scalar_lea.vmem %s3, 128
        %v965 = vld [vmem:[%s964] sm:$0xf]
        %v966 = vld [vmem:[%s964 + $0x4] sm:$0xf]
        %v967 = vld [vmem:[%s964 + $0x8] sm:$0xf]
        %v968 = vld [vmem:[%s964 + $0xc] sm:$0xf]
        %v969 = vld [vmem:[%s964 + $0x10] sm:$0xf]
        %v970 = vld [vmem:[%s964 + $0x14] sm:$0xf]
        %v971 = vld [vmem:[%s964 + $0x18] sm:$0xf]
        %v972 = vld [vmem:[%s964 + $0x1c] sm:$0xf]
        %v973 = vld [vmem:[%s964 + $0x20] sm:$0xf]
        %v974 = vld [vmem:[%s964 + $0x24] sm:$0xf]
        %v975 = vld [vmem:[%s964 + $0x28] sm:$0xf]
        %v976 = vld [vmem:[%s964 + $0x2c] sm:$0xf]
        %v977 = vld [vmem:[%s964 + $0x30] sm:$0xf]
        %v978 = vld [vmem:[%s964 + $0x34] sm:$0xf]
        %v979 = vld [vmem:[%s964 + $0x38] sm:$0xf]
        %v980 = vld [vmem:[%s964 + $0x3c] sm:$0xf]
        %v981 = vld [vmem:[%s964 + $0x40] sm:$0xf]
        %v982 = vld [vmem:[%s964 + $0x44] sm:$0xf]
        %v983 = vld [vmem:[%s964 + $0x48] sm:$0xf]
        %v984 = vld [vmem:[%s964 + $0x4c] sm:$0xf]
        %v985 = vld [vmem:[%s964 + $0x50] sm:$0xf]
        %v986 = vld [vmem:[%s964 + $0x54] sm:$0xf]
        %v987 = vld [vmem:[%s964 + $0x58] sm:$0xf]
        %v988 = vld [vmem:[%s964 + $0x5c] sm:$0xf]
        %v989 = vld [vmem:[%s964 + $0x60] sm:$0xf]
        %v990 = vld [vmem:[%s964 + $0x64] sm:$0xf]
        %v991 = vld [vmem:[%s964 + $0x68] sm:$0xf]
        %v992 = vld [vmem:[%s964 + $0x6c] sm:$0xf]
        %v993 = vld [vmem:[%s964 + $0x70] sm:$0xf]
        %v994 = vld [vmem:[%s964 + $0x74] sm:$0xf]
        %v995 = vld [vmem:[%s964 + $0x78] sm:$0xf]
        %v996 = vld [vmem:[%s964 + $0x7c] sm:$0xf]
        %v1029 = vunpack.c.l.b16 %v900
        %v1030 = vunpack.c.h.b16 %v900
        %v1031 = vunpack.c.l.b16 %v901
        %v1032 = vunpack.c.h.b16 %v901
        %v1033 = vunpack.c.l.b16 %v902
        %v1034 = vunpack.c.h.b16 %v902
        %v1035 = vunpack.c.l.b16 %v903
        %v1036 = vunpack.c.h.b16 %v903
        %v1037 = vunpack.c.l.b16 %v904
        %v1038 = vunpack.c.h.b16 %v904
        %v1039 = vunpack.c.l.b16 %v905
        %v1040 = vunpack.c.h.b16 %v905
        %v1041 = vunpack.c.l.b16 %v906
        %v1042 = vunpack.c.h.b16 %v906
        %v1043 = vunpack.c.l.b16 %v907
        %v1044 = vunpack.c.h.b16 %v907
        %v1045 = vunpack.c.l.b16 %v908
        %v1046 = vunpack.c.h.b16 %v908
        %v1047 = vunpack.c.l.b16 %v909
        %v1048 = vunpack.c.h.b16 %v909
        %v1049 = vunpack.c.l.b16 %v910
        %v1050 = vunpack.c.h.b16 %v910
        %v1051 = vunpack.c.l.b16 %v911
        %v1052 = vunpack.c.h.b16 %v911
        %v1053 = vunpack.c.l.b16 %v912
        %v1054 = vunpack.c.h.b16 %v912
        %v1055 = vunpack.c.l.b16 %v913
        %v1056 = vunpack.c.h.b16 %v913
        %v1057 = vunpack.c.l.b16 %v914
        %v1058 = vunpack.c.h.b16 %v914
        %v1059 = vunpack.c.l.b16 %v915
        %v1060 = vunpack.c.h.b16 %v915
        %v1061 = vunpack.c.l.b16 %v916
        %v1062 = vunpack.c.h.b16 %v916
        %v1063 = vunpack.c.l.b16 %v917
        %v1064 = vunpack.c.h.b16 %v917
        %v1065 = vunpack.c.l.b16 %v918
        %v1066 = vunpack.c.h.b16 %v918
        %v1067 = vunpack.c.l.b16 %v919
        %v1068 = vunpack.c.h.b16 %v919
        %v1069 = vunpack.c.l.b16 %v920
        %v1070 = vunpack.c.h.b16 %v920
        %v1071 = vunpack.c.l.b16 %v921
        %v1072 = vunpack.c.h.b16 %v921
        %v1073 = vunpack.c.l.b16 %v922
        %v1074 = vunpack.c.h.b16 %v922
        %v1075 = vunpack.c.l.b16 %v923
        %v1076 = vunpack.c.h.b16 %v923
        %v1077 = vunpack.c.l.b16 %v924
        %v1078 = vunpack.c.h.b16 %v924
        %v1079 = vunpack.c.l.b16 %v925
        %v1080 = vunpack.c.h.b16 %v925
        %v1081 = vunpack.c.l.b16 %v926
        %v1082 = vunpack.c.h.b16 %v926
        %v1083 = vunpack.c.l.b16 %v927
        %v1084 = vunpack.c.h.b16 %v927
        %v1085 = vunpack.c.l.b16 %v928
        %v1086 = vunpack.c.h.b16 %v928
        %v1087 = vunpack.c.l.b16 %v929
        %v1088 = vunpack.c.h.b16 %v929
        %v1089 = vunpack.c.l.b16 %v930
        %v1090 = vunpack.c.h.b16 %v930
        %v1091 = vunpack.c.l.b16 %v931
        %v1092 = vunpack.c.h.b16 %v931
        %v1093 = vpack.c.b16 %v1031, %v1029
        %v1094 = vpack.c.b16 %v1032, %v1030
        %v1095 = vpack.c.b16 %v1035, %v1033
        %v1096 = vpack.c.b16 %v1036, %v1034
        %v1097 = vpack.c.b16 %v1039, %v1037
        %v1098 = vpack.c.b16 %v1040, %v1038
        %v1099 = vpack.c.b16 %v1043, %v1041
        %v1100 = vpack.c.b16 %v1044, %v1042
        %v1101 = vpack.c.b16 %v1047, %v1045
        %v1102 = vpack.c.b16 %v1048, %v1046
        %v1103 = vpack.c.b16 %v1051, %v1049
        %v1104 = vpack.c.b16 %v1052, %v1050
        %v1105 = vpack.c.b16 %v1055, %v1053
        %v1106 = vpack.c.b16 %v1056, %v1054
        %v1107 = vpack.c.b16 %v1059, %v1057
        %v1108 = vpack.c.b16 %v1060, %v1058
        %v1109 = vpack.c.b16 %v1063, %v1061
        %v1110 = vpack.c.b16 %v1064, %v1062
        %v1111 = vpack.c.b16 %v1067, %v1065
        %v1112 = vpack.c.b16 %v1068, %v1066
        %v1113 = vpack.c.b16 %v1071, %v1069
        %v1114 = vpack.c.b16 %v1072, %v1070
        %v1115 = vpack.c.b16 %v1075, %v1073
        %v1116 = vpack.c.b16 %v1076, %v1074
        %v1117 = vpack.c.b16 %v1079, %v1077
        %v1118 = vpack.c.b16 %v1080, %v1078
        %v1119 = vpack.c.b16 %v1083, %v1081
        %v1120 = vpack.c.b16 %v1084, %v1082
        %v1121 = vpack.c.b16 %v1087, %v1085
        %v1122 = vpack.c.b16 %v1088, %v1086
        %v1123 = vpack.c.b16 %v1091, %v1089
        %v1124 = vpack.c.b16 %v1092, %v1090
        %v1189 = vunpack.c.l.b16 %v965
        %v1190 = vunpack.c.l.b16 %v966
        %v1191 = vunpack.c.l.b16 %v967
        %v1192 = vunpack.c.l.b16 %v968
        %v1193 = vunpack.c.l.b16 %v969
        %v1194 = vunpack.c.l.b16 %v970
        %v1195 = vunpack.c.l.b16 %v971
        %v1196 = vunpack.c.l.b16 %v972
        %v1197 = vunpack.c.l.b16 %v973
        %v1198 = vunpack.c.l.b16 %v974
        %v1199 = vunpack.c.l.b16 %v975
        %v1200 = vunpack.c.l.b16 %v976
        %v1201 = vunpack.c.l.b16 %v977
        %v1202 = vunpack.c.l.b16 %v978
        %v1203 = vunpack.c.l.b16 %v979
        %v1204 = vunpack.c.l.b16 %v980
        %v1205 = vunpack.c.l.b16 %v981
        %v1206 = vunpack.c.l.b16 %v982
        %v1207 = vunpack.c.l.b16 %v983
        %v1208 = vunpack.c.l.b16 %v984
        %v1209 = vunpack.c.l.b16 %v985
        %v1210 = vunpack.c.l.b16 %v986
        %v1211 = vunpack.c.l.b16 %v987
        %v1212 = vunpack.c.l.b16 %v988
        %v1213 = vunpack.c.l.b16 %v989
        %v1214 = vunpack.c.l.b16 %v990
        %v1215 = vunpack.c.l.b16 %v991
        %v1216 = vunpack.c.l.b16 %v992
        %v1217 = vunpack.c.l.b16 %v993
        %v1218 = vunpack.c.l.b16 %v994
        %v1219 = vunpack.c.l.b16 %v995
        %v1220 = vunpack.c.l.b16 %v996
        %v1221 = vpack.c.b16 %v1190, %v1189
        %v1222 = vpack.c.b16 %v1192, %v1191
        %v1223 = vpack.c.b16 %v1194, %v1193
        %v1224 = vpack.c.b16 %v1196, %v1195
        %v1225 = vpack.c.b16 %v1198, %v1197
        %v1226 = vpack.c.b16 %v1200, %v1199
        %v1227 = vpack.c.b16 %v1202, %v1201
        %v1228 = vpack.c.b16 %v1204, %v1203
        %v1229 = vpack.c.b16 %v1206, %v1205
        %v1230 = vpack.c.b16 %v1208, %v1207
        %v1231 = vpack.c.b16 %v1210, %v1209
        %v1232 = vpack.c.b16 %v1212, %v1211
        %v1233 = vpack.c.b16 %v1214, %v1213
        %v1234 = vpack.c.b16 %v1216, %v1215
        %v1235 = vpack.c.b16 %v1218, %v1217
        %v1236 = vpack.c.b16 %v1220, %v1219
        %1253 = vmatprep.subr.bf16.mxu0 0
        %1254 = vmatpush1.bf16.msra.mxu0 %v1221
        %1255 = vmatprep.subr.bf16.mxu0 0
        %1256 = vmatpush1.bf16.msra.mxu0 %v1222
        %1257 = vmatprep.subr.bf16.mxu0 0
        %1258 = vmatpush1.bf16.msra.mxu0 %v1223
        %1259 = vmatprep.subr.bf16.mxu0 0
        %1260 = vmatpush1.bf16.msra.mxu0 %v1224
        %1261 = vmatprep.subr.bf16.mxu0 0
        %1262 = vmatpush1.bf16.msra.mxu0 %v1225
        %1263 = vmatprep.subr.bf16.mxu0 0
        %1264 = vmatpush1.bf16.msra.mxu0 %v1226
        %1265 = vmatprep.subr.bf16.mxu0 0
        %1266 = vmatpush1.bf16.msra.mxu0 %v1227
        %1267 = vmatprep.subr.bf16.mxu0 0
        %1268 = vmatpush1.bf16.msra.mxu0 %v1228
        %1269 = vmatprep.subr.bf16.mxu0 0
        %1270 = vmatpush1.bf16.msra.mxu0 %v1229
        %1271 = vmatprep.subr.bf16.mxu0 0
        %1272 = vmatpush1.bf16.msra.mxu0 %v1230
        %1273 = vmatprep.subr.bf16.mxu0 0
        %1274 = vmatpush1.bf16.msra.mxu0 %v1231
        %1275 = vmatprep.subr.bf16.mxu0 0
        %1276 = vmatpush1.bf16.msra.mxu0 %v1232
        %1277 = vmatprep.subr.bf16.mxu0 0
        %1278 = vmatpush1.bf16.msra.mxu0 %v1233
        %1279 = vmatprep.subr.bf16.mxu0 0
        %1280 = vmatpush1.bf16.msra.mxu0 %v1234
        %1281 = vmatprep.subr.bf16.mxu0 0
        %1282 = vmatpush1.bf16.msra.mxu0 %v1235
        %1283 = vmatprep.subr.bf16.mxu0 0
        %1284 = vmatpush1.bf16.msra.mxu0 %v1236
        %1285 = vmatprep.mubr.bf16.mxu0 %v1094
        %1286 = vmatmul.mubr.bf16.gmra.mrb[0].mxu0 %v1093
        %v1287 = vpop.f32.mrb[0].mxu0
        %v1288 = vadd.f32 0.0, %v1287
        %v1289 = vpop.f32.mrb[0].mxu0
        %v1290 = vpop.f32.mrb[0].mxu0
        %v1291 = vadd.f32 0.0, %v1290
        %v1292 = vpop.f32.mrb[0].mxu0
        %1293 = vmatprep.mubr.bf16.mxu0 %v1096
        %1294 = vmatmul.mubr.bf16.gmra.mrb[0].mxu0 %v1095
        %v1295 = vpop.f32.mrb[0].mxu0
        %v1296 = vadd.f32 0.0, %v1295
        %v1297 = vpop.f32.mrb[0].mxu0
        %v1298 = vpop.f32.mrb[0].mxu0
        %v1299 = vadd.f32 0.0, %v1298
        %v1300 = vpop.f32.mrb[0].mxu0
        %1301 = vmatprep.mubr.bf16.mxu0 %v1098
        %1302 = vmatmul.mubr.bf16.gmra.mrb[0].mxu0 %v1097
        %v1303 = vpop.f32.mrb[0].mxu0
        %v1304 = vadd.f32 0.0, %v1303
        %v1305 = vpop.f32.mrb[0].mxu0
        %v1306 = vpop.f32.mrb[0].mxu0
        %v1307 = vadd.f32 0.0, %v1306
        %v1308 = vpop.f32.mrb[0].mxu0
        %1309 = vmatprep.mubr.bf16.mxu0 %v1100
        %1310 = vmatmul.mubr.bf16.gmra.mrb[0].mxu0 %v1099
        %v1311 = vpop.f32.mrb[0].mxu0
        %v1312 = vadd.f32 0.0, %v1311
        %v1313 = vpop.f32.mrb[0].mxu0
        %v1314 = vpop.f32.mrb[0].mxu0
        %v1315 = vadd.f32 0.0, %v1314
        %v1316 = vpop.f32.mrb[0].mxu0
        %1317 = vmatprep.mubr.bf16.mxu0 %v1102
        %1318 = vmatmul.mubr.bf16.gmra.mrb[0].mxu0 %v1101
        %v1319 = vpop.f32.mrb[0].mxu0
        %v1320 = vadd.f32 0.0, %v1319
        %v1321 = vpop.f32.mrb[0].mxu0
        %v1322 = vpop.f32.mrb[0].mxu0
        %v1323 = vadd.f32 0.0, %v1322
        %v1324 = vpop.f32.mrb[0].mxu0
        %1325 = vmatprep.mubr.bf16.mxu0 %v1104
        %1326 = vmatmul.mubr.bf16.gmra.mrb[0].mxu0 %v1103
        %v1327 = vpop.f32.mrb[0].mxu0
        %v1328 = vadd.f32 0.0, %v1327
        %v1329 = vpop.f32.mrb[0].mxu0
        %v1330 = vpop.f32.mrb[0].mxu0
        %v1331 = vadd.f32 0.0, %v1330
        %v1332 = vpop.f32.mrb[0].mxu0
        %1333 = vmatprep.mubr.bf16.mxu0 %v1106
        %1334 = vmatmul.mubr.bf16.gmra.mrb[0].mxu0 %v1105
        %v1335 = vpop.f32.mrb[0].mxu0
        %v1336 = vadd.f32 0.0, %v1335
        %v1337 = vpop.f32.mrb[0].mxu0
        %v1338 = vpop.f32.mrb[0].mxu0
        %v1339 = vadd.f32 0.0, %v1338
        %v1340 = vpop.f32.mrb[0].mxu0
        %1341 = vmatprep.mubr.bf16.mxu0 %v1108
        %1342 = vmatmul.mubr.bf16.gmra.mrb[0].mxu0 %v1107
        %v1343 = vpop.f32.mrb[0].mxu0
        %v1344 = vadd.f32 0.0, %v1343
        %v1345 = vpop.f32.mrb[0].mxu0
        %v1346 = vpop.f32.mrb[0].mxu0
        %v1347 = vadd.f32 0.0, %v1346
        %v1348 = vpop.f32.mrb[0].mxu0
        %1349 = vmatprep.mubr.bf16.mxu0 %v1110
        %1350 = vmatmul.mubr.bf16.gmra.mrb[0].mxu0 %v1109
        %v1351 = vpop.f32.mrb[0].mxu0
        %v1352 = vadd.f32 0.0, %v1351
        %v1353 = vpop.f32.mrb[0].mxu0
        %v1354 = vpop.f32.mrb[0].mxu0
        %v1355 = vadd.f32 0.0, %v1354
        %v1356 = vpop.f32.mrb[0].mxu0
        %1357 = vmatprep.mubr.bf16.mxu0 %v1112
        %1358 = vmatmul.mubr.bf16.gmra.mrb[0].mxu0 %v1111
        %v1359 = vpop.f32.mrb[0].mxu0
        %v1360 = vadd.f32 0.0, %v1359
        %v1361 = vpop.f32.mrb[0].mxu0
        %v1362 = vpop.f32.mrb[0].mxu0
        %v1363 = vadd.f32 0.0, %v1362
        %v1364 = vpop.f32.mrb[0].mxu0
        %1365 = vmatprep.mubr.bf16.mxu0 %v1114
        %1366 = vmatmul.mubr.bf16.gmra.mrb[0].mxu0 %v1113
        %v1367 = vpop.f32.mrb[0].mxu0
        %v1368 = vadd.f32 0.0, %v1367
        %v1369 = vpop.f32.mrb[0].mxu0
        %v1370 = vpop.f32.mrb[0].mxu0
        %v1371 = vadd.f32 0.0, %v1370
        %v1372 = vpop.f32.mrb[0].mxu0
        %1373 = vmatprep.mubr.bf16.mxu0 %v1116
        %1374 = vmatmul.mubr.bf16.gmra.mrb[0].mxu0 %v1115
        %v1375 = vpop.f32.mrb[0].mxu0
        %v1376 = vadd.f32 0.0, %v1375
        %v1377 = vpop.f32.mrb[0].mxu0
        %v1378 = vpop.f32.mrb[0].mxu0
        %v1379 = vadd.f32 0.0, %v1378
        %v1380 = vpop.f32.mrb[0].mxu0
        %1381 = vmatprep.mubr.bf16.mxu0 %v1118
        %1382 = vmatmul.mubr.bf16.gmra.mrb[0].mxu0 %v1117
        %v1383 = vpop.f32.mrb[0].mxu0
        %v1384 = vadd.f32 0.0, %v1383
        %v1385 = vpop.f32.mrb[0].mxu0
        %v1386 = vpop.f32.mrb[0].mxu0
        %v1387 = vadd.f32 0.0, %v1386
        %v1388 = vpop.f32.mrb[0].mxu0
        %1389 = vmatprep.mubr.bf16.mxu0 %v1120
        %1390 = vmatmul.mubr.bf16.gmra.mrb[0].mxu0 %v1119
        %v1391 = vpop.f32.mrb[0].mxu0
        %v1392 = vadd.f32 0.0, %v1391
        %v1393 = vpop.f32.mrb[0].mxu0
        %v1394 = vpop.f32.mrb[0].mxu0
        %v1395 = vadd.f32 0.0, %v1394
        %v1396 = vpop.f32.mrb[0].mxu0
        %1397 = vmatprep.mubr.bf16.mxu0 %v1122
        %1398 = vmatmul.mubr.bf16.gmra.mrb[0].mxu0 %v1121
        %v1399 = vpop.f32.mrb[0].mxu0
        %v1400 = vadd.f32 0.0, %v1399
        %v1401 = vpop.f32.mrb[0].mxu0
        %v1402 = vpop.f32.mrb[0].mxu0
        %v1403 = vadd.f32 0.0, %v1402
        %v1404 = vpop.f32.mrb[0].mxu0
        %1405 = vmatprep.mubr.bf16.mxu0 %v1124
        %1406 = vmatmul.mubr.bf16.gmra.mrb[0].mxu0 %v1123
        %v1407 = vpop.f32.mrb[0].mxu0
        %v1408 = vadd.f32 0.0, %v1407
        %v1409 = vpop.f32.mrb[0].mxu0
        %v1410 = vpop.f32.mrb[0].mxu0
        %v1411 = vadd.f32 0.0, %v1410
        %v1412 = vpop.f32.mrb[0].mxu0
        %1413 = vdwg.mxu0
        %v1414 = vadd.f32 %v932, %v1288
        %v1415 = vadd.f32 %v933, %v1291
        %v1416 = vadd.f32 %v934, %v1296
        %v1417 = vadd.f32 %v935, %v1299
        %v1418 = vadd.f32 %v936, %v1304
        %v1419 = vadd.f32 %v937, %v1307
        %v1420 = vadd.f32 %v938, %v1312
        %v1421 = vadd.f32 %v939, %v1315
        %v1422 = vadd.f32 %v940, %v1320
        %v1423 = vadd.f32 %v941, %v1323
        %v1424 = vadd.f32 %v942, %v1328
        %v1425 = vadd.f32 %v943, %v1331
        %v1426 = vadd.f32 %v944, %v1336
        %v1427 = vadd.f32 %v945, %v1339
        %v1428 = vadd.f32 %v946, %v1344
        %v1429 = vadd.f32 %v947, %v1347
        %v1430 = vadd.f32 %v948, %v1352
        %v1431 = vadd.f32 %v949, %v1355
        %v1432 = vadd.f32 %v950, %v1360
        %v1433 = vadd.f32 %v951, %v1363
        %v1434 = vadd.f32 %v952, %v1368
        %v1435 = vadd.f32 %v953, %v1371
        %v1436 = vadd.f32 %v954, %v1376
        %v1437 = vadd.f32 %v955, %v1379
        %v1438 = vadd.f32 %v956, %v1384
        %v1439 = vadd.f32 %v957, %v1387
        %v1440 = vadd.f32 %v958, %v1392
        %v1441 = vadd.f32 %v959, %v1395
        %v1442 = vadd.f32 %v960, %v1400
        %v1443 = vadd.f32 %v961, %v1403
        %v1444 = vadd.f32 %v962, %v1408
        %v1445 = vadd.f32 %v963, %v1411
        %1446 = vst [vmem:[#allocation2] sm:$0xff] %v1414
        %1447 = vst [vmem:[#allocation2 + $0x8] sm:$0xff] %v1415
        %1448 = vst [vmem:[#allocation2 + $0x10] sm:$0xff] %v1416
        %1449 = vst [vmem:[#allocation2 + $0x18] sm:$0xff] %v1417
        %1450 = vst [vmem:[#allocation2 + $0x20] sm:$0xff] %v1418
        %1451 = vst [vmem:[#allocation2 + $0x28] sm:$0xff] %v1419
        %1452 = vst [vmem:[#allocation2 + $0x30] sm:$0xff] %v1420
        %1453 = vst [vmem:[#allocation2 + $0x38] sm:$0xff] %v1421
        %1454 = vst [vmem:[#allocation2 + $0x40] sm:$0xff] %v1422
        %1455 = vst [vmem:[#allocation2 + $0x48] sm:$0xff] %v1423
        %1456 = vst [vmem:[#allocation2 + $0x50] sm:$0xff] %v1424
        %1457 = vst [vmem:[#allocation2 + $0x58] sm:$0xff] %v1425
        %1458 = vst [vmem:[#allocation2 + $0x60] sm:$0xff] %v1426
        %1459 = vst [vmem:[#allocation2 + $0x68] sm:$0xff] %v1427
        %1460 = vst [vmem:[#allocation2 + $0x70] sm:$0xff] %v1428
        %1461 = vst [vmem:[#allocation2 + $0x78] sm:$0xff] %v1429
        %1462 = vst [vmem:[#allocation2 + $0x80] sm:$0xff] %v1430
        %1463 = vst [vmem:[#allocation2 + $0x88] sm:$0xff] %v1431
        %1464 = vst [vmem:[#allocation2 + $0x90] sm:$0xff] %v1432
        %1465 = vst [vmem:[#allocation2 + $0x98] sm:$0xff] %v1433
        %1466 = vst [vmem:[#allocation2 + $0xa0] sm:$0xff] %v1434
        %1467 = vst [vmem:[#allocation2 + $0xa8] sm:$0xff] %v1435
        %1468 = vst [vmem:[#allocation2 + $0xb0] sm:$0xff] %v1436
        %1469 = vst [vmem:[#allocation2 + $0xb8] sm:$0xff] %v1437
        %1470 = vst [vmem:[#allocation2 + $0xc0] sm:$0xff] %v1438
        %1471 = vst [vmem:[#allocation2 + $0xc8] sm:$0xff] %v1439
        %1472 = vst [vmem:[#allocation2 + $0xd0] sm:$0xff] %v1440
        %1473 = vst [vmem:[#allocation2 + $0xd8] sm:$0xff] %v1441
        %1474 = vst [vmem:[#allocation2 + $0xe0] sm:$0xff] %v1442
        %1475 = vst [vmem:[#allocation2 + $0xe8] sm:$0xff] %v1443
        %1476 = vst [vmem:[#allocation2 + $0xf0] sm:$0xff] %v1444
        %1477 = vst [vmem:[#allocation2 + $0xf8] sm:$0xff] %v1445
        %v1478 = vld [vmem:[%s289] sm:$0xff]
        %v1479 = vld [vmem:[%s289 + $0x8] sm:$0xff]
        %v1480 = vld [vmem:[%s289 + $0x10] sm:$0xff]
        %v1481 = vld [vmem:[%s289 + $0x18] sm:$0xff]
        %v1482 = vld [vmem:[%s289 + $0x20] sm:$0xff]
        %v1483 = vld [vmem:[%s289 + $0x28] sm:$0xff]
        %v1484 = vld [vmem:[%s289 + $0x30] sm:$0xff]
        %v1485 = vld [vmem:[%s289 + $0x38] sm:$0xff]
        %v1486 = vld [vmem:[%s289 + $0x40] sm:$0xff]
        %v1487 = vld [vmem:[%s289 + $0x48] sm:$0xff]
        %v1488 = vld [vmem:[%s289 + $0x50] sm:$0xff]
        %v1489 = vld [vmem:[%s289 + $0x58] sm:$0xff]
        %v1490 = vld [vmem:[%s289 + $0x60] sm:$0xff]
        %v1491 = vld [vmem:[%s289 + $0x68] sm:$0xff]
        %v1492 = vld [vmem:[%s289 + $0x70] sm:$0xff]
        %v1493 = vld [vmem:[%s289 + $0x78] sm:$0xff]
        %v1494 = vld [vmem:[%s289 + $0x80] sm:$0xff]
        %v1495 = vld [vmem:[%s289 + $0x88] sm:$0xff]
        %v1496 = vld [vmem:[%s289 + $0x90] sm:$0xff]
        %v1497 = vld [vmem:[%s289 + $0x98] sm:$0xff]
        %v1498 = vld [vmem:[%s289 + $0xa0] sm:$0xff]
        %v1499 = vld [vmem:[%s289 + $0xa8] sm:$0xff]
        %v1500 = vld [vmem:[%s289 + $0xb0] sm:$0xff]
        %v1501 = vld [vmem:[%s289 + $0xb8] sm:$0xff]
        %v1502 = vld [vmem:[%s289 + $0xc0] sm:$0xff]
        %v1503 = vld [vmem:[%s289 + $0xc8] sm:$0xff]
        %v1504 = vld [vmem:[%s289 + $0xd0] sm:$0xff]
        %v1505 = vld [vmem:[%s289 + $0xd8] sm:$0xff]
        %v1506 = vld [vmem:[%s289 + $0xe0] sm:$0xff]
        %v1507 = vld [vmem:[%s289 + $0xe8] sm:$0xff]
        %v1508 = vld [vmem:[%s289 + $0xf0] sm:$0xff]
        %v1509 = vld [vmem:[%s289 + $0xf8] sm:$0xff]
        %v1510 = vld [vmem:[#allocation2] sm:$0xff]
        %v1511 = vld [vmem:[#allocation2 + $0x8] sm:$0xff]
        %v1512 = vld [vmem:[#allocation2 + $0x10] sm:$0xff]
        %v1513 = vld [vmem:[#allocation2 + $0x18] sm:$0xff]
        %v1514 = vld [vmem:[#allocation2 + $0x20] sm:$0xff]
        %v1515 = vld [vmem:[#allocation2 + $0x28] sm:$0xff]
        %v1516 = vld [vmem:[#allocation2 + $0x30] sm:$0xff]
        %v1517 = vld [vmem:[#allocation2 + $0x38] sm:$0xff]
        %v1518 = vld [vmem:[#allocation2 + $0x40] sm:$0xff]
        %v1519 = vld [vmem:[#allocation2 + $0x48] sm:$0xff]
        %v1520 = vld [vmem:[#allocation2 + $0x50] sm:$0xff]
        %v1521 = vld [vmem:[#allocation2 + $0x58] sm:$0xff]
        %v1522 = vld [vmem:[#allocation2 + $0x60] sm:$0xff]
        %v1523 = vld [vmem:[#allocation2 + $0x68] sm:$0xff]
        %v1524 = vld [vmem:[#allocation2 + $0x70] sm:$0xff]
        %v1525 = vld [vmem:[#allocation2 + $0x78] sm:$0xff]
        %v1526 = vld [vmem:[#allocation2 + $0x80] sm:$0xff]
        %v1527 = vld [vmem:[#allocation2 + $0x88] sm:$0xff]
        %v1528 = vld [vmem:[#allocation2 + $0x90] sm:$0xff]
        %v1529 = vld [vmem:[#allocation2 + $0x98] sm:$0xff]
        %v1530 = vld [vmem:[#allocation2 + $0xa0] sm:$0xff]
        %v1531 = vld [vmem:[#allocation2 + $0xa8] sm:$0xff]
        %v1532 = vld [vmem:[#allocation2 + $0xb0] sm:$0xff]
        %v1533 = vld [vmem:[#allocation2 + $0xb8] sm:$0xff]
        %v1534 = vld [vmem:[#allocation2 + $0xc0] sm:$0xff]
        %v1535 = vld [vmem:[#allocation2 + $0xc8] sm:$0xff]
        %v1536 = vld [vmem:[#allocation2 + $0xd0] sm:$0xff]
        %v1537 = vld [vmem:[#allocation2 + $0xd8] sm:$0xff]
        %v1538 = vld [vmem:[#allocation2 + $0xe0] sm:$0xff]
        %v1539 = vld [vmem:[#allocation2 + $0xe8] sm:$0xff]
        %v1540 = vld [vmem:[#allocation2 + $0xf0] sm:$0xff]
        %v1541 = vld [vmem:[#allocation2 + $0xf8] sm:$0xff]
        %s1542 = scalar_lea.vmem %s3, 256
        %v1543 = vld [vmem:[%s1542] sm:$0xf]
        %v1544 = vld [vmem:[%s1542 + $0x4] sm:$0xf]
        %v1545 = vld [vmem:[%s1542 + $0x8] sm:$0xf]
        %v1546 = vld [vmem:[%s1542 + $0xc] sm:$0xf]
        %v1547 = vld [vmem:[%s1542 + $0x10] sm:$0xf]
        %v1548 = vld [vmem:[%s1542 + $0x14] sm:$0xf]
        %v1549 = vld [vmem:[%s1542 + $0x18] sm:$0xf]
        %v1550 = vld [vmem:[%s1542 + $0x1c] sm:$0xf]
        %v1551 = vld [vmem:[%s1542 + $0x20] sm:$0xf]
        %v1552 = vld [vmem:[%s1542 + $0x24] sm:$0xf]
        %v1553 = vld [vmem:[%s1542 + $0x28] sm:$0xf]
        %v1554 = vld [vmem:[%s1542 + $0x2c] sm:$0xf]
        %v1555 = vld [vmem:[%s1542 + $0x30] sm:$0xf]
        %v1556 = vld [vmem:[%s1542 + $0x34] sm:$0xf]
        %v1557 = vld [vmem:[%s1542 + $0x38] sm:$0xf]
        %v1558 = vld [vmem:[%s1542 + $0x3c] sm:$0xf]
        %v1559 = vld [vmem:[%s1542 + $0x40] sm:$0xf]
        %v1560 = vld [vmem:[%s1542 + $0x44] sm:$0xf]
        %v1561 = vld [vmem:[%s1542 + $0x48] sm:$0xf]
        %v1562 = vld [vmem:[%s1542 + $0x4c] sm:$0xf]
        %v1563 = vld [vmem:[%s1542 + $0x50] sm:$0xf]
        %v1564 = vld [vmem:[%s1542 + $0x54] sm:$0xf]
        %v1565 = vld [vmem:[%s1542 + $0x58] sm:$0xf]
        %v1566 = vld [vmem:[%s1542 + $0x5c] sm:$0xf]
        %v1567 = vld [vmem:[%s1542 + $0x60] sm:$0xf]
        %v1568 = vld [vmem:[%s1542 + $0x64] sm:$0xf]
        %v1569 = vld [vmem:[%s1542 + $0x68] sm:$0xf]
        %v1570 = vld [vmem:[%s1542 + $0x6c] sm:$0xf]
        %v1571 = vld [vmem:[%s1542 + $0x70] sm:$0xf]
        %v1572 = vld [vmem:[%s1542 + $0x74] sm:$0xf]
        %v1573 = vld [vmem:[%s1542 + $0x78] sm:$0xf]
        %v1574 = vld [vmem:[%s1542 + $0x7c] sm:$0xf]
        %v1607 = vunpack.c.l.b16 %v1478
        %v1608 = vunpack.c.h.b16 %v1478
        %v1609 = vunpack.c.l.b16 %v1479
        %v1610 = vunpack.c.h.b16 %v1479
        %v1611 = vunpack.c.l.b16 %v1480
        %v1612 = vunpack.c.h.b16 %v1480
        %v1613 = vunpack.c.l.b16 %v1481
        %v1614 = vunpack.c.h.b16 %v1481
        %v1615 = vunpack.c.l.b16 %v1482
        %v1616 = vunpack.c.h.b16 %v1482
        %v1617 = vunpack.c.l.b16 %v1483
        %v1618 = vunpack.c.h.b16 %v1483
        %v1619 = vunpack.c.l.b16 %v1484
        %v1620 = vunpack.c.h.b16 %v1484
        %v1621 = vunpack.c.l.b16 %v1485
        %v1622 = vunpack.c.h.b16 %v1485
        %v1623 = vunpack.c.l.b16 %v1486
        %v1624 = vunpack.c.h.b16 %v1486
        %v1625 = vunpack.c.l.b16 %v1487
        %v1626 = vunpack.c.h.b16 %v1487
        %v1627 = vunpack.c.l.b16 %v1488
        %v1628 = vunpack.c.h.b16 %v1488
        %v1629 = vunpack.c.l.b16 %v1489
        %v1630 = vunpack.c.h.b16 %v1489
        %v1631 = vunpack.c.l.b16 %v1490
        %v1632 = vunpack.c.h.b16 %v1490
        %v1633 = vunpack.c.l.b16 %v1491
        %v1634 = vunpack.c.h.b16 %v1491
        %v1635 = vunpack.c.l.b16 %v1492
        %v1636 = vunpack.c.h.b16 %v1492
        %v1637 = vunpack.c.l.b16 %v1493
        %v1638 = vunpack.c.h.b16 %v1493
        %v1639 = vunpack.c.l.b16 %v1494
        %v1640 = vunpack.c.h.b16 %v1494
        %v1641 = vunpack.c.l.b16 %v1495
        %v1642 = vunpack.c.h.b16 %v1495
        %v1643 = vunpack.c.l.b16 %v1496
        %v1644 = vunpack.c.h.b16 %v1496
        %v1645 = vunpack.c.l.b16 %v1497
        %v1646 = vunpack.c.h.b16 %v1497
        %v1647 = vunpack.c.l.b16 %v1498
        %v1648 = vunpack.c.h.b16 %v1498
        %v1649 = vunpack.c.l.b16 %v1499
        %v1650 = vunpack.c.h.b16 %v1499
        %v1651 = vunpack.c.l.b16 %v1500
        %v1652 = vunpack.c.h.b16 %v1500
        %v1653 = vunpack.c.l.b16 %v1501
        %v1654 = vunpack.c.h.b16 %v1501
        %v1655 = vunpack.c.l.b16 %v1502
        %v1656 = vunpack.c.h.b16 %v1502
        %v1657 = vunpack.c.l.b16 %v1503
        %v1658 = vunpack.c.h.b16 %v1503
        %v1659 = vunpack.c.l.b16 %v1504
        %v1660 = vunpack.c.h.b16 %v1504
        %v1661 = vunpack.c.l.b16 %v1505
        %v1662 = vunpack.c.h.b16 %v1505
        %v1663 = vunpack.c.l.b16 %v1506
        %v1664 = vunpack.c.h.b16 %v1506
        %v1665 = vunpack.c.l.b16 %v1507
        %v1666 = vunpack.c.h.b16 %v1507
        %v1667 = vunpack.c.l.b16 %v1508
        %v1668 = vunpack.c.h.b16 %v1508
        %v1669 = vunpack.c.l.b16 %v1509
        %v1670 = vunpack.c.h.b16 %v1509
        %v1671 = vpack.c.b16 %v1609, %v1607
        %v1672 = vpack.c.b16 %v1610, %v1608
        %v1673 = vpack.c.b16 %v1613, %v1611
        %v1674 = vpack.c.b16 %v1614, %v1612
        %v1675 = vpack.c.b16 %v1617, %v1615
        %v1676 = vpack.c.b16 %v1618, %v1616
        %v1677 = vpack.c.b16 %v1621, %v1619
        %v1678 = vpack.c.b16 %v1622, %v1620
        %v1679 = vpack.c.b16 %v1625, %v1623
        %v1680 = vpack.c.b16 %v1626, %v1624
        %v1681 = vpack.c.b16 %v1629, %v1627
        %v1682 = vpack.c.b16 %v1630, %v1628
        %v1683 = vpack.c.b16 %v1633, %v1631
        %v1684 = vpack.c.b16 %v1634, %v1632
        %v1685 = vpack.c.b16 %v1637, %v1635
        %v1686 = vpack.c.b16 %v1638, %v1636
        %v1687 = vpack.c.b16 %v1641, %v1639
        %v1688 = vpack.c.b16 %v1642, %v1640
        %v1689 = vpack.c.b16 %v1645, %v1643
        %v1690 = vpack.c.b16 %v1646, %v1644
        %v1691 = vpack.c.b16 %v1649, %v1647
        %v1692 = vpack.c.b16 %v1650, %v1648
        %v1693 = vpack.c.b16 %v1653, %v1651
        %v1694 = vpack.c.b16 %v1654, %v1652
        %v1695 = vpack.c.b16 %v1657, %v1655
        %v1696 = vpack.c.b16 %v1658, %v1656
        %v1697 = vpack.c.b16 %v1661, %v1659
        %v1698 = vpack.c.b16 %v1662, %v1660
        %v1699 = vpack.c.b16 %v1665, %v1663
        %v1700 = vpack.c.b16 %v1666, %v1664
        %v1701 = vpack.c.b16 %v1669, %v1667
        %v1702 = vpack.c.b16 %v1670, %v1668
        %v1767 = vunpack.c.l.b16 %v1543
        %v1768 = vunpack.c.l.b16 %v1544
        %v1769 = vunpack.c.l.b16 %v1545
        %v1770 = vunpack.c.l.b16 %v1546
        %v1771 = vunpack.c.l.b16 %v1547
        %v1772 = vunpack.c.l.b16 %v1548
        %v1773 = vunpack.c.l.b16 %v1549
        %v1774 = vunpack.c.l.b16 %v1550
        %v1775 = vunpack.c.l.b16 %v1551
        %v1776 = vunpack.c.l.b16 %v1552
        %v1777 = vunpack.c.l.b16 %v1553
        %v1778 = vunpack.c.l.b16 %v1554
        %v1779 = vunpack.c.l.b16 %v1555
        %v1780 = vunpack.c.l.b16 %v1556
        %v1781 = vunpack.c.l.b16 %v1557
        %v1782 = vunpack.c.l.b16 %v1558
        %v1783 = vunpack.c.l.b16 %v1559
        %v1784 = vunpack.c.l.b16 %v1560
        %v1785 = vunpack.c.l.b16 %v1561
        %v1786 = vunpack.c.l.b16 %v1562
        %v1787 = vunpack.c.l.b16 %v1563
        %v1788 = vunpack.c.l.b16 %v1564
        %v1789 = vunpack.c.l.b16 %v1565
        %v1790 = vunpack.c.l.b16 %v1566
        %v1791 = vunpack.c.l.b16 %v1567
        %v1792 = vunpack.c.l.b16 %v1568
        %v1793 = vunpack.c.l.b16 %v1569
        %v1794 = vunpack.c.l.b16 %v1570
        %v1795 = vunpack.c.l.b16 %v1571
        %v1796 = vunpack.c.l.b16 %v1572
        %v1797 = vunpack.c.l.b16 %v1573
        %v1798 = vunpack.c.l.b16 %v1574
        %v1799 = vpack.c.b16 %v1768, %v1767
        %v1800 = vpack.c.b16 %v1770, %v1769
        %v1801 = vpack.c.b16 %v1772, %v1771
        %v1802 = vpack.c.b16 %v1774, %v1773
        %v1803 = vpack.c.b16 %v1776, %v1775
        %v1804 = vpack.c.b16 %v1778, %v1777
        %v1805 = vpack.c.b16 %v1780, %v1779
        %v1806 = vpack.c.b16 %v1782, %v1781
        %v1807 = vpack.c.b16 %v1784, %v1783
        %v1808 = vpack.c.b16 %v1786, %v1785
        %v1809 = vpack.c.b16 %v1788, %v1787
        %v1810 = vpack.c.b16 %v1790, %v1789
        %v1811 = vpack.c.b16 %v1792, %v1791
        %v1812 = vpack.c.b16 %v1794, %v1793
        %v1813 = vpack.c.b16 %v1796, %v1795
        %v1814 = vpack.c.b16 %v1798, %v1797
        %1831 = vmatprep.subr.bf16.mxu0 0
        %1832 = vmatpush1.bf16.msra.mxu0 %v1799
        %1833 = vmatprep.subr.bf16.mxu0 0
        %1834 = vmatpush1.bf16.msra.mxu0 %v1800
        %1835 = vmatprep.subr.bf16.mxu0 0
        %1836 = vmatpush1.bf16.msra.mxu0 %v1801
        %1837 = vmatprep.subr.bf16.mxu0 0
        %1838 = vmatpush1.bf16.msra.mxu0 %v1802
        %1839 = vmatprep.subr.bf16.mxu0 0
        %1840 = vmatpush1.bf16.msra.mxu0 %v1803
        %1841 = vmatprep.subr.bf16.mxu0 0
        %1842 = vmatpush1.bf16.msra.mxu0 %v1804
        %1843 = vmatprep.subr.bf16.mxu0 0
        %1844 = vmatpush1.bf16.msra.mxu0 %v1805
        %1845 = vmatprep.subr.bf16.mxu0 0
        %1846 = vmatpush1.bf16.msra.mxu0 %v1806
        %1847 = vmatprep.subr.bf16.mxu0 0
        %1848 = vmatpush1.bf16.msra.mxu0 %v1807
        %1849 = vmatprep.subr.bf16.mxu0 0
        %1850 = vmatpush1.bf16.msra.mxu0 %v1808
        %1851 = vmatprep.subr.bf16.mxu0 0
        %1852 = vmatpush1.bf16.msra.mxu0 %v1809
        %1853 = vmatprep.subr.bf16.mxu0 0
        %1854 = vmatpush1.bf16.msra.mxu0 %v1810
        %1855 = vmatprep.subr.bf16.mxu0 0
        %1856 = vmatpush1.bf16.msra.mxu0 %v1811
        %1857 = vmatprep.subr.bf16.mxu0 0
        %1858 = vmatpush1.bf16.msra.mxu0 %v1812
        %1859 = vmatprep.subr.bf16.mxu0 0
        %1860 = vmatpush1.bf16.msra.mxu0 %v1813
        %1861 = vmatprep.subr.bf16.mxu0 0
        %1862 = vmatpush1.bf16.msra.mxu0 %v1814
        %1863 = vmatprep.mubr.bf16.mxu0 %v1672
        %1864 = vmatmul.mubr.bf16.gmra.mrb[0].mxu0 %v1671
        %v1865 = vpop.f32.mrb[0].mxu0
        %v1866 = vadd.f32 0.0, %v1865
        %v1867 = vpop.f32.mrb[0].mxu0
        %v1868 = vpop.f32.mrb[0].mxu0
        %v1869 = vadd.f32 0.0, %v1868
        %v1870 = vpop.f32.mrb[0].mxu0
        %1871 = vmatprep.mubr.bf16.mxu0 %v1674
        %1872 = vmatmul.mubr.bf16.gmra.mrb[0].mxu0 %v1673
        %v1873 = vpop.f32.mrb[0].mxu0
        %v1874 = vadd.f32 0.0, %v1873
        %v1875 = vpop.f32.mrb[0].mxu0
        %v1876 = vpop.f32.mrb[0].mxu0
        %v1877 = vadd.f32 0.0, %v1876
        %v1878 = vpop.f32.mrb[0].mxu0
        %1879 = vmatprep.mubr.bf16.mxu0 %v1676
        %1880 = vmatmul.mubr.bf16.gmra.mrb[0].mxu0 %v1675
        %v1881 = vpop.f32.mrb[0].mxu0
        %v1882 = vadd.f32 0.0, %v1881
        %v1883 = vpop.f32.mrb[0].mxu0
        %v1884 = vpop.f32.mrb[0].mxu0
        %v1885 = vadd.f32 0.0, %v1884
        %v1886 = vpop.f32.mrb[0].mxu0
        %1887 = vmatprep.mubr.bf16.mxu0 %v1678
        %1888 = vmatmul.mubr.bf16.gmra.mrb[0].mxu0 %v1677
        %v1889 = vpop.f32.mrb[0].mxu0
        %v1890 = vadd.f32 0.0, %v1889
        %v1891 = vpop.f32.mrb[0].mxu0
        %v1892 = vpop.f32.mrb[0].mxu0
        %v1893 = vadd.f32 0.0, %v1892
        %v1894 = vpop.f32.mrb[0].mxu0
        %1895 = vmatprep.mubr.bf16.mxu0 %v1680
        %1896 = vmatmul.mubr.bf16.gmra.mrb[0].mxu0 %v1679
        %v1897 = vpop.f32.mrb[0].mxu0
        %v1898 = vadd.f32 0.0, %v1897
        %v1899 = vpop.f32.mrb[0].mxu0
        %v1900 = vpop.f32.mrb[0].mxu0
        %v1901 = vadd.f32 0.0, %v1900
        %v1902 = vpop.f32.mrb[0].mxu0
        %1903 = vmatprep.mubr.bf16.mxu0 %v1682
        %1904 = vmatmul.mubr.bf16.gmra.mrb[0].mxu0 %v1681
        %v1905 = vpop.f32.mrb[0].mxu0
        %v1906 = vadd.f32 0.0, %v1905
        %v1907 = vpop.f32.mrb[0].mxu0
        %v1908 = vpop.f32.mrb[0].mxu0
        %v1909 = vadd.f32 0.0, %v1908
        %v1910 = vpop.f32.mrb[0].mxu0
        %1911 = vmatprep.mubr.bf16.mxu0 %v1684
        %1912 = vmatmul.mubr.bf16.gmra.mrb[0].mxu0 %v1683
        %v1913 = vpop.f32.mrb[0].mxu0
        %v1914 = vadd.f32 0.0, %v1913
        %v1915 = vpop.f32.mrb[0].mxu0
        %v1916 = vpop.f32.mrb[0].mxu0
        %v1917 = vadd.f32 0.0, %v1916
        %v1918 = vpop.f32.mrb[0].mxu0
        %1919 = vmatprep.mubr.bf16.mxu0 %v1686
        %1920 = vmatmul.mubr.bf16.gmra.mrb[0].mxu0 %v1685
        %v1921 = vpop.f32.mrb[0].mxu0
        %v1922 = vadd.f32 0.0, %v1921
        %v1923 = vpop.f32.mrb[0].mxu0
        %v1924 = vpop.f32.mrb[0].mxu0
        %v1925 = vadd.f32 0.0, %v1924
        %v1926 = vpop.f32.mrb[0].mxu0
        %1927 = vmatprep.mubr.bf16.mxu0 %v1688
        %1928 = vmatmul.mubr.bf16.gmra.mrb[0].mxu0 %v1687
        %v1929 = vpop.f32.mrb[0].mxu0
        %v1930 = vadd.f32 0.0, %v1929
        %v1931 = vpop.f32.mrb[0].mxu0
        %v1932 = vpop.f32.mrb[0].mxu0
        %v1933 = vadd.f32 0.0, %v1932
        %v1934 = vpop.f32.mrb[0].mxu0
        %1935 = vmatprep.mubr.bf16.mxu0 %v1690
        %1936 = vmatmul.mubr.bf16.gmra.mrb[0].mxu0 %v1689
        %v1937 = vpop.f32.mrb[0].mxu0
        %v1938 = vadd.f32 0.0, %v1937
        %v1939 = vpop.f32.mrb[0].mxu0
        %v1940 = vpop.f32.mrb[0].mxu0
        %v1941 = vadd.f32 0.0, %v1940
        %v1942 = vpop.f32.mrb[0].mxu0
        %1943 = vmatprep.mubr.bf16.mxu0 %v1692
        %1944 = vmatmul.mubr.bf16.gmra.mrb[0].mxu0 %v1691
        %v1945 = vpop.f32.mrb[0].mxu0
        %v1946 = vadd.f32 0.0, %v1945
        %v1947 = vpop.f32.mrb[0].mxu0
        %v1948 = vpop.f32.mrb[0].mxu0
        %v1949 = vadd.f32 0.0, %v1948
        %v1950 = vpop.f32.mrb[0].mxu0
        %1951 = vmatprep.mubr.bf16.mxu0 %v1694
        %1952 = vmatmul.mubr.bf16.gmra.mrb[0].mxu0 %v1693
        %v1953 = vpop.f32.mrb[0].mxu0
        %v1954 = vadd.f32 0.0, %v1953
        %v1955 = vpop.f32.mrb[0].mxu0
        %v1956 = vpop.f32.mrb[0].mxu0
        %v1957 = vadd.f32 0.0, %v1956
        %v1958 = vpop.f32.mrb[0].mxu0
        %1959 = vmatprep.mubr.bf16.mxu0 %v1696
        %1960 = vmatmul.mubr.bf16.gmra.mrb[0].mxu0 %v1695
        %v1961 = vpop.f32.mrb[0].mxu0
        %v1962 = vadd.f32 0.0, %v1961
        %v1963 = vpop.f32.mrb[0].mxu0
        %v1964 = vpop.f32.mrb[0].mxu0
        %v1965 = vadd.f32 0.0, %v1964
        %v1966 = vpop.f32.mrb[0].mxu0
        %1967 = vmatprep.mubr.bf16.mxu0 %v1698
        %1968 = vmatmul.mubr.bf16.gmra.mrb[0].mxu0 %v1697
        %v1969 = vpop.f32.mrb[0].mxu0
        %v1970 = vadd.f32 0.0, %v1969
        %v1971 = vpop.f32.mrb[0].mxu0
        %v1972 = vpop.f32.mrb[0].mxu0
        %v1973 = vadd.f32 0.0, %v1972
        %v1974 = vpop.f32.mrb[0].mxu0
        %1975 = vmatprep.mubr.bf16.mxu0 %v1700
        %1976 = vmatmul.mubr.bf16.gmra.mrb[0].mxu0 %v1699
        %v1977 = vpop.f32.mrb[0].mxu0
        %v1978 = vadd.f32 0.0, %v1977
        %v1979 = vpop.f32.mrb[0].mxu0
        %v1980 = vpop.f32.mrb[0].mxu0
        %v1981 = vadd.f32 0.0, %v1980
        %v1982 = vpop.f32.mrb[0].mxu0
        %1983 = vmatprep.mubr.bf16.mxu0 %v1702
        %1984 = vmatmul.mubr.bf16.gmra.mrb[0].mxu0 %v1701
        %v1985 = vpop.f32.mrb[0].mxu0
        %v1986 = vadd.f32 0.0, %v1985
        %v1987 = vpop.f32.mrb[0].mxu0
        %v1988 = vpop.f32.mrb[0].mxu0
        %v1989 = vadd.f32 0.0, %v1988
        %v1990 = vpop.f32.mrb[0].mxu0
        %1991 = vdwg.mxu0
        %v1992 = vadd.f32 %v1510, %v1866
        %v1993 = vadd.f32 %v1511, %v1869
        %v1994 = vadd.f32 %v1512, %v1874
        %v1995 = vadd.f32 %v1513, %v1877
        %v1996 = vadd.f32 %v1514, %v1882
        %v1997 = vadd.f32 %v1515, %v1885
        %v1998 = vadd.f32 %v1516, %v1890
        %v1999 = vadd.f32 %v1517, %v1893
        %v2000 = vadd.f32 %v1518, %v1898
        %v2001 = vadd.f32 %v1519, %v1901
        %v2002 = vadd.f32 %v1520, %v1906
        %v2003 = vadd.f32 %v1521, %v1909
        %v2004 = vadd.f32 %v1522, %v1914
        %v2005 = vadd.f32 %v1523, %v1917
        %v2006 = vadd.f32 %v1524, %v1922
        %v2007 = vadd.f32 %v1525, %v1925
        %v2008 = vadd.f32 %v1526, %v1930
        %v2009 = vadd.f32 %v1527, %v1933
        %v2010 = vadd.f32 %v1528, %v1938
        %v2011 = vadd.f32 %v1529, %v1941
        %v2012 = vadd.f32 %v1530, %v1946
        %v2013 = vadd.f32 %v1531, %v1949
        %v2014 = vadd.f32 %v1532, %v1954
        %v2015 = vadd.f32 %v1533, %v1957
        %v2016 = vadd.f32 %v1534, %v1962
        %v2017 = vadd.f32 %v1535, %v1965
        %v2018 = vadd.f32 %v1536, %v1970
        %v2019 = vadd.f32 %v1537, %v1973
        %v2020 = vadd.f32 %v1538, %v1978
        %v2021 = vadd.f32 %v1539, %v1981
        %v2022 = vadd.f32 %v1540, %v1986
        %v2023 = vadd.f32 %v1541, %v1989
        %2024 = vst [vmem:[#allocation2] sm:$0xff] %v1992
        %2025 = vst [vmem:[#allocation2 + $0x8] sm:$0xff] %v1993
        %2026 = vst [vmem:[#allocation2 + $0x10] sm:$0xff] %v1994
        %2027 = vst [vmem:[#allocation2 + $0x18] sm:$0xff] %v1995
        %2028 = vst [vmem:[#allocation2 + $0x20] sm:$0xff] %v1996
        %2029 = vst [vmem:[#allocation2 + $0x28] sm:$0xff] %v1997
        %2030 = vst [vmem:[#allocation2 + $0x30] sm:$0xff] %v1998
        %2031 = vst [vmem:[#allocation2 + $0x38] sm:$0xff] %v1999
        %2032 = vst [vmem:[#allocation2 + $0x40] sm:$0xff] %v2000
        %2033 = vst [vmem:[#allocation2 + $0x48] sm:$0xff] %v2001
        %2034 = vst [vmem:[#allocation2 + $0x50] sm:$0xff] %v2002
        %2035 = vst [vmem:[#allocation2 + $0x58] sm:$0xff] %v2003
        %2036 = vst [vmem:[#allocation2 + $0x60] sm:$0xff] %v2004
        %2037 = vst [vmem:[#allocation2 + $0x68] sm:$0xff] %v2005
        %2038 = vst [vmem:[#allocation2 + $0x70] sm:$0xff] %v2006
        %2039 = vst [vmem:[#allocation2 + $0x78] sm:$0xff] %v2007
        %2040 = vst [vmem:[#allocation2 + $0x80] sm:$0xff] %v2008
        %2041 = vst [vmem:[#allocation2 + $0x88] sm:$0xff] %v2009
        %2042 = vst [vmem:[#allocation2 + $0x90] sm:$0xff] %v2010
        %2043 = vst [vmem:[#allocation2 + $0x98] sm:$0xff] %v2011
        %2044 = vst [vmem:[#allocation2 + $0xa0] sm:$0xff] %v2012
        %2045 = vst [vmem:[#allocation2 + $0xa8] sm:$0xff] %v2013
        %2046 = vst [vmem:[#allocation2 + $0xb0] sm:$0xff] %v2014
        %2047 = vst [vmem:[#allocation2 + $0xb8] sm:$0xff] %v2015
        %2048 = vst [vmem:[#allocation2 + $0xc0] sm:$0xff] %v2016
        %2049 = vst [vmem:[#allocation2 + $0xc8] sm:$0xff] %v2017
        %2050 = vst [vmem:[#allocation2 + $0xd0] sm:$0xff] %v2018
        %2051 = vst [vmem:[#allocation2 + $0xd8] sm:$0xff] %v2019
        %2052 = vst [vmem:[#allocation2 + $0xe0] sm:$0xff] %v2020
        %2053 = vst [vmem:[#allocation2 + $0xe8] sm:$0xff] %v2021
        %2054 = vst [vmem:[#allocation2 + $0xf0] sm:$0xff] %v2022
        %2055 = vst [vmem:[#allocation2 + $0xf8] sm:$0xff] %v2023
        %v2056 = vld [vmem:[%s279 + $0x10] sm:$0xff]
        %v2057 = vld [vmem:[%s279 + $0x18] sm:$0xff]
        %v2058 = vld [vmem:[%s279 + $0x20] sm:$0xff]
        %v2059 = vld [vmem:[%s279 + $0x28] sm:$0xff]
        %v2060 = vld [vmem:[%s279 + $0x30] sm:$0xff]
        %v2061 = vld [vmem:[%s279 + $0x38] sm:$0xff]
        %v2062 = vld [vmem:[%s279 + $0x40] sm:$0xff]
        %v2063 = vld [vmem:[%s279 + $0x48] sm:$0xff]
        %v2064 = vld [vmem:[%s279 + $0x50] sm:$0xff]
        %v2065 = vld [vmem:[%s279 + $0x58] sm:$0xff]
        %v2066 = vld [vmem:[%s279 + $0x60] sm:$0xff]
        %v2067 = vld [vmem:[%s279 + $0x68] sm:$0xff]
        %v2068 = vld [vmem:[%s279 + $0x70] sm:$0xff]
        %v2069 = vld [vmem:[%s279 + $0x78] sm:$0xff]
        %v2070 = vld [vmem:[%s279 + $0x80] sm:$0xff]
        %v2071 = vld [vmem:[%s279 + $0x88] sm:$0xff]
        %v2072 = vld [vmem:[%s279 + $0x90] sm:$0xff]
        %v2073 = vld [vmem:[%s279 + $0x98] sm:$0xff]
        %v2074 = vld [vmem:[%s279 + $0xa0] sm:$0xff]
        %v2075 = vld [vmem:[%s279 + $0xa8] sm:$0xff]
        %v2076 = vld [vmem:[%s279 + $0xb0] sm:$0xff]
        %v2077 = vld [vmem:[%s279 + $0xb8] sm:$0xff]
        %v2078 = vld [vmem:[%s279 + $0xc0] sm:$0xff]
        %v2079 = vld [vmem:[%s279 + $0xc8] sm:$0xff]
        %v2080 = vld [vmem:[%s279 + $0xd0] sm:$0xff]
        %v2081 = vld [vmem:[%s279 + $0xd8] sm:$0xff]
        %v2082 = vld [vmem:[%s279 + $0xe0] sm:$0xff]
        %v2083 = vld [vmem:[%s279 + $0xe8] sm:$0xff]
        %v2084 = vld [vmem:[%s279 + $0xf0] sm:$0xff]
        %v2085 = vld [vmem:[%s279 + $0xf8] sm:$0xff]
        %v2086 = vld [vmem:[%s279 + $0x100] sm:$0xff]
        %v2087 = vld [vmem:[%s279 + $0x108] sm:$0xff]
        %v2088 = vld [vmem:[#allocation2] sm:$0xff]
        %v2089 = vld [vmem:[#allocation2 + $0x8] sm:$0xff]
        %v2090 = vld [vmem:[#allocation2 + $0x10] sm:$0xff]
        %v2091 = vld [vmem:[#allocation2 + $0x18] sm:$0xff]
        %v2092 = vld [vmem:[#allocation2 + $0x20] sm:$0xff]
        %v2093 = vld [vmem:[#allocation2 + $0x28] sm:$0xff]
        %v2094 = vld [vmem:[#allocation2 + $0x30] sm:$0xff]
        %v2095 = vld [vmem:[#allocation2 + $0x38] sm:$0xff]
        %v2096 = vld [vmem:[#allocation2 + $0x40] sm:$0xff]
        %v2097 = vld [vmem:[#allocation2 + $0x48] sm:$0xff]
        %v2098 = vld [vmem:[#allocation2 + $0x50] sm:$0xff]
        %v2099 = vld [vmem:[#allocation2 + $0x58] sm:$0xff]
        %v2100 = vld [vmem:[#allocation2 + $0x60] sm:$0xff]
        %v2101 = vld [vmem:[#allocation2 + $0x68] sm:$0xff]
        %v2102 = vld [vmem:[#allocation2 + $0x70] sm:$0xff]
        %v2103 = vld [vmem:[#allocation2 + $0x78] sm:$0xff]
        %v2104 = vld [vmem:[#allocation2 + $0x80] sm:$0xff]
        %v2105 = vld [vmem:[#allocation2 + $0x88] sm:$0xff]
        %v2106 = vld [vmem:[#allocation2 + $0x90] sm:$0xff]
        %v2107 = vld [vmem:[#allocation2 + $0x98] sm:$0xff]
        %v2108 = vld [vmem:[#allocation2 + $0xa0] sm:$0xff]
        %v2109 = vld [vmem:[#allocation2 + $0xa8] sm:$0xff]
        %v2110 = vld [vmem:[#allocation2 + $0xb0] sm:$0xff]
        %v2111 = vld [vmem:[#allocation2 + $0xb8] sm:$0xff]
        %v2112 = vld [vmem:[#allocation2 + $0xc0] sm:$0xff]
        %v2113 = vld [vmem:[#allocation2 + $0xc8] sm:$0xff]
        %v2114 = vld [vmem:[#allocation2 + $0xd0] sm:$0xff]
        %v2115 = vld [vmem:[#allocation2 + $0xd8] sm:$0xff]
        %v2116 = vld [vmem:[#allocation2 + $0xe0] sm:$0xff]
        %v2117 = vld [vmem:[#allocation2 + $0xe8] sm:$0xff]
        %v2118 = vld [vmem:[#allocation2 + $0xf0] sm:$0xff]
        %v2119 = vld [vmem:[#allocation2 + $0xf8] sm:$0xff]
        %s2120 = scalar_lea.vmem %s3, 384
        %v2121 = vld [vmem:[%s2120] sm:$0xf]
        %v2122 = vld [vmem:[%s2120 + $0x4] sm:$0xf]
        %v2123 = vld [vmem:[%s2120 + $0x8] sm:$0xf]
        %v2124 = vld [vmem:[%s2120 + $0xc] sm:$0xf]
        %v2125 = vld [vmem:[%s2120 + $0x10] sm:$0xf]
        %v2126 = vld [vmem:[%s2120 + $0x14] sm:$0xf]
        %v2127 = vld [vmem:[%s2120 + $0x18] sm:$0xf]
        %v2128 = vld [vmem:[%s2120 + $0x1c] sm:$0xf]
        %v2129 = vld [vmem:[%s2120 + $0x20] sm:$0xf]
        %v2130 = vld [vmem:[%s2120 + $0x24] sm:$0xf]
        %v2131 = vld [vmem:[%s2120 + $0x28] sm:$0xf]
        %v2132 = vld [vmem:[%s2120 + $0x2c] sm:$0xf]
        %v2133 = vld [vmem:[%s2120 + $0x30] sm:$0xf]
        %v2134 = vld [vmem:[%s2120 + $0x34] sm:$0xf]
        %v2135 = vld [vmem:[%s2120 + $0x38] sm:$0xf]
        %v2136 = vld [vmem:[%s2120 + $0x3c] sm:$0xf]
        %v2137 = vld [vmem:[%s2120 + $0x40] sm:$0xf]
        %v2138 = vld [vmem:[%s2120 + $0x44] sm:$0xf]
        %v2139 = vld [vmem:[%s2120 + $0x48] sm:$0xf]
        %v2140 = vld [vmem:[%s2120 + $0x4c] sm:$0xf]
        %v2141 = vld [vmem:[%s2120 + $0x50] sm:$0xf]
        %v2142 = vld [vmem:[%s2120 + $0x54] sm:$0xf]
        %v2143 = vld [vmem:[%s2120 + $0x58] sm:$0xf]
        %v2144 = vld [vmem:[%s2120 + $0x5c] sm:$0xf]
        %v2145 = vld [vmem:[%s2120 + $0x60] sm:$0xf]
        %v2146 = vld [vmem:[%s2120 + $0x64] sm:$0xf]
        %v2147 = vld [vmem:[%s2120 + $0x68] sm:$0xf]
        %v2148 = vld [vmem:[%s2120 + $0x6c] sm:$0xf]
        %v2149 = vld [vmem:[%s2120 + $0x70] sm:$0xf]
        %v2150 = vld [vmem:[%s2120 + $0x74] sm:$0xf]
        %v2151 = vld [vmem:[%s2120 + $0x78] sm:$0xf]
        %v2152 = vld [vmem:[%s2120 + $0x7c] sm:$0xf]
        %v2185 = vunpack.c.l.b16 %v2056
        %v2186 = vunpack.c.h.b16 %v2056
        %v2187 = vunpack.c.l.b16 %v2057
        %v2188 = vunpack.c.h.b16 %v2057
        %v2189 = vunpack.c.l.b16 %v2058
        %v2190 = vunpack.c.h.b16 %v2058
        %v2191 = vunpack.c.l.b16 %v2059
        %v2192 = vunpack.c.h.b16 %v2059
        %v2193 = vunpack.c.l.b16 %v2060
        %v2194 = vunpack.c.h.b16 %v2060
        %v2195 = vunpack.c.l.b16 %v2061
        %v2196 = vunpack.c.h.b16 %v2061
        %v2197 = vunpack.c.l.b16 %v2062
        %v2198 = vunpack.c.h.b16 %v2062
        %v2199 = vunpack.c.l.b16 %v2063
        %v2200 = vunpack.c.h.b16 %v2063
        %v2201 = vunpack.c.l.b16 %v2064
        %v2202 = vunpack.c.h.b16 %v2064
        %v2203 = vunpack.c.l.b16 %v2065
        %v2204 = vunpack.c.h.b16 %v2065
        %v2205 = vunpack.c.l.b16 %v2066
        %v2206 = vunpack.c.h.b16 %v2066
        %v2207 = vunpack.c.l.b16 %v2067
        %v2208 = vunpack.c.h.b16 %v2067
        %v2209 = vunpack.c.l.b16 %v2068
        %v2210 = vunpack.c.h.b16 %v2068
        %v2211 = vunpack.c.l.b16 %v2069
        %v2212 = vunpack.c.h.b16 %v2069
        %v2213 = vunpack.c.l.b16 %v2070
        %v2214 = vunpack.c.h.b16 %v2070
        %v2215 = vunpack.c.l.b16 %v2071
        %v2216 = vunpack.c.h.b16 %v2071
        %v2217 = vunpack.c.l.b16 %v2072
        %v2218 = vunpack.c.h.b16 %v2072
        %v2219 = vunpack.c.l.b16 %v2073
        %v2220 = vunpack.c.h.b16 %v2073
        %v2221 = vunpack.c.l.b16 %v2074
        %v2222 = vunpack.c.h.b16 %v2074
        %v2223 = vunpack.c.l.b16 %v2075
        %v2224 = vunpack.c.h.b16 %v2075
        %v2225 = vunpack.c.l.b16 %v2076
        %v2226 = vunpack.c.h.b16 %v2076
        %v2227 = vunpack.c.l.b16 %v2077
        %v2228 = vunpack.c.h.b16 %v2077
        %v2229 = vunpack.c.l.b16 %v2078
        %v2230 = vunpack.c.h.b16 %v2078
        %v2231 = vunpack.c.l.b16 %v2079
        %v2232 = vunpack.c.h.b16 %v2079
        %v2233 = vunpack.c.l.b16 %v2080
        %v2234 = vunpack.c.h.b16 %v2080
        %v2235 = vunpack.c.l.b16 %v2081
        %v2236 = vunpack.c.h.b16 %v2081
        %v2237 = vunpack.c.l.b16 %v2082
        %v2238 = vunpack.c.h.b16 %v2082
        %v2239 = vunpack.c.l.b16 %v2083
        %v2240 = vunpack.c.h.b16 %v2083
        %v2241 = vunpack.c.l.b16 %v2084
        %v2242 = vunpack.c.h.b16 %v2084
        %v2243 = vunpack.c.l.b16 %v2085
        %v2244 = vunpack.c.h.b16 %v2085
        %v2245 = vunpack.c.l.b16 %v2086
        %v2246 = vunpack.c.h.b16 %v2086
        %v2247 = vunpack.c.l.b16 %v2087
        %v2248 = vunpack.c.h.b16 %v2087
        %v2249 = vpack.c.b16 %v2187, %v2185
        %v2250 = vpack.c.b16 %v2188, %v2186
        %v2251 = vpack.c.b16 %v2191, %v2189
        %v2252 = vpack.c.b16 %v2192, %v2190
        %v2253 = vpack.c.b16 %v2195, %v2193
        %v2254 = vpack.c.b16 %v2196, %v2194
        %v2255 = vpack.c.b16 %v2199, %v2197
        %v2256 = vpack.c.b16 %v2200, %v2198
        %v2257 = vpack.c.b16 %v2203, %v2201
        %v2258 = vpack.c.b16 %v2204, %v2202
        %v2259 = vpack.c.b16 %v2207, %v2205
        %v2260 = vpack.c.b16 %v2208, %v2206
        %v2261 = vpack.c.b16 %v2211, %v2209
        %v2262 = vpack.c.b16 %v2212, %v2210
        %v2263 = vpack.c.b16 %v2215, %v2213
        %v2264 = vpack.c.b16 %v2216, %v2214
        %v2265 = vpack.c.b16 %v2219, %v2217
        %v2266 = vpack.c.b16 %v2220, %v2218
        %v2267 = vpack.c.b16 %v2223, %v2221
        %v2268 = vpack.c.b16 %v2224, %v2222
        %v2269 = vpack.c.b16 %v2227, %v2225
        %v2270 = vpack.c.b16 %v2228, %v2226
        %v2271 = vpack.c.b16 %v2231, %v2229
        %v2272 = vpack.c.b16 %v2232, %v2230
        %v2273 = vpack.c.b16 %v2235, %v2233
        %v2274 = vpack.c.b16 %v2236, %v2234
        %v2275 = vpack.c.b16 %v2239, %v2237
        %v2276 = vpack.c.b16 %v2240, %v2238
        %v2277 = vpack.c.b16 %v2243, %v2241
        %v2278 = vpack.c.b16 %v2244, %v2242
        %v2279 = vpack.c.b16 %v2247, %v2245
        %v2280 = vpack.c.b16 %v2248, %v2246
        %v2345 = vunpack.c.l.b16 %v2121
        %v2346 = vunpack.c.l.b16 %v2122
        %v2347 = vunpack.c.l.b16 %v2123
        %v2348 = vunpack.c.l.b16 %v2124
        %v2349 = vunpack.c.l.b16 %v2125
        %v2350 = vunpack.c.l.b16 %v2126
        %v2351 = vunpack.c.l.b16 %v2127
        %v2352 = vunpack.c.l.b16 %v2128
        %v2353 = vunpack.c.l.b16 %v2129
        %v2354 = vunpack.c.l.b16 %v2130
        %v2355 = vunpack.c.l.b16 %v2131
        %v2356 = vunpack.c.l.b16 %v2132
        %v2357 = vunpack.c.l.b16 %v2133
        %v2358 = vunpack.c.l.b16 %v2134
        %v2359 = vunpack.c.l.b16 %v2135
        %v2360 = vunpack.c.l.b16 %v2136
        %v2361 = vunpack.c.l.b16 %v2137
        %v2362 = vunpack.c.l.b16 %v2138
        %v2363 = vunpack.c.l.b16 %v2139
        %v2364 = vunpack.c.l.b16 %v2140
        %v2365 = vunpack.c.l.b16 %v2141
        %v2366 = vunpack.c.l.b16 %v2142
        %v2367 = vunpack.c.l.b16 %v2143
        %v2368 = vunpack.c.l.b16 %v2144
        %v2369 = vunpack.c.l.b16 %v2145
        %v2370 = vunpack.c.l.b16 %v2146
        %v2371 = vunpack.c.l.b16 %v2147
        %v2372 = vunpack.c.l.b16 %v2148
        %v2373 = vunpack.c.l.b16 %v2149
        %v2374 = vunpack.c.l.b16 %v2150
        %v2375 = vunpack.c.l.b16 %v2151
        %v2376 = vunpack.c.l.b16 %v2152
        %v2377 = vpack.c.b16 %v2346, %v2345
        %v2378 = vpack.c.b16 %v2348, %v2347
        %v2379 = vpack.c.b16 %v2350, %v2349
        %v2380 = vpack.c.b16 %v2352, %v2351
        %v2381 = vpack.c.b16 %v2354, %v2353
        %v2382 = vpack.c.b16 %v2356, %v2355
        %v2383 = vpack.c.b16 %v2358, %v2357
        %v2384 = vpack.c.b16 %v2360, %v2359
        %v2385 = vpack.c.b16 %v2362, %v2361
        %v2386 = vpack.c.b16 %v2364, %v2363
        %v2387 = vpack.c.b16 %v2366, %v2365
        %v2388 = vpack.c.b16 %v2368, %v2367
        %v2389 = vpack.c.b16 %v2370, %v2369
        %v2390 = vpack.c.b16 %v2372, %v2371
        %v2391 = vpack.c.b16 %v2374, %v2373
        %v2392 = vpack.c.b16 %v2376, %v2375
        %2409 = vmatprep.subr.bf16.mxu0 0
        %2410 = vmatpush1.bf16.msra.mxu0 %v2377
        %2411 = vmatprep.subr.bf16.mxu0 0
        %2412 = vmatpush1.bf16.msra.mxu0 %v2378
        %2413 = vmatprep.subr.bf16.mxu0 0
        %2414 = vmatpush1.bf16.msra.mxu0 %v2379
        %2415 = vmatprep.subr.bf16.mxu0 0
        %2416 = vmatpush1.bf16.msra.mxu0 %v2380
        %2417 = vmatprep.subr.bf16.mxu0 0
        %2418 = vmatpush1.bf16.msra.mxu0 %v2381
        %2419 = vmatprep.subr.bf16.mxu0 0
        %2420 = vmatpush1.bf16.msra.mxu0 %v2382
        %2421 = vmatprep.subr.bf16.mxu0 0
        %2422 = vmatpush1.bf16.msra.mxu0 %v2383
        %2423 = vmatprep.subr.bf16.mxu0 0
        %2424 = vmatpush1.bf16.msra.mxu0 %v2384
        %2425 = vmatprep.subr.bf16.mxu0 0
        %2426 = vmatpush1.bf16.msra.mxu0 %v2385
        %2427 = vmatprep.subr.bf16.mxu0 0
        %2428 = vmatpush1.bf16.msra.mxu0 %v2386
        %2429 = vmatprep.subr.bf16.mxu0 0
        %2430 = vmatpush1.bf16.msra.mxu0 %v2387
        %2431 = vmatprep.subr.bf16.mxu0 0
        %2432 = vmatpush1.bf16.msra.mxu0 %v2388
        %2433 = vmatprep.subr.bf16.mxu0 0
        %2434 = vmatpush1.bf16.msra.mxu0 %v2389
        %2435 = vmatprep.subr.bf16.mxu0 0
        %2436 = vmatpush1.bf16.msra.mxu0 %v2390
        %2437 = vmatprep.subr.bf16.mxu0 0
        %2438 = vmatpush1.bf16.msra.mxu0 %v2391
        %2439 = vmatprep.subr.bf16.mxu0 0
        %2440 = vmatpush1.bf16.msra.mxu0 %v2392
        %2441 = vmatprep.mubr.bf16.mxu0 %v2250
        %2442 = vmatmul.mubr.bf16.gmra.mrb[0].mxu0 %v2249
        %v2443 = vpop.f32.mrb[0].mxu0
        %v2444 = vadd.f32 0.0, %v2443
        %v2445 = vpop.f32.mrb[0].mxu0
        %v2446 = vpop.f32.mrb[0].mxu0
        %v2447 = vadd.f32 0.0, %v2446
        %v2448 = vpop.f32.mrb[0].mxu0
        %2449 = vmatprep.mubr.bf16.mxu0 %v2252
        %2450 = vmatmul.mubr.bf16.gmra.mrb[0].mxu0 %v2251
        %v2451 = vpop.f32.mrb[0].mxu0
        %v2452 = vadd.f32 0.0, %v2451
        %v2453 = vpop.f32.mrb[0].mxu0
        %v2454 = vpop.f32.mrb[0].mxu0
        %v2455 = vadd.f32 0.0, %v2454
        %v2456 = vpop.f32.mrb[0].mxu0
        %2457 = vmatprep.mubr.bf16.mxu0 %v2254
        %2458 = vmatmul.mubr.bf16.gmra.mrb[0].mxu0 %v2253
        %v2459 = vpop.f32.mrb[0].mxu0
        %v2460 = vadd.f32 0.0, %v2459
        %v2461 = vpop.f32.mrb[0].mxu0
        %v2462 = vpop.f32.mrb[0].mxu0
        %v2463 = vadd.f32 0.0, %v2462
        %v2464 = vpop.f32.mrb[0].mxu0
        %2465 = vmatprep.mubr.bf16.mxu0 %v2256
        %2466 = vmatmul.mubr.bf16.gmra.mrb[0].mxu0 %v2255
        %v2467 = vpop.f32.mrb[0].mxu0
        %v2468 = vadd.f32 0.0, %v2467
        %v2469 = vpop.f32.mrb[0].mxu0
        %v2470 = vpop.f32.mrb[0].mxu0
        %v2471 = vadd.f32 0.0, %v2470
        %v2472 = vpop.f32.mrb[0].mxu0
        %2473 = vmatprep.mubr.bf16.mxu0 %v2258
        %2474 = vmatmul.mubr.bf16.gmra.mrb[0].mxu0 %v2257
        %v2475 = vpop.f32.mrb[0].mxu0
        %v2476 = vadd.f32 0.0, %v2475
        %v2477 = vpop.f32.mrb[0].mxu0
        %v2478 = vpop.f32.mrb[0].mxu0
        %v2479 = vadd.f32 0.0, %v2478
        %v2480 = vpop.f32.mrb[0].mxu0
        %2481 = vmatprep.mubr.bf16.mxu0 %v2260
        %2482 = vmatmul.mubr.bf16.gmra.mrb[0].mxu0 %v2259
        %v2483 = vpop.f32.mrb[0].mxu0
        %v2484 = vadd.f32 0.0, %v2483
        %v2485 = vpop.f32.mrb[0].mxu0
        %v2486 = vpop.f32.mrb[0].mxu0
        %v2487 = vadd.f32 0.0, %v2486
        %v2488 = vpop.f32.mrb[0].mxu0
        %2489 = vmatprep.mubr.bf16.mxu0 %v2262
        %2490 = vmatmul.mubr.bf16.gmra.mrb[0].mxu0 %v2261
        %v2491 = vpop.f32.mrb[0].mxu0
        %v2492 = vadd.f32 0.0, %v2491
        %v2493 = vpop.f32.mrb[0].mxu0
        %v2494 = vpop.f32.mrb[0].mxu0
        %v2495 = vadd.f32 0.0, %v2494
        %v2496 = vpop.f32.mrb[0].mxu0
        %2497 = vmatprep.mubr.bf16.mxu0 %v2264
        %2498 = vmatmul.mubr.bf16.gmra.mrb[0].mxu0 %v2263
        %v2499 = vpop.f32.mrb[0].mxu0
        %v2500 = vadd.f32 0.0, %v2499
        %v2501 = vpop.f32.mrb[0].mxu0
        %v2502 = vpop.f32.mrb[0].mxu0
        %v2503 = vadd.f32 0.0, %v2502
        %v2504 = vpop.f32.mrb[0].mxu0
        %2505 = vmatprep.mubr.bf16.mxu0 %v2266
        %2506 = vmatmul.mubr.bf16.gmra.mrb[0].mxu0 %v2265
        %v2507 = vpop.f32.mrb[0].mxu0
        %v2508 = vadd.f32 0.0, %v2507
        %v2509 = vpop.f32.mrb[0].mxu0
        %v2510 = vpop.f32.mrb[0].mxu0
        %v2511 = vadd.f32 0.0, %v2510
        %v2512 = vpop.f32.mrb[0].mxu0
        %2513 = vmatprep.mubr.bf16.mxu0 %v2268
        %2514 = vmatmul.mubr.bf16.gmra.mrb[0].mxu0 %v2267
        %v2515 = vpop.f32.mrb[0].mxu0
        %v2516 = vadd.f32 0.0, %v2515
        %v2517 = vpop.f32.mrb[0].mxu0
        %v2518 = vpop.f32.mrb[0].mxu0
        %v2519 = vadd.f32 0.0, %v2518
        %v2520 = vpop.f32.mrb[0].mxu0
        %2521 = vmatprep.mubr.bf16.mxu0 %v2270
        %2522 = vmatmul.mubr.bf16.gmra.mrb[0].mxu0 %v2269
        %v2523 = vpop.f32.mrb[0].mxu0
        %v2524 = vadd.f32 0.0, %v2523
        %v2525 = vpop.f32.mrb[0].mxu0
        %v2526 = vpop.f32.mrb[0].mxu0
        %v2527 = vadd.f32 0.0, %v2526
        %v2528 = vpop.f32.mrb[0].mxu0
        %2529 = vmatprep.mubr.bf16.mxu0 %v2272
        %2530 = vmatmul.mubr.bf16.gmra.mrb[0].mxu0 %v2271
        %v2531 = vpop.f32.mrb[0].mxu0
        %v2532 = vadd.f32 0.0, %v2531
        %v2533 = vpop.f32.mrb[0].mxu0
        %v2534 = vpop.f32.mrb[0].mxu0
        %v2535 = vadd.f32 0.0, %v2534
        %v2536 = vpop.f32.mrb[0].mxu0
        %2537 = vmatprep.mubr.bf16.mxu0 %v2274
        %2538 = vmatmul.mubr.bf16.gmra.mrb[0].mxu0 %v2273
        %v2539 = vpop.f32.mrb[0].mxu0
        %v2540 = vadd.f32 0.0, %v2539
        %v2541 = vpop.f32.mrb[0].mxu0
        %v2542 = vpop.f32.mrb[0].mxu0
        %v2543 = vadd.f32 0.0, %v2542
        %v2544 = vpop.f32.mrb[0].mxu0
        %2545 = vmatprep.mubr.bf16.mxu0 %v2276
        %2546 = vmatmul.mubr.bf16.gmra.mrb[0].mxu0 %v2275
        %v2547 = vpop.f32.mrb[0].mxu0
        %v2548 = vadd.f32 0.0, %v2547
        %v2549 = vpop.f32.mrb[0].mxu0
        %v2550 = vpop.f32.mrb[0].mxu0
        %v2551 = vadd.f32 0.0, %v2550
        %v2552 = vpop.f32.mrb[0].mxu0
        %2553 = vmatprep.mubr.bf16.mxu0 %v2278
        %2554 = vmatmul.mubr.bf16.gmra.mrb[0].mxu0 %v2277
        %v2555 = vpop.f32.mrb[0].mxu0
        %v2556 = vadd.f32 0.0, %v2555
        %v2557 = vpop.f32.mrb[0].mxu0
        %v2558 = vpop.f32.mrb[0].mxu0
        %v2559 = vadd.f32 0.0, %v2558
        %v2560 = vpop.f32.mrb[0].mxu0
        %2561 = vmatprep.mubr.bf16.mxu0 %v2280
        %2562 = vmatmul.mubr.bf16.gmra.mrb[0].mxu0 %v2279
        %v2563 = vpop.f32.mrb[0].mxu0
        %v2564 = vadd.f32 0.0, %v2563
        %v2565 = vpop.f32.mrb[0].mxu0
        %v2566 = vpop.f32.mrb[0].mxu0
        %v2567 = vadd.f32 0.0, %v2566
        %v2568 = vpop.f32.mrb[0].mxu0
        %2569 = vdwg.mxu0
        %v2570 = vadd.f32 %v2088, %v2444
        %v2571 = vadd.f32 %v2089, %v2447
        %v2572 = vadd.f32 %v2090, %v2452
        %v2573 = vadd.f32 %v2091, %v2455
        %v2574 = vadd.f32 %v2092, %v2460
        %v2575 = vadd.f32 %v2093, %v2463
        %v2576 = vadd.f32 %v2094, %v2468
        %v2577 = vadd.f32 %v2095, %v2471
        %v2578 = vadd.f32 %v2096, %v2476
        %v2579 = vadd.f32 %v2097, %v2479
        %v2580 = vadd.f32 %v2098, %v2484
        %v2581 = vadd.f32 %v2099, %v2487
        %v2582 = vadd.f32 %v2100, %v2492
        %v2583 = vadd.f32 %v2101, %v2495
        %v2584 = vadd.f32 %v2102, %v2500
        %v2585 = vadd.f32 %v2103, %v2503
        %v2586 = vadd.f32 %v2104, %v2508
        %v2587 = vadd.f32 %v2105, %v2511
        %v2588 = vadd.f32 %v2106, %v2516
        %v2589 = vadd.f32 %v2107, %v2519
        %v2590 = vadd.f32 %v2108, %v2524
        %v2591 = vadd.f32 %v2109, %v2527
        %v2592 = vadd.f32 %v2110, %v2532
        %v2593 = vadd.f32 %v2111, %v2535
        %v2594 = vadd.f32 %v2112, %v2540
        %v2595 = vadd.f32 %v2113, %v2543
        %v2596 = vadd.f32 %v2114, %v2548
        %v2597 = vadd.f32 %v2115, %v2551
        %v2598 = vadd.f32 %v2116, %v2556
        %v2599 = vadd.f32 %v2117, %v2559
        %v2600 = vadd.f32 %v2118, %v2564
        %v2601 = vadd.f32 %v2119, %v2567
        %2602 = vst [vmem:[#allocation2] sm:$0xff] %v2570
        %2603 = vst [vmem:[#allocation2 + $0x8] sm:$0xff] %v2571
        %2604 = vst [vmem:[#allocation2 + $0x10] sm:$0xff] %v2572
        %2605 = vst [vmem:[#allocation2 + $0x18] sm:$0xff] %v2573
        %2606 = vst [vmem:[#allocation2 + $0x20] sm:$0xff] %v2574
        %2607 = vst [vmem:[#allocation2 + $0x28] sm:$0xff] %v2575
        %2608 = vst [vmem:[#allocation2 + $0x30] sm:$0xff] %v2576
        %2609 = vst [vmem:[#allocation2 + $0x38] sm:$0xff] %v2577
        %2610 = vst [vmem:[#allocation2 + $0x40] sm:$0xff] %v2578
        %2611 = vst [vmem:[#allocation2 + $0x48] sm:$0xff] %v2579
        %2612 = vst [vmem:[#allocation2 + $0x50] sm:$0xff] %v2580
        %2613 = vst [vmem:[#allocation2 + $0x58] sm:$0xff] %v2581
        %2614 = vst [vmem:[#allocation2 + $0x60] sm:$0xff] %v2582
        %2615 = vst [vmem:[#allocation2 + $0x68] sm:$0xff] %v2583
        %2616 = vst [vmem:[#allocation2 + $0x70] sm:$0xff] %v2584
        %2617 = vst [vmem:[#allocation2 + $0x78] sm:$0xff] %v2585
        %2618 = vst [vmem:[#allocation2 + $0x80] sm:$0xff] %v2586
        %2619 = vst [vmem:[#allocation2 + $0x88] sm:$0xff] %v2587
        %2620 = vst [vmem:[#allocation2 + $0x90] sm:$0xff] %v2588
        %2621 = vst [vmem:[#allocation2 + $0x98] sm:$0xff] %v2589
        %2622 = vst [vmem:[#allocation2 + $0xa0] sm:$0xff] %v2590
        %2623 = vst [vmem:[#allocation2 + $0xa8] sm:$0xff] %v2591
        %2624 = vst [vmem:[#allocation2 + $0xb0] sm:$0xff] %v2592
        %2625 = vst [vmem:[#allocation2 + $0xb8] sm:$0xff] %v2593
        %2626 = vst [vmem:[#allocation2 + $0xc0] sm:$0xff] %v2594
        %2627 = vst [vmem:[#allocation2 + $0xc8] sm:$0xff] %v2595
        %2628 = vst [vmem:[#allocation2 + $0xd0] sm:$0xff] %v2596
        %2629 = vst [vmem:[#allocation2 + $0xd8] sm:$0xff] %v2597
        %2630 = vst [vmem:[#allocation2 + $0xe0] sm:$0xff] %v2598
        %2631 = vst [vmem:[#allocation2 + $0xe8] sm:$0xff] %v2599
        %2632 = vst [vmem:[#allocation2 + $0xf0] sm:$0xff] %v2600
        %2633 = vst [vmem:[#allocation2 + $0xf8] sm:$0xff] %v2601
        %v2634 = vld [vmem:[%s284 + $0x10] sm:$0xff]
        %v2635 = vld [vmem:[%s284 + $0x18] sm:$0xff]
        %v2636 = vld [vmem:[%s284 + $0x20] sm:$0xff]
        %v2637 = vld [vmem:[%s284 + $0x28] sm:$0xff]
        %v2638 = vld [vmem:[%s284 + $0x30] sm:$0xff]
        %v2639 = vld [vmem:[%s284 + $0x38] sm:$0xff]
        %v2640 = vld [vmem:[%s284 + $0x40] sm:$0xff]
        %v2641 = vld [vmem:[%s284 + $0x48] sm:$0xff]
        %v2642 = vld [vmem:[%s284 + $0x50] sm:$0xff]
        %v2643 = vld [vmem:[%s284 + $0x58] sm:$0xff]
        %v2644 = vld [vmem:[%s284 + $0x60] sm:$0xff]
        %v2645 = vld [vmem:[%s284 + $0x68] sm:$0xff]
        %v2646 = vld [vmem:[%s284 + $0x70] sm:$0xff]
        %v2647 = vld [vmem:[%s284 + $0x78] sm:$0xff]
        %v2648 = vld [vmem:[%s284 + $0x80] sm:$0xff]
        %v2649 = vld [vmem:[%s284 + $0x88] sm:$0xff]
        %v2650 = vld [vmem:[%s284 + $0x90] sm:$0xff]
        %v2651 = vld [vmem:[%s284 + $0x98] sm:$0xff]
        %v2652 = vld [vmem:[%s284 + $0xa0] sm:$0xff]
        %v2653 = vld [vmem:[%s284 + $0xa8] sm:$0xff]
        %v2654 = vld [vmem:[%s284 + $0xb0] sm:$0xff]
        %v2655 = vld [vmem:[%s284 + $0xb8] sm:$0xff]
        %v2656 = vld [vmem:[%s284 + $0xc0] sm:$0xff]
        %v2657 = vld [vmem:[%s284 + $0xc8] sm:$0xff]
        %v2658 = vld [vmem:[%s284 + $0xd0] sm:$0xff]
        %v2659 = vld [vmem:[%s284 + $0xd8] sm:$0xff]
        %v2660 = vld [vmem:[%s284 + $0xe0] sm:$0xff]
        %v2661 = vld [vmem:[%s284 + $0xe8] sm:$0xff]
        %v2662 = vld [vmem:[%s284 + $0xf0] sm:$0xff]
        %v2663 = vld [vmem:[%s284 + $0xf8] sm:$0xff]
        %v2664 = vld [vmem:[%s284 + $0x100] sm:$0xff]
        %v2665 = vld [vmem:[%s284 + $0x108] sm:$0xff]
        %v2666 = vld [vmem:[#allocation2] sm:$0xff]
        %v2667 = vld [vmem:[#allocation2 + $0x8] sm:$0xff]
        %v2668 = vld [vmem:[#allocation2 + $0x10] sm:$0xff]
        %v2669 = vld [vmem:[#allocation2 + $0x18] sm:$0xff]
        %v2670 = vld [vmem:[#allocation2 + $0x20] sm:$0xff]
        %v2671 = vld [vmem:[#allocation2 + $0x28] sm:$0xff]
        %v2672 = vld [vmem:[#allocation2 + $0x30] sm:$0xff]
        %v2673 = vld [vmem:[#allocation2 + $0x38] sm:$0xff]
        %v2674 = vld [vmem:[#allocation2 + $0x40] sm:$0xff]
        %v2675 = vld [vmem:[#allocation2 + $0x48] sm:$0xff]
        %v2676 = vld [vmem:[#allocation2 + $0x50] sm:$0xff]
        %v2677 = vld [vmem:[#allocation2 + $0x58] sm:$0xff]
        %v2678 = vld [vmem:[#allocation2 + $0x60] sm:$0xff]
        %v2679 = vld [vmem:[#allocation2 + $0x68] sm:$0xff]
        %v2680 = vld [vmem:[#allocation2 + $0x70] sm:$0xff]
        %v2681 = vld [vmem:[#allocation2 + $0x78] sm:$0xff]
        %v2682 = vld [vmem:[#allocation2 + $0x80] sm:$0xff]
        %v2683 = vld [vmem:[#allocation2 + $0x88] sm:$0xff]
        %v2684 = vld [vmem:[#allocation2 + $0x90] sm:$0xff]
        %v2685 = vld [vmem:[#allocation2 + $0x98] sm:$0xff]
        %v2686 = vld [vmem:[#allocation2 + $0xa0] sm:$0xff]
        %v2687 = vld [vmem:[#allocation2 + $0xa8] sm:$0xff]
        %v2688 = vld [vmem:[#allocation2 + $0xb0] sm:$0xff]
        %v2689 = vld [vmem:[#allocation2 + $0xb8] sm:$0xff]
        %v2690 = vld [vmem:[#allocation2 + $0xc0] sm:$0xff]
        %v2691 = vld [vmem:[#allocation2 + $0xc8] sm:$0xff]
        %v2692 = vld [vmem:[#allocation2 + $0xd0] sm:$0xff]
        %v2693 = vld [vmem:[#allocation2 + $0xd8] sm:$0xff]
        %v2694 = vld [vmem:[#allocation2 + $0xe0] sm:$0xff]
        %v2695 = vld [vmem:[#allocation2 + $0xe8] sm:$0xff]
        %v2696 = vld [vmem:[#allocation2 + $0xf0] sm:$0xff]
        %v2697 = vld [vmem:[#allocation2 + $0xf8] sm:$0xff]
        %s2698 = scalar_lea.vmem %s3, 512
        %v2699 = vld [vmem:[%s2698] sm:$0xf]
        %v2700 = vld [vmem:[%s2698 + $0x4] sm:$0xf]
        %v2701 = vld [vmem:[%s2698 + $0x8] sm:$0xf]
        %v2702 = vld [vmem:[%s2698 + $0xc] sm:$0xf]
        %v2703 = vld [vmem:[%s2698 + $0x10] sm:$0xf]
        %v2704 = vld [vmem:[%s2698 + $0x14] sm:$0xf]
        %v2705 = vld [vmem:[%s2698 + $0x18] sm:$0xf]
        %v2706 = vld [vmem:[%s2698 + $0x1c] sm:$0xf]
        %v2707 = vld [vmem:[%s2698 + $0x20] sm:$0xf]
        %v2708 = vld [vmem:[%s2698 + $0x24] sm:$0xf]
        %v2709 = vld [vmem:[%s2698 + $0x28] sm:$0xf]
        %v2710 = vld [vmem:[%s2698 + $0x2c] sm:$0xf]
        %v2711 = vld [vmem:[%s2698 + $0x30] sm:$0xf]
        %v2712 = vld [vmem:[%s2698 + $0x34] sm:$0xf]
        %v2713 = vld [vmem:[%s2698 + $0x38] sm:$0xf]
        %v2714 = vld [vmem:[%s2698 + $0x3c] sm:$0xf]
        %v2715 = vld [vmem:[%s2698 + $0x40] sm:$0xf]
        %v2716 = vld [vmem:[%s2698 + $0x44] sm:$0xf]
        %v2717 = vld [vmem:[%s2698 + $0x48] sm:$0xf]
        %v2718 = vld [vmem:[%s2698 + $0x4c] sm:$0xf]
        %v2719 = vld [vmem:[%s2698 + $0x50] sm:$0xf]
        %v2720 = vld [vmem:[%s2698 + $0x54] sm:$0xf]
        %v2721 = vld [vmem:[%s2698 + $0x58] sm:$0xf]
        %v2722 = vld [vmem:[%s2698 + $0x5c] sm:$0xf]
        %v2723 = vld [vmem:[%s2698 + $0x60] sm:$0xf]
        %v2724 = vld [vmem:[%s2698 + $0x64] sm:$0xf]
        %v2725 = vld [vmem:[%s2698 + $0x68] sm:$0xf]
        %v2726 = vld [vmem:[%s2698 + $0x6c] sm:$0xf]
        %v2727 = vld [vmem:[%s2698 + $0x70] sm:$0xf]
        %v2728 = vld [vmem:[%s2698 + $0x74] sm:$0xf]
        %v2729 = vld [vmem:[%s2698 + $0x78] sm:$0xf]
        %v2730 = vld [vmem:[%s2698 + $0x7c] sm:$0xf]
        %v2763 = vunpack.c.l.b16 %v2634
        %v2764 = vunpack.c.h.b16 %v2634
        %v2765 = vunpack.c.l.b16 %v2635
        %v2766 = vunpack.c.h.b16 %v2635
        %v2767 = vunpack.c.l.b16 %v2636
        %v2768 = vunpack.c.h.b16 %v2636
        %v2769 = vunpack.c.l.b16 %v2637
        %v2770 = vunpack.c.h.b16 %v2637
        %v2771 = vunpack.c.l.b16 %v2638
        %v2772 = vunpack.c.h.b16 %v2638
        %v2773 = vunpack.c.l.b16 %v2639
        %v2774 = vunpack.c.h.b16 %v2639
        %v2775 = vunpack.c.l.b16 %v2640
        %v2776 = vunpack.c.h.b16 %v2640
        %v2777 = vunpack.c.l.b16 %v2641
        %v2778 = vunpack.c.h.b16 %v2641
        %v2779 = vunpack.c.l.b16 %v2642
        %v2780 = vunpack.c.h.b16 %v2642
        %v2781 = vunpack.c.l.b16 %v2643
        %v2782 = vunpack.c.h.b16 %v2643
        %v2783 = vunpack.c.l.b16 %v2644
        %v2784 = vunpack.c.h.b16 %v2644
        %v2785 = vunpack.c.l.b16 %v2645
        %v2786 = vunpack.c.h.b16 %v2645
        %v2787 = vunpack.c.l.b16 %v2646
        %v2788 = vunpack.c.h.b16 %v2646
        %v2789 = vunpack.c.l.b16 %v2647
        %v2790 = vunpack.c.h.b16 %v2647
        %v2791 = vunpack.c.l.b16 %v2648
        %v2792 = vunpack.c.h.b16 %v2648
        %v2793 = vunpack.c.l.b16 %v2649
        %v2794 = vunpack.c.h.b16 %v2649
        %v2795 = vunpack.c.l.b16 %v2650
        %v2796 = vunpack.c.h.b16 %v2650
        %v2797 = vunpack.c.l.b16 %v2651
        %v2798 = vunpack.c.h.b16 %v2651
        %v2799 = vunpack.c.l.b16 %v2652
        %v2800 = vunpack.c.h.b16 %v2652
        %v2801 = vunpack.c.l.b16 %v2653
        %v2802 = vunpack.c.h.b16 %v2653
        %v2803 = vunpack.c.l.b16 %v2654
        %v2804 = vunpack.c.h.b16 %v2654
        %v2805 = vunpack.c.l.b16 %v2655
        %v2806 = vunpack.c.h.b16 %v2655
        %v2807 = vunpack.c.l.b16 %v2656
        %v2808 = vunpack.c.h.b16 %v2656
        %v2809 = vunpack.c.l.b16 %v2657
        %v2810 = vunpack.c.h.b16 %v2657
        %v2811 = vunpack.c.l.b16 %v2658
        %v2812 = vunpack.c.h.b16 %v2658
        %v2813 = vunpack.c.l.b16 %v2659
        %v2814 = vunpack.c.h.b16 %v2659
        %v2815 = vunpack.c.l.b16 %v2660
        %v2816 = vunpack.c.h.b16 %v2660
        %v2817 = vunpack.c.l.b16 %v2661
        %v2818 = vunpack.c.h.b16 %v2661
        %v2819 = vunpack.c.l.b16 %v2662
        %v2820 = vunpack.c.h.b16 %v2662
        %v2821 = vunpack.c.l.b16 %v2663
        %v2822 = vunpack.c.h.b16 %v2663
        %v2823 = vunpack.c.l.b16 %v2664
        %v2824 = vunpack.c.h.b16 %v2664
        %v2825 = vunpack.c.l.b16 %v2665
        %v2826 = vunpack.c.h.b16 %v2665
        %v2827 = vpack.c.b16 %v2765, %v2763
        %v2828 = vpack.c.b16 %v2766, %v2764
        %v2829 = vpack.c.b16 %v2769, %v2767
        %v2830 = vpack.c.b16 %v2770, %v2768
        %v2831 = vpack.c.b16 %v2773, %v2771
        %v2832 = vpack.c.b16 %v2774, %v2772
        %v2833 = vpack.c.b16 %v2777, %v2775
        %v2834 = vpack.c.b16 %v2778, %v2776
        %v2835 = vpack.c.b16 %v2781, %v2779
        %v2836 = vpack.c.b16 %v2782, %v2780
        %v2837 = vpack.c.b16 %v2785, %v2783
        %v2838 = vpack.c.b16 %v2786, %v2784
        %v2839 = vpack.c.b16 %v2789, %v2787
        %v2840 = vpack.c.b16 %v2790, %v2788
        %v2841 = vpack.c.b16 %v2793, %v2791
        %v2842 = vpack.c.b16 %v2794, %v2792
        %v2843 = vpack.c.b16 %v2797, %v2795
        %v2844 = vpack.c.b16 %v2798, %v2796
        %v2845 = vpack.c.b16 %v2801, %v2799
        %v2846 = vpack.c.b16 %v2802, %v2800
        %v2847 = vpack.c.b16 %v2805, %v2803
        %v2848 = vpack.c.b16 %v2806, %v2804
        %v2849 = vpack.c.b16 %v2809, %v2807
        %v2850 = vpack.c.b16 %v2810, %v2808
        %v2851 = vpack.c.b16 %v2813, %v2811
        %v2852 = vpack.c.b16 %v2814, %v2812
        %v2853 = vpack.c.b16 %v2817, %v2815
        %v2854 = vpack.c.b16 %v2818, %v2816
        %v2855 = vpack.c.b16 %v2821, %v2819
        %v2856 = vpack.c.b16 %v2822, %v2820
        %v2857 = vpack.c.b16 %v2825, %v2823
        %v2858 = vpack.c.b16 %v2826, %v2824
        %v2923 = vunpack.c.l.b16 %v2699
        %v2924 = vunpack.c.l.b16 %v2700
        %v2925 = vunpack.c.l.b16 %v2701
        %v2926 = vunpack.c.l.b16 %v2702
        %v2927 = vunpack.c.l.b16 %v2703
        %v2928 = vunpack.c.l.b16 %v2704
        %v2929 = vunpack.c.l.b16 %v2705
        %v2930 = vunpack.c.l.b16 %v2706
        %v2931 = vunpack.c.l.b16 %v2707
        %v2932 = vunpack.c.l.b16 %v2708
        %v2933 = vunpack.c.l.b16 %v2709
        %v2934 = vunpack.c.l.b16 %v2710
        %v2935 = vunpack.c.l.b16 %v2711
        %v2936 = vunpack.c.l.b16 %v2712
        %v2937 = vunpack.c.l.b16 %v2713
        %v2938 = vunpack.c.l.b16 %v2714
        %v2939 = vunpack.c.l.b16 %v2715
        %v2940 = vunpack.c.l.b16 %v2716
        %v2941 = vunpack.c.l.b16 %v2717
        %v2942 = vunpack.c.l.b16 %v2718
        %v2943 = vunpack.c.l.b16 %v2719
        %v2944 = vunpack.c.l.b16 %v2720
        %v2945 = vunpack.c.l.b16 %v2721
        %v2946 = vunpack.c.l.b16 %v2722
        %v2947 = vunpack.c.l.b16 %v2723
        %v2948 = vunpack.c.l.b16 %v2724
        %v2949 = vunpack.c.l.b16 %v2725
        %v2950 = vunpack.c.l.b16 %v2726
        %v2951 = vunpack.c.l.b16 %v2727
        %v2952 = vunpack.c.l.b16 %v2728
        %v2953 = vunpack.c.l.b16 %v2729
        %v2954 = vunpack.c.l.b16 %v2730
        %v2955 = vpack.c.b16 %v2924, %v2923
        %v2956 = vpack.c.b16 %v2926, %v2925
        %v2957 = vpack.c.b16 %v2928, %v2927
        %v2958 = vpack.c.b16 %v2930, %v2929
        %v2959 = vpack.c.b16 %v2932, %v2931
        %v2960 = vpack.c.b16 %v2934, %v2933
        %v2961 = vpack.c.b16 %v2936, %v2935
        %v2962 = vpack.c.b16 %v2938, %v2937
        %v2963 = vpack.c.b16 %v2940, %v2939
        %v2964 = vpack.c.b16 %v2942, %v2941
        %v2965 = vpack.c.b16 %v2944, %v2943
        %v2966 = vpack.c.b16 %v2946, %v2945
        %v2967 = vpack.c.b16 %v2948, %v2947
        %v2968 = vpack.c.b16 %v2950, %v2949
        %v2969 = vpack.c.b16 %v2952, %v2951
        %v2970 = vpack.c.b16 %v2954, %v2953
        %2987 = vmatprep.subr.bf16.mxu0 0
        %2988 = vmatpush1.bf16.msra.mxu0 %v2955
        %2989 = vmatprep.subr.bf16.mxu0 0
        %2990 = vmatpush1.bf16.msra.mxu0 %v2956
        %2991 = vmatprep.subr.bf16.mxu0 0
        %2992 = vmatpush1.bf16.msra.mxu0 %v2957
        %2993 = vmatprep.subr.bf16.mxu0 0
        %2994 = vmatpush1.bf16.msra.mxu0 %v2958
        %2995 = vmatprep.subr.bf16.mxu0 0
        %2996 = vmatpush1.bf16.msra.mxu0 %v2959
        %2997 = vmatprep.subr.bf16.mxu0 0
        %2998 = vmatpush1.bf16.msra.mxu0 %v2960
        %2999 = vmatprep.subr.bf16.mxu0 0
        %3000 = vmatpush1.bf16.msra.mxu0 %v2961
        %3001 = vmatprep.subr.bf16.mxu0 0
        %3002 = vmatpush1.bf16.msra.mxu0 %v2962
        %3003 = vmatprep.subr.bf16.mxu0 0
        %3004 = vmatpush1.bf16.msra.mxu0 %v2963
        %3005 = vmatprep.subr.bf16.mxu0 0
        %3006 = vmatpush1.bf16.msra.mxu0 %v2964
        %3007 = vmatprep.subr.bf16.mxu0 0
        %3008 = vmatpush1.bf16.msra.mxu0 %v2965
        %3009 = vmatprep.subr.bf16.mxu0 0
        %3010 = vmatpush1.bf16.msra.mxu0 %v2966
        %3011 = vmatprep.subr.bf16.mxu0 0
        %3012 = vmatpush1.bf16.msra.mxu0 %v2967
        %3013 = vmatprep.subr.bf16.mxu0 0
        %3014 = vmatpush1.bf16.msra.mxu0 %v2968
        %3015 = vmatprep.subr.bf16.mxu0 0
        %3016 = vmatpush1.bf16.msra.mxu0 %v2969
        %3017 = vmatprep.subr.bf16.mxu0 0
        %3018 = vmatpush1.bf16.msra.mxu0 %v2970
        %3019 = vmatprep.mubr.bf16.mxu0 %v2828
        %3020 = vmatmul.mubr.bf16.gmra.mrb[0].mxu0 %v2827
        %v3021 = vpop.f32.mrb[0].mxu0
        %v3022 = vadd.f32 0.0, %v3021
        %v3023 = vpop.f32.mrb[0].mxu0
        %v3024 = vpop.f32.mrb[0].mxu0
        %v3025 = vadd.f32 0.0, %v3024
        %v3026 = vpop.f32.mrb[0].mxu0
        %3027 = vmatprep.mubr.bf16.mxu0 %v2830
        %3028 = vmatmul.mubr.bf16.gmra.mrb[0].mxu0 %v2829
        %v3029 = vpop.f32.mrb[0].mxu0
        %v3030 = vadd.f32 0.0, %v3029
        %v3031 = vpop.f32.mrb[0].mxu0
        %v3032 = vpop.f32.mrb[0].mxu0
        %v3033 = vadd.f32 0.0, %v3032
        %v3034 = vpop.f32.mrb[0].mxu0
        %3035 = vmatprep.mubr.bf16.mxu0 %v2832
        %3036 = vmatmul.mubr.bf16.gmra.mrb[0].mxu0 %v2831
        %v3037 = vpop.f32.mrb[0].mxu0
        %v3038 = vadd.f32 0.0, %v3037
        %v3039 = vpop.f32.mrb[0].mxu0
        %v3040 = vpop.f32.mrb[0].mxu0
        %v3041 = vadd.f32 0.0, %v3040
        %v3042 = vpop.f32.mrb[0].mxu0
        %3043 = vmatprep.mubr.bf16.mxu0 %v2834
        %3044 = vmatmul.mubr.bf16.gmra.mrb[0].mxu0 %v2833
        %v3045 = vpop.f32.mrb[0].mxu0
        %v3046 = vadd.f32 0.0, %v3045
        %v3047 = vpop.f32.mrb[0].mxu0
        %v3048 = vpop.f32.mrb[0].mxu0
        %v3049 = vadd.f32 0.0, %v3048
        %v3050 = vpop.f32.mrb[0].mxu0
        %3051 = vmatprep.mubr.bf16.mxu0 %v2836
        %3052 = vmatmul.mubr.bf16.gmra.mrb[0].mxu0 %v2835
        %v3053 = vpop.f32.mrb[0].mxu0
        %v3054 = vadd.f32 0.0, %v3053
        %v3055 = vpop.f32.mrb[0].mxu0
        %v3056 = vpop.f32.mrb[0].mxu0
        %v3057 = vadd.f32 0.0, %v3056
        %v3058 = vpop.f32.mrb[0].mxu0
        %3059 = vmatprep.mubr.bf16.mxu0 %v2838
        %3060 = vmatmul.mubr.bf16.gmra.mrb[0].mxu0 %v2837
        %v3061 = vpop.f32.mrb[0].mxu0
        %v3062 = vadd.f32 0.0, %v3061
        %v3063 = vpop.f32.mrb[0].mxu0
        %v3064 = vpop.f32.mrb[0].mxu0
        %v3065 = vadd.f32 0.0, %v3064
        %v3066 = vpop.f32.mrb[0].mxu0
        %3067 = vmatprep.mubr.bf16.mxu0 %v2840
        %3068 = vmatmul.mubr.bf16.gmra.mrb[0].mxu0 %v2839
        %v3069 = vpop.f32.mrb[0].mxu0
        %v3070 = vadd.f32 0.0, %v3069
        %v3071 = vpop.f32.mrb[0].mxu0
        %v3072 = vpop.f32.mrb[0].mxu0
        %v3073 = vadd.f32 0.0, %v3072
        %v3074 = vpop.f32.mrb[0].mxu0
        %3075 = vmatprep.mubr.bf16.mxu0 %v2842
        %3076 = vmatmul.mubr.bf16.gmra.mrb[0].mxu0 %v2841
        %v3077 = vpop.f32.mrb[0].mxu0
        %v3078 = vadd.f32 0.0, %v3077
        %v3079 = vpop.f32.mrb[0].mxu0
        %v3080 = vpop.f32.mrb[0].mxu0
        %v3081 = vadd.f32 0.0, %v3080
        %v3082 = vpop.f32.mrb[0].mxu0
        %3083 = vmatprep.mubr.bf16.mxu0 %v2844
        %3084 = vmatmul.mubr.bf16.gmra.mrb[0].mxu0 %v2843
        %v3085 = vpop.f32.mrb[0].mxu0
        %v3086 = vadd.f32 0.0, %v3085
        %v3087 = vpop.f32.mrb[0].mxu0
        %v3088 = vpop.f32.mrb[0].mxu0
        %v3089 = vadd.f32 0.0, %v3088
        %v3090 = vpop.f32.mrb[0].mxu0
        %3091 = vmatprep.mubr.bf16.mxu0 %v2846
        %3092 = vmatmul.mubr.bf16.gmra.mrb[0].mxu0 %v2845
        %v3093 = vpop.f32.mrb[0].mxu0
        %v3094 = vadd.f32 0.0, %v3093
        %v3095 = vpop.f32.mrb[0].mxu0
        %v3096 = vpop.f32.mrb[0].mxu0
        %v3097 = vadd.f32 0.0, %v3096
        %v3098 = vpop.f32.mrb[0].mxu0
        %3099 = vmatprep.mubr.bf16.mxu0 %v2848
        %3100 = vmatmul.mubr.bf16.gmra.mrb[0].mxu0 %v2847
        %v3101 = vpop.f32.mrb[0].mxu0
        %v3102 = vadd.f32 0.0, %v3101
        %v3103 = vpop.f32.mrb[0].mxu0
        %v3104 = vpop.f32.mrb[0].mxu0
        %v3105 = vadd.f32 0.0, %v3104
        %v3106 = vpop.f32.mrb[0].mxu0
        %3107 = vmatprep.mubr.bf16.mxu0 %v2850
        %3108 = vmatmul.mubr.bf16.gmra.mrb[0].mxu0 %v2849
        %v3109 = vpop.f32.mrb[0].mxu0
        %v3110 = vadd.f32 0.0, %v3109
        %v3111 = vpop.f32.mrb[0].mxu0
        %v3112 = vpop.f32.mrb[0].mxu0
        %v3113 = vadd.f32 0.0, %v3112
        %v3114 = vpop.f32.mrb[0].mxu0
        %3115 = vmatprep.mubr.bf16.mxu0 %v2852
        %3116 = vmatmul.mubr.bf16.gmra.mrb[0].mxu0 %v2851
        %v3117 = vpop.f32.mrb[0].mxu0
        %v3118 = vadd.f32 0.0, %v3117
        %v3119 = vpop.f32.mrb[0].mxu0
        %v3120 = vpop.f32.mrb[0].mxu0
        %v3121 = vadd.f32 0.0, %v3120
        %v3122 = vpop.f32.mrb[0].mxu0
        %3123 = vmatprep.mubr.bf16.mxu0 %v2854
        %3124 = vmatmul.mubr.bf16.gmra.mrb[0].mxu0 %v2853
        %v3125 = vpop.f32.mrb[0].mxu0
        %v3126 = vadd.f32 0.0, %v3125
        %v3127 = vpop.f32.mrb[0].mxu0
        %v3128 = vpop.f32.mrb[0].mxu0
        %v3129 = vadd.f32 0.0, %v3128
        %v3130 = vpop.f32.mrb[0].mxu0
        %3131 = vmatprep.mubr.bf16.mxu0 %v2856
        %3132 = vmatmul.mubr.bf16.gmra.mrb[0].mxu0 %v2855
        %v3133 = vpop.f32.mrb[0].mxu0
        %v3134 = vadd.f32 0.0, %v3133
        %v3135 = vpop.f32.mrb[0].mxu0
        %v3136 = vpop.f32.mrb[0].mxu0
        %v3137 = vadd.f32 0.0, %v3136
        %v3138 = vpop.f32.mrb[0].mxu0
        %3139 = vmatprep.mubr.bf16.mxu0 %v2858
        %3140 = vmatmul.mubr.bf16.gmra.mrb[0].mxu0 %v2857
        %v3141 = vpop.f32.mrb[0].mxu0
        %v3142 = vadd.f32 0.0, %v3141
        %v3143 = vpop.f32.mrb[0].mxu0
        %v3144 = vpop.f32.mrb[0].mxu0
        %v3145 = vadd.f32 0.0, %v3144
        %v3146 = vpop.f32.mrb[0].mxu0
        %3147 = vdwg.mxu0
        %v3148 = vadd.f32 %v2666, %v3022
        %v3149 = vadd.f32 %v2667, %v3025
        %v3150 = vadd.f32 %v2668, %v3030
        %v3151 = vadd.f32 %v2669, %v3033
        %v3152 = vadd.f32 %v2670, %v3038
        %v3153 = vadd.f32 %v2671, %v3041
        %v3154 = vadd.f32 %v2672, %v3046
        %v3155 = vadd.f32 %v2673, %v3049
        %v3156 = vadd.f32 %v2674, %v3054
        %v3157 = vadd.f32 %v2675, %v3057
        %v3158 = vadd.f32 %v2676, %v3062
        %v3159 = vadd.f32 %v2677, %v3065
        %v3160 = vadd.f32 %v2678, %v3070
        %v3161 = vadd.f32 %v2679, %v3073
        %v3162 = vadd.f32 %v2680, %v3078
        %v3163 = vadd.f32 %v2681, %v3081
        %v3164 = vadd.f32 %v2682, %v3086
        %v3165 = vadd.f32 %v2683, %v3089
        %v3166 = vadd.f32 %v2684, %v3094
        %v3167 = vadd.f32 %v2685, %v3097
        %v3168 = vadd.f32 %v2686, %v3102
        %v3169 = vadd.f32 %v2687, %v3105
        %v3170 = vadd.f32 %v2688, %v3110
        %v3171 = vadd.f32 %v2689, %v3113
        %v3172 = vadd.f32 %v2690, %v3118
        %v3173 = vadd.f32 %v2691, %v3121
        %v3174 = vadd.f32 %v2692, %v3126
        %v3175 = vadd.f32 %v2693, %v3129
        %v3176 = vadd.f32 %v2694, %v3134
        %v3177 = vadd.f32 %v2695, %v3137
        %v3178 = vadd.f32 %v2696, %v3142
        %v3179 = vadd.f32 %v2697, %v3145
        %3180 = vst [vmem:[#allocation2] sm:$0xff] %v3148
        %3181 = vst [vmem:[#allocation2 + $0x8] sm:$0xff] %v3149
        %3182 = vst [vmem:[#allocation2 + $0x10] sm:$0xff] %v3150
        %3183 = vst [vmem:[#allocation2 + $0x18] sm:$0xff] %v3151
        %3184 = vst [vmem:[#allocation2 + $0x20] sm:$0xff] %v3152
        %3185 = vst [vmem:[#allocation2 + $0x28] sm:$0xff] %v3153
        %3186 = vst [vmem:[#allocation2 + $0x30] sm:$0xff] %v3154
        %3187 = vst [vmem:[#allocation2 + $0x38] sm:$0xff] %v3155
        %3188 = vst [vmem:[#allocation2 + $0x40] sm:$0xff] %v3156
        %3189 = vst [vmem:[#allocation2 + $0x48] sm:$0xff] %v3157
        %3190 = vst [vmem:[#allocation2 + $0x50] sm:$0xff] %v3158
        %3191 = vst [vmem:[#allocation2 + $0x58] sm:$0xff] %v3159
        %3192 = vst [vmem:[#allocation2 + $0x60] sm:$0xff] %v3160
        %3193 = vst [vmem:[#allocation2 + $0x68] sm:$0xff] %v3161
        %3194 = vst [vmem:[#allocation2 + $0x70] sm:$0xff] %v3162
        %3195 = vst [vmem:[#allocation2 + $0x78] sm:$0xff] %v3163
        %3196 = vst [vmem:[#allocation2 + $0x80] sm:$0xff] %v3164
        %3197 = vst [vmem:[#allocation2 + $0x88] sm:$0xff] %v3165
        %3198 = vst [vmem:[#allocation2 + $0x90] sm:$0xff] %v3166
        %3199 = vst [vmem:[#allocation2 + $0x98] sm:$0xff] %v3167
        %3200 = vst [vmem:[#allocation2 + $0xa0] sm:$0xff] %v3168
        %3201 = vst [vmem:[#allocation2 + $0xa8] sm:$0xff] %v3169
        %3202 = vst [vmem:[#allocation2 + $0xb0] sm:$0xff] %v3170
        %3203 = vst [vmem:[#allocation2 + $0xb8] sm:$0xff] %v3171
        %3204 = vst [vmem:[#allocation2 + $0xc0] sm:$0xff] %v3172
        %3205 = vst [vmem:[#allocation2 + $0xc8] sm:$0xff] %v3173
        %3206 = vst [vmem:[#allocation2 + $0xd0] sm:$0xff] %v3174
        %3207 = vst [vmem:[#allocation2 + $0xd8] sm:$0xff] %v3175
        %3208 = vst [vmem:[#allocation2 + $0xe0] sm:$0xff] %v3176
        %3209 = vst [vmem:[#allocation2 + $0xe8] sm:$0xff] %v3177
        %3210 = vst [vmem:[#allocation2 + $0xf0] sm:$0xff] %v3178
        %3211 = vst [vmem:[#allocation2 + $0xf8] sm:$0xff] %v3179
        %v3212 = vld [vmem:[%s289 + $0x10] sm:$0xff]
        %v3213 = vld [vmem:[%s289 + $0x18] sm:$0xff]
        %v3214 = vld [vmem:[%s289 + $0x20] sm:$0xff]
        %v3215 = vld [vmem:[%s289 + $0x28] sm:$0xff]
        %v3216 = vld [vmem:[%s289 + $0x30] sm:$0xff]
        %v3217 = vld [vmem:[%s289 + $0x38] sm:$0xff]
        %v3218 = vld [vmem:[%s289 + $0x40] sm:$0xff]
        %v3219 = vld [vmem:[%s289 + $0x48] sm:$0xff]
        %v3220 = vld [vmem:[%s289 + $0x50] sm:$0xff]
        %v3221 = vld [vmem:[%s289 + $0x58] sm:$0xff]
        %v3222 = vld [vmem:[%s289 + $0x60] sm:$0xff]
        %v3223 = vld [vmem:[%s289 + $0x68] sm:$0xff]
        %v3224 = vld [vmem:[%s289 + $0x70] sm:$0xff]
        %v3225 = vld [vmem:[%s289 + $0x78] sm:$0xff]
        %v3226 = vld [vmem:[%s289 + $0x80] sm:$0xff]
        %v3227 = vld [vmem:[%s289 + $0x88] sm:$0xff]
        %v3228 = vld [vmem:[%s289 + $0x90] sm:$0xff]
        %v3229 = vld [vmem:[%s289 + $0x98] sm:$0xff]
        %v3230 = vld [vmem:[%s289 + $0xa0] sm:$0xff]
        %v3231 = vld [vmem:[%s289 + $0xa8] sm:$0xff]
        %v3232 = vld [vmem:[%s289 + $0xb0] sm:$0xff]
        %v3233 = vld [vmem:[%s289 + $0xb8] sm:$0xff]
        %v3234 = vld [vmem:[%s289 + $0xc0] sm:$0xff]
        %v3235 = vld [vmem:[%s289 + $0xc8] sm:$0xff]
        %v3236 = vld [vmem:[%s289 + $0xd0] sm:$0xff]
        %v3237 = vld [vmem:[%s289 + $0xd8] sm:$0xff]
        %v3238 = vld [vmem:[%s289 + $0xe0] sm:$0xff]
        %v3239 = vld [vmem:[%s289 + $0xe8] sm:$0xff]
        %v3240 = vld [vmem:[%s289 + $0xf0] sm:$0xff]
        %v3241 = vld [vmem:[%s289 + $0xf8] sm:$0xff]
        %v3242 = vld [vmem:[%s289 + $0x100] sm:$0xff]
        %v3243 = vld [vmem:[%s289 + $0x108] sm:$0xff]
        %v3244 = vld [vmem:[#allocation2] sm:$0xff]
        %v3245 = vld [vmem:[#allocation2 + $0x8] sm:$0xff]
        %v3246 = vld [vmem:[#allocation2 + $0x10] sm:$0xff]
        %v3247 = vld [vmem:[#allocation2 + $0x18] sm:$0xff]
        %v3248 = vld [vmem:[#allocation2 + $0x20] sm:$0xff]
        %v3249 = vld [vmem:[#allocation2 + $0x28] sm:$0xff]
        %v3250 = vld [vmem:[#allocation2 + $0x30] sm:$0xff]
        %v3251 = vld [vmem:[#allocation2 + $0x38] sm:$0xff]
        %v3252 = vld [vmem:[#allocation2 + $0x40] sm:$0xff]
        %v3253 = vld [vmem:[#allocation2 + $0x48] sm:$0xff]
        %v3254 = vld [vmem:[#allocation2 + $0x50] sm:$0xff]
        %v3255 = vld [vmem:[#allocation2 + $0x58] sm:$0xff]
        %v3256 = vld [vmem:[#allocation2 + $0x60] sm:$0xff]
        %v3257 = vld [vmem:[#allocation2 + $0x68] sm:$0xff]
        %v3258 = vld [vmem:[#allocation2 + $0x70] sm:$0xff]
        %v3259 = vld [vmem:[#allocation2 + $0x78] sm:$0xff]
        %v3260 = vld [vmem:[#allocation2 + $0x80] sm:$0xff]
        %v3261 = vld [vmem:[#allocation2 + $0x88] sm:$0xff]
        %v3262 = vld [vmem:[#allocation2 + $0x90] sm:$0xff]
        %v3263 = vld [vmem:[#allocation2 + $0x98] sm:$0xff]
        %v3264 = vld [vmem:[#allocation2 + $0xa0] sm:$0xff]
        %v3265 = vld [vmem:[#allocation2 + $0xa8] sm:$0xff]
        %v3266 = vld [vmem:[#allocation2 + $0xb0] sm:$0xff]
        %v3267 = vld [vmem:[#allocation2 + $0xb8] sm:$0xff]
        %v3268 = vld [vmem:[#allocation2 + $0xc0] sm:$0xff]
        %v3269 = vld [vmem:[#allocation2 + $0xc8] sm:$0xff]
        %v3270 = vld [vmem:[#allocation2 + $0xd0] sm:$0xff]
        %v3271 = vld [vmem:[#allocation2 + $0xd8] sm:$0xff]
        %v3272 = vld [vmem:[#allocation2 + $0xe0] sm:$0xff]
        %v3273 = vld [vmem:[#allocation2 + $0xe8] sm:$0xff]
        %v3274 = vld [vmem:[#allocation2 + $0xf0] sm:$0xff]
        %v3275 = vld [vmem:[#allocation2 + $0xf8] sm:$0xff]
        %s3276 = scalar_lea.vmem %s3, 640
        %v3277 = vld [vmem:[%s3276] sm:$0xf]
        %v3278 = vld [vmem:[%s3276 + $0x4] sm:$0xf]
        %v3279 = vld [vmem:[%s3276 + $0x8] sm:$0xf]
        %v3280 = vld [vmem:[%s3276 + $0xc] sm:$0xf]
        %v3281 = vld [vmem:[%s3276 + $0x10] sm:$0xf]
        %v3282 = vld [vmem:[%s3276 + $0x14] sm:$0xf]
        %v3283 = vld [vmem:[%s3276 + $0x18] sm:$0xf]
        %v3284 = vld [vmem:[%s3276 + $0x1c] sm:$0xf]
        %v3285 = vld [vmem:[%s3276 + $0x20] sm:$0xf]
        %v3286 = vld [vmem:[%s3276 + $0x24] sm:$0xf]
        %v3287 = vld [vmem:[%s3276 + $0x28] sm:$0xf]
        %v3288 = vld [vmem:[%s3276 + $0x2c] sm:$0xf]
        %v3289 = vld [vmem:[%s3276 + $0x30] sm:$0xf]
        %v3290 = vld [vmem:[%s3276 + $0x34] sm:$0xf]
        %v3291 = vld [vmem:[%s3276 + $0x38] sm:$0xf]
        %v3292 = vld [vmem:[%s3276 + $0x3c] sm:$0xf]
        %v3293 = vld [vmem:[%s3276 + $0x40] sm:$0xf]
        %v3294 = vld [vmem:[%s3276 + $0x44] sm:$0xf]
        %v3295 = vld [vmem:[%s3276 + $0x48] sm:$0xf]
        %v3296 = vld [vmem:[%s3276 + $0x4c] sm:$0xf]
        %v3297 = vld [vmem:[%s3276 + $0x50] sm:$0xf]
        %v3298 = vld [vmem:[%s3276 + $0x54] sm:$0xf]
        %v3299 = vld [vmem:[%s3276 + $0x58] sm:$0xf]
        %v3300 = vld [vmem:[%s3276 + $0x5c] sm:$0xf]
        %v3301 = vld [vmem:[%s3276 + $0x60] sm:$0xf]
        %v3302 = vld [vmem:[%s3276 + $0x64] sm:$0xf]
        %v3303 = vld [vmem:[%s3276 + $0x68] sm:$0xf]
        %v3304 = vld [vmem:[%s3276 + $0x6c] sm:$0xf]
        %v3305 = vld [vmem:[%s3276 + $0x70] sm:$0xf]
        %v3306 = vld [vmem:[%s3276 + $0x74] sm:$0xf]
        %v3307 = vld [vmem:[%s3276 + $0x78] sm:$0xf]
        %v3308 = vld [vmem:[%s3276 + $0x7c] sm:$0xf]
        %v3341 = vunpack.c.l.b16 %v3212
        %v3342 = vunpack.c.h.b16 %v3212
        %v3343 = vunpack.c.l.b16 %v3213
        %v3344 = vunpack.c.h.b16 %v3213
        %v3345 = vunpack.c.l.b16 %v3214
        %v3346 = vunpack.c.h.b16 %v3214
        %v3347 = vunpack.c.l.b16 %v3215
        %v3348 = vunpack.c.h.b16 %v3215
        %v3349 = vunpack.c.l.b16 %v3216
        %v3350 = vunpack.c.h.b16 %v3216
        %v3351 = vunpack.c.l.b16 %v3217
        %v3352 = vunpack.c.h.b16 %v3217
        %v3353 = vunpack.c.l.b16 %v3218
        %v3354 = vunpack.c.h.b16 %v3218
        %v3355 = vunpack.c.l.b16 %v3219
        %v3356 = vunpack.c.h.b16 %v3219
        %v3357 = vunpack.c.l.b16 %v3220
        %v3358 = vunpack.c.h.b16 %v3220
        %v3359 = vunpack.c.l.b16 %v3221
        %v3360 = vunpack.c.h.b16 %v3221
        %v3361 = vunpack.c.l.b16 %v3222
        %v3362 = vunpack.c.h.b16 %v3222
        %v3363 = vunpack.c.l.b16 %v3223
        %v3364 = vunpack.c.h.b16 %v3223
        %v3365 = vunpack.c.l.b16 %v3224
        %v3366 = vunpack.c.h.b16 %v3224
        %v3367 = vunpack.c.l.b16 %v3225
        %v3368 = vunpack.c.h.b16 %v3225
        %v3369 = vunpack.c.l.b16 %v3226
        %v3370 = vunpack.c.h.b16 %v3226
        %v3371 = vunpack.c.l.b16 %v3227
        %v3372 = vunpack.c.h.b16 %v3227
        %v3373 = vunpack.c.l.b16 %v3228
        %v3374 = vunpack.c.h.b16 %v3228
        %v3375 = vunpack.c.l.b16 %v3229
        %v3376 = vunpack.c.h.b16 %v3229
        %v3377 = vunpack.c.l.b16 %v3230
        %v3378 = vunpack.c.h.b16 %v3230
        %v3379 = vunpack.c.l.b16 %v3231
        %v3380 = vunpack.c.h.b16 %v3231
        %v3381 = vunpack.c.l.b16 %v3232
        %v3382 = vunpack.c.h.b16 %v3232
        %v3383 = vunpack.c.l.b16 %v3233
        %v3384 = vunpack.c.h.b16 %v3233
        %v3385 = vunpack.c.l.b16 %v3234
        %v3386 = vunpack.c.h.b16 %v3234
        %v3387 = vunpack.c.l.b16 %v3235
        %v3388 = vunpack.c.h.b16 %v3235
        %v3389 = vunpack.c.l.b16 %v3236
        %v3390 = vunpack.c.h.b16 %v3236
        %v3391 = vunpack.c.l.b16 %v3237
        %v3392 = vunpack.c.h.b16 %v3237
        %v3393 = vunpack.c.l.b16 %v3238
        %v3394 = vunpack.c.h.b16 %v3238
        %v3395 = vunpack.c.l.b16 %v3239
        %v3396 = vunpack.c.h.b16 %v3239
        %v3397 = vunpack.c.l.b16 %v3240
        %v3398 = vunpack.c.h.b16 %v3240
        %v3399 = vunpack.c.l.b16 %v3241
        %v3400 = vunpack.c.h.b16 %v3241
        %v3401 = vunpack.c.l.b16 %v3242
        %v3402 = vunpack.c.h.b16 %v3242
        %v3403 = vunpack.c.l.b16 %v3243
        %v3404 = vunpack.c.h.b16 %v3243
        %v3405 = vpack.c.b16 %v3343, %v3341
        %v3406 = vpack.c.b16 %v3344, %v3342
        %v3407 = vpack.c.b16 %v3347, %v3345
        %v3408 = vpack.c.b16 %v3348, %v3346
        %v3409 = vpack.c.b16 %v3351, %v3349
        %v3410 = vpack.c.b16 %v3352, %v3350
        %v3411 = vpack.c.b16 %v3355, %v3353
        %v3412 = vpack.c.b16 %v3356, %v3354
        %v3413 = vpack.c.b16 %v3359, %v3357
        %v3414 = vpack.c.b16 %v3360, %v3358
        %v3415 = vpack.c.b16 %v3363, %v3361
        %v3416 = vpack.c.b16 %v3364, %v3362
        %v3417 = vpack.c.b16 %v3367, %v3365
        %v3418 = vpack.c.b16 %v3368, %v3366
        %v3419 = vpack.c.b16 %v3371, %v3369
        %v3420 = vpack.c.b16 %v3372, %v3370
        %v3421 = vpack.c.b16 %v3375, %v3373
        %v3422 = vpack.c.b16 %v3376, %v3374
        %v3423 = vpack.c.b16 %v3379, %v3377
        %v3424 = vpack.c.b16 %v3380, %v3378
        %v3425 = vpack.c.b16 %v3383, %v3381
        %v3426 = vpack.c.b16 %v3384, %v3382
        %v3427 = vpack.c.b16 %v3387, %v3385
        %v3428 = vpack.c.b16 %v3388, %v3386
        %v3429 = vpack.c.b16 %v3391, %v3389
        %v3430 = vpack.c.b16 %v3392, %v3390
        %v3431 = vpack.c.b16 %v3395, %v3393
        %v3432 = vpack.c.b16 %v3396, %v3394
        %v3433 = vpack.c.b16 %v3399, %v3397
        %v3434 = vpack.c.b16 %v3400, %v3398
        %v3435 = vpack.c.b16 %v3403, %v3401
        %v3436 = vpack.c.b16 %v3404, %v3402
        %v3501 = vunpack.c.l.b16 %v3277
        %v3502 = vunpack.c.l.b16 %v3278
        %v3503 = vunpack.c.l.b16 %v3279
        %v3504 = vunpack.c.l.b16 %v3280
        %v3505 = vunpack.c.l.b16 %v3281
        %v3506 = vunpack.c.l.b16 %v3282
        %v3507 = vunpack.c.l.b16 %v3283
        %v3508 = vunpack.c.l.b16 %v3284
        %v3509 = vunpack.c.l.b16 %v3285
        %v3510 = vunpack.c.l.b16 %v3286
        %v3511 = vunpack.c.l.b16 %v3287
        %v3512 = vunpack.c.l.b16 %v3288
        %v3513 = vunpack.c.l.b16 %v3289
        %v3514 = vunpack.c.l.b16 %v3290
        %v3515 = vunpack.c.l.b16 %v3291
        %v3516 = vunpack.c.l.b16 %v3292
        %v3517 = vunpack.c.l.b16 %v3293
        %v3518 = vunpack.c.l.b16 %v3294
        %v3519 = vunpack.c.l.b16 %v3295
        %v3520 = vunpack.c.l.b16 %v3296
        %v3521 = vunpack.c.l.b16 %v3297
        %v3522 = vunpack.c.l.b16 %v3298
        %v3523 = vunpack.c.l.b16 %v3299
        %v3524 = vunpack.c.l.b16 %v3300
        %v3525 = vunpack.c.l.b16 %v3301
        %v3526 = vunpack.c.l.b16 %v3302
        %v3527 = vunpack.c.l.b16 %v3303
        %v3528 = vunpack.c.l.b16 %v3304
        %v3529 = vunpack.c.l.b16 %v3305
        %v3530 = vunpack.c.l.b16 %v3306
        %v3531 = vunpack.c.l.b16 %v3307
        %v3532 = vunpack.c.l.b16 %v3308
        %v3533 = vpack.c.b16 %v3502, %v3501
        %v3534 = vpack.c.b16 %v3504, %v3503
        %v3535 = vpack.c.b16 %v3506, %v3505
        %v3536 = vpack.c.b16 %v3508, %v3507
        %v3537 = vpack.c.b16 %v3510, %v3509
        %v3538 = vpack.c.b16 %v3512, %v3511
        %v3539 = vpack.c.b16 %v3514, %v3513
        %v3540 = vpack.c.b16 %v3516, %v3515
        %v3541 = vpack.c.b16 %v3518, %v3517
        %v3542 = vpack.c.b16 %v3520, %v3519
        %v3543 = vpack.c.b16 %v3522, %v3521
        %v3544 = vpack.c.b16 %v3524, %v3523
        %v3545 = vpack.c.b16 %v3526, %v3525
        %v3546 = vpack.c.b16 %v3528, %v3527
        %v3547 = vpack.c.b16 %v3530, %v3529
        %v3548 = vpack.c.b16 %v3532, %v3531
        %3565 = vmatprep.subr.bf16.mxu0 0
        %3566 = vmatpush1.bf16.msra.mxu0 %v3533
        %3567 = vmatprep.subr.bf16.mxu0 0
        %3568 = vmatpush1.bf16.msra.mxu0 %v3534
        %3569 = vmatprep.subr.bf16.mxu0 0
        %3570 = vmatpush1.bf16.msra.mxu0 %v3535
        %3571 = vmatprep.subr.bf16.mxu0 0
        %3572 = vmatpush1.bf16.msra.mxu0 %v3536
        %3573 = vmatprep.subr.bf16.mxu0 0
        %3574 = vmatpush1.bf16.msra.mxu0 %v3537
        %3575 = vmatprep.subr.bf16.mxu0 0
        %3576 = vmatpush1.bf16.msra.mxu0 %v3538
        %3577 = vmatprep.subr.bf16.mxu0 0
        %3578 = vmatpush1.bf16.msra.mxu0 %v3539
        %3579 = vmatprep.subr.bf16.mxu0 0
        %3580 = vmatpush1.bf16.msra.mxu0 %v3540
        %3581 = vmatprep.subr.bf16.mxu0 0
        %3582 = vmatpush1.bf16.msra.mxu0 %v3541
        %3583 = vmatprep.subr.bf16.mxu0 0
        %3584 = vmatpush1.bf16.msra.mxu0 %v3542
        %3585 = vmatprep.subr.bf16.mxu0 0
        %3586 = vmatpush1.bf16.msra.mxu0 %v3543
        %3587 = vmatprep.subr.bf16.mxu0 0
        %3588 = vmatpush1.bf16.msra.mxu0 %v3544
        %3589 = vmatprep.subr.bf16.mxu0 0
        %3590 = vmatpush1.bf16.msra.mxu0 %v3545
        %3591 = vmatprep.subr.bf16.mxu0 0
        %3592 = vmatpush1.bf16.msra.mxu0 %v3546
        %3593 = vmatprep.subr.bf16.mxu0 0
        %3594 = vmatpush1.bf16.msra.mxu0 %v3547
        %3595 = vmatprep.subr.bf16.mxu0 0
        %3596 = vmatpush1.bf16.msra.mxu0 %v3548
        %3597 = vmatprep.mubr.bf16.mxu0 %v3406
        %3598 = vmatmul.mubr.bf16.gmra.mrb[0].mxu0 %v3405
        %v3599 = vpop.f32.mrb[0].mxu0
        %v3600 = vadd.f32 0.0, %v3599
        %v3601 = vpop.f32.mrb[0].mxu0
        %v3602 = vpop.f32.mrb[0].mxu0
        %v3603 = vadd.f32 0.0, %v3602
        %v3604 = vpop.f32.mrb[0].mxu0
        %3605 = vmatprep.mubr.bf16.mxu0 %v3408
        %3606 = vmatmul.mubr.bf16.gmra.mrb[0].mxu0 %v3407
        %v3607 = vpop.f32.mrb[0].mxu0
        %v3608 = vadd.f32 0.0, %v3607
        %v3609 = vpop.f32.mrb[0].mxu0
        %v3610 = vpop.f32.mrb[0].mxu0
        %v3611 = vadd.f32 0.0, %v3610
        %v3612 = vpop.f32.mrb[0].mxu0
        %3613 = vmatprep.mubr.bf16.mxu0 %v3410
        %3614 = vmatmul.mubr.bf16.gmra.mrb[0].mxu0 %v3409
        %v3615 = vpop.f32.mrb[0].mxu0
        %v3616 = vadd.f32 0.0, %v3615
        %v3617 = vpop.f32.mrb[0].mxu0
        %v3618 = vpop.f32.mrb[0].mxu0
        %v3619 = vadd.f32 0.0, %v3618
        %v3620 = vpop.f32.mrb[0].mxu0
        %3621 = vmatprep.mubr.bf16.mxu0 %v3412
        %3622 = vmatmul.mubr.bf16.gmra.mrb[0].mxu0 %v3411
        %v3623 = vpop.f32.mrb[0].mxu0
        %v3624 = vadd.f32 0.0, %v3623
        %v3625 = vpop.f32.mrb[0].mxu0
        %v3626 = vpop.f32.mrb[0].mxu0
        %v3627 = vadd.f32 0.0, %v3626
        %v3628 = vpop.f32.mrb[0].mxu0
        %3629 = vmatprep.mubr.bf16.mxu0 %v3414
        %3630 = vmatmul.mubr.bf16.gmra.mrb[0].mxu0 %v3413
        %v3631 = vpop.f32.mrb[0].mxu0
        %v3632 = vadd.f32 0.0, %v3631
        %v3633 = vpop.f32.mrb[0].mxu0
        %v3634 = vpop.f32.mrb[0].mxu0
        %v3635 = vadd.f32 0.0, %v3634
        %v3636 = vpop.f32.mrb[0].mxu0
        %3637 = vmatprep.mubr.bf16.mxu0 %v3416
        %3638 = vmatmul.mubr.bf16.gmra.mrb[0].mxu0 %v3415
        %v3639 = vpop.f32.mrb[0].mxu0
        %v3640 = vadd.f32 0.0, %v3639
        %v3641 = vpop.f32.mrb[0].mxu0
        %v3642 = vpop.f32.mrb[0].mxu0
        %v3643 = vadd.f32 0.0, %v3642
        %v3644 = vpop.f32.mrb[0].mxu0
        %3645 = vmatprep.mubr.bf16.mxu0 %v3418
        %3646 = vmatmul.mubr.bf16.gmra.mrb[0].mxu0 %v3417
        %v3647 = vpop.f32.mrb[0].mxu0
        %v3648 = vadd.f32 0.0, %v3647
        %v3649 = vpop.f32.mrb[0].mxu0
        %v3650 = vpop.f32.mrb[0].mxu0
        %v3651 = vadd.f32 0.0, %v3650
        %v3652 = vpop.f32.mrb[0].mxu0
        %3653 = vmatprep.mubr.bf16.mxu0 %v3420
        %3654 = vmatmul.mubr.bf16.gmra.mrb[0].mxu0 %v3419
        %v3655 = vpop.f32.mrb[0].mxu0
        %v3656 = vadd.f32 0.0, %v3655
        %v3657 = vpop.f32.mrb[0].mxu0
        %v3658 = vpop.f32.mrb[0].mxu0
        %v3659 = vadd.f32 0.0, %v3658
        %v3660 = vpop.f32.mrb[0].mxu0
        %3661 = vmatprep.mubr.bf16.mxu0 %v3422
        %3662 = vmatmul.mubr.bf16.gmra.mrb[0].mxu0 %v3421
        %v3663 = vpop.f32.mrb[0].mxu0
        %v3664 = vadd.f32 0.0, %v3663
        %v3665 = vpop.f32.mrb[0].mxu0
        %v3666 = vpop.f32.mrb[0].mxu0
        %v3667 = vadd.f32 0.0, %v3666
        %v3668 = vpop.f32.mrb[0].mxu0
        %3669 = vmatprep.mubr.bf16.mxu0 %v3424
        %3670 = vmatmul.mubr.bf16.gmra.mrb[0].mxu0 %v3423
        %v3671 = vpop.f32.mrb[0].mxu0
        %v3672 = vadd.f32 0.0, %v3671
        %v3673 = vpop.f32.mrb[0].mxu0
        %v3674 = vpop.f32.mrb[0].mxu0
        %v3675 = vadd.f32 0.0, %v3674
        %v3676 = vpop.f32.mrb[0].mxu0
        %3677 = vmatprep.mubr.bf16.mxu0 %v3426
        %3678 = vmatmul.mubr.bf16.gmra.mrb[0].mxu0 %v3425
        %v3679 = vpop.f32.mrb[0].mxu0
        %v3680 = vadd.f32 0.0, %v3679
        %v3681 = vpop.f32.mrb[0].mxu0
        %v3682 = vpop.f32.mrb[0].mxu0
        %v3683 = vadd.f32 0.0, %v3682
        %v3684 = vpop.f32.mrb[0].mxu0
        %3685 = vmatprep.mubr.bf16.mxu0 %v3428
        %3686 = vmatmul.mubr.bf16.gmra.mrb[0].mxu0 %v3427
        %v3687 = vpop.f32.mrb[0].mxu0
        %v3688 = vadd.f32 0.0, %v3687
        %v3689 = vpop.f32.mrb[0].mxu0
        %v3690 = vpop.f32.mrb[0].mxu0
        %v3691 = vadd.f32 0.0, %v3690
        %v3692 = vpop.f32.mrb[0].mxu0
        %3693 = vmatprep.mubr.bf16.mxu0 %v3430
        %3694 = vmatmul.mubr.bf16.gmra.mrb[0].mxu0 %v3429
        %v3695 = vpop.f32.mrb[0].mxu0
        %v3696 = vadd.f32 0.0, %v3695
        %v3697 = vpop.f32.mrb[0].mxu0
        %v3698 = vpop.f32.mrb[0].mxu0
        %v3699 = vadd.f32 0.0, %v3698
        %v3700 = vpop.f32.mrb[0].mxu0
        %3701 = vmatprep.mubr.bf16.mxu0 %v3432
        %3702 = vmatmul.mubr.bf16.gmra.mrb[0].mxu0 %v3431
        %v3703 = vpop.f32.mrb[0].mxu0
        %v3704 = vadd.f32 0.0, %v3703
        %v3705 = vpop.f32.mrb[0].mxu0
        %v3706 = vpop.f32.mrb[0].mxu0
        %v3707 = vadd.f32 0.0, %v3706
        %v3708 = vpop.f32.mrb[0].mxu0
        %3709 = vmatprep.mubr.bf16.mxu0 %v3434
        %3710 = vmatmul.mubr.bf16.gmra.mrb[0].mxu0 %v3433
        %v3711 = vpop.f32.mrb[0].mxu0
        %v3712 = vadd.f32 0.0, %v3711
        %v3713 = vpop.f32.mrb[0].mxu0
        %v3714 = vpop.f32.mrb[0].mxu0
        %v3715 = vadd.f32 0.0, %v3714
        %v3716 = vpop.f32.mrb[0].mxu0
        %3717 = vmatprep.mubr.bf16.mxu0 %v3436
        %3718 = vmatmul.mubr.bf16.gmra.mrb[0].mxu0 %v3435
        %v3719 = vpop.f32.mrb[0].mxu0
        %v3720 = vadd.f32 0.0, %v3719
        %v3721 = vpop.f32.mrb[0].mxu0
        %v3722 = vpop.f32.mrb[0].mxu0
        %v3723 = vadd.f32 0.0, %v3722
        %v3724 = vpop.f32.mrb[0].mxu0
        %3725 = vdwg.mxu0
        %v3726 = vadd.f32 %v3244, %v3600
        %v3727 = vadd.f32 %v3245, %v3603
        %v3728 = vadd.f32 %v3246, %v3608
        %v3729 = vadd.f32 %v3247, %v3611
        %v3730 = vadd.f32 %v3248, %v3616
        %v3731 = vadd.f32 %v3249, %v3619
        %v3732 = vadd.f32 %v3250, %v3624
        %v3733 = vadd.f32 %v3251, %v3627
        %v3734 = vadd.f32 %v3252, %v3632
        %v3735 = vadd.f32 %v3253, %v3635
        %v3736 = vadd.f32 %v3254, %v3640
        %v3737 = vadd.f32 %v3255, %v3643
        %v3738 = vadd.f32 %v3256, %v3648
        %v3739 = vadd.f32 %v3257, %v3651
        %v3740 = vadd.f32 %v3258, %v3656
        %v3741 = vadd.f32 %v3259, %v3659
        %v3742 = vadd.f32 %v3260, %v3664
        %v3743 = vadd.f32 %v3261, %v3667
        %v3744 = vadd.f32 %v3262, %v3672
        %v3745 = vadd.f32 %v3263, %v3675
        %v3746 = vadd.f32 %v3264, %v3680
        %v3747 = vadd.f32 %v3265, %v3683
        %v3748 = vadd.f32 %v3266, %v3688
        %v3749 = vadd.f32 %v3267, %v3691
        %v3750 = vadd.f32 %v3268, %v3696
        %v3751 = vadd.f32 %v3269, %v3699
        %v3752 = vadd.f32 %v3270, %v3704
        %v3753 = vadd.f32 %v3271, %v3707
        %v3754 = vadd.f32 %v3272, %v3712
        %v3755 = vadd.f32 %v3273, %v3715
        %v3756 = vadd.f32 %v3274, %v3720
        %v3757 = vadd.f32 %v3275, %v3723
        %3758 = vst [vmem:[#allocation2] sm:$0xff] %v3726
        %3759 = vst [vmem:[#allocation2 + $0x8] sm:$0xff] %v3727
        %3760 = vst [vmem:[#allocation2 + $0x10] sm:$0xff] %v3728
        %3761 = vst [vmem:[#allocation2 + $0x18] sm:$0xff] %v3729
        %3762 = vst [vmem:[#allocation2 + $0x20] sm:$0xff] %v3730
        %3763 = vst [vmem:[#allocation2 + $0x28] sm:$0xff] %v3731
        %3764 = vst [vmem:[#allocation2 + $0x30] sm:$0xff] %v3732
        %3765 = vst [vmem:[#allocation2 + $0x38] sm:$0xff] %v3733
        %3766 = vst [vmem:[#allocation2 + $0x40] sm:$0xff] %v3734
        %3767 = vst [vmem:[#allocation2 + $0x48] sm:$0xff] %v3735
        %3768 = vst [vmem:[#allocation2 + $0x50] sm:$0xff] %v3736
        %3769 = vst [vmem:[#allocation2 + $0x58] sm:$0xff] %v3737
        %3770 = vst [vmem:[#allocation2 + $0x60] sm:$0xff] %v3738
        %3771 = vst [vmem:[#allocation2 + $0x68] sm:$0xff] %v3739
        %3772 = vst [vmem:[#allocation2 + $0x70] sm:$0xff] %v3740
        %3773 = vst [vmem:[#allocation2 + $0x78] sm:$0xff] %v3741
        %3774 = vst [vmem:[#allocation2 + $0x80] sm:$0xff] %v3742
        %3775 = vst [vmem:[#allocation2 + $0x88] sm:$0xff] %v3743
        %3776 = vst [vmem:[#allocation2 + $0x90] sm:$0xff] %v3744
        %3777 = vst [vmem:[#allocation2 + $0x98] sm:$0xff] %v3745
        %3778 = vst [vmem:[#allocation2 + $0xa0] sm:$0xff] %v3746
        %3779 = vst [vmem:[#allocation2 + $0xa8] sm:$0xff] %v3747
        %3780 = vst [vmem:[#allocation2 + $0xb0] sm:$0xff] %v3748
        %3781 = vst [vmem:[#allocation2 + $0xb8] sm:$0xff] %v3749
        %3782 = vst [vmem:[#allocation2 + $0xc0] sm:$0xff] %v3750
        %3783 = vst [vmem:[#allocation2 + $0xc8] sm:$0xff] %v3751
        %3784 = vst [vmem:[#allocation2 + $0xd0] sm:$0xff] %v3752
        %3785 = vst [vmem:[#allocation2 + $0xd8] sm:$0xff] %v3753
        %3786 = vst [vmem:[#allocation2 + $0xe0] sm:$0xff] %v3754
        %3787 = vst [vmem:[#allocation2 + $0xe8] sm:$0xff] %v3755
        %3788 = vst [vmem:[#allocation2 + $0xf0] sm:$0xff] %v3756
        %3789 = vst [vmem:[#allocation2 + $0xf8] sm:$0xff] %v3757
        %v3790 = vld [vmem:[%s279 + $0x20] sm:$0xff]
        %v3791 = vld [vmem:[%s279 + $0x28] sm:$0xff]
        %v3792 = vld [vmem:[%s279 + $0x30] sm:$0xff]
        %v3793 = vld [vmem:[%s279 + $0x38] sm:$0xff]
        %v3794 = vld [vmem:[%s279 + $0x40] sm:$0xff]
        %v3795 = vld [vmem:[%s279 + $0x48] sm:$0xff]
        %v3796 = vld [vmem:[%s279 + $0x50] sm:$0xff]
        %v3797 = vld [vmem:[%s279 + $0x58] sm:$0xff]
        %v3798 = vld [vmem:[%s279 + $0x60] sm:$0xff]
        %v3799 = vld [vmem:[%s279 + $0x68] sm:$0xff]
        %v3800 = vld [vmem:[%s279 + $0x70] sm:$0xff]
        %v3801 = vld [vmem:[%s279 + $0x78] sm:$0xff]
        %v3802 = vld [vmem:[%s279 + $0x80] sm:$0xff]
        %v3803 = vld [vmem:[%s279 + $0x88] sm:$0xff]
        %v3804 = vld [vmem:[%s279 + $0x90] sm:$0xff]
        %v3805 = vld [vmem:[%s279 + $0x98] sm:$0xff]
        %v3806 = vld [vmem:[%s279 + $0xa0] sm:$0xff]
        %v3807 = vld [vmem:[%s279 + $0xa8] sm:$0xff]
        %v3808 = vld [vmem:[%s279 + $0xb0] sm:$0xff]
        %v3809 = vld [vmem:[%s279 + $0xb8] sm:$0xff]
        %v3810 = vld [vmem:[%s279 + $0xc0] sm:$0xff]
        %v3811 = vld [vmem:[%s279 + $0xc8] sm:$0xff]
        %v3812 = vld [vmem:[%s279 + $0xd0] sm:$0xff]
        %v3813 = vld [vmem:[%s279 + $0xd8] sm:$0xff]
        %v3814 = vld [vmem:[%s279 + $0xe0] sm:$0xff]
        %v3815 = vld [vmem:[%s279 + $0xe8] sm:$0xff]
        %v3816 = vld [vmem:[%s279 + $0xf0] sm:$0xff]
        %v3817 = vld [vmem:[%s279 + $0xf8] sm:$0xff]
        %v3818 = vld [vmem:[%s279 + $0x100] sm:$0xff]
        %v3819 = vld [vmem:[%s279 + $0x108] sm:$0xff]
        %v3820 = vld [vmem:[%s279 + $0x110] sm:$0xff]
        %v3821 = vld [vmem:[%s279 + $0x118] sm:$0xff]
        %v3822 = vld [vmem:[#allocation2] sm:$0xff]
        %v3823 = vld [vmem:[#allocation2 + $0x8] sm:$0xff]
        %v3824 = vld [vmem:[#allocation2 + $0x10] sm:$0xff]
        %v3825 = vld [vmem:[#allocation2 + $0x18] sm:$0xff]
        %v3826 = vld [vmem:[#allocation2 + $0x20] sm:$0xff]
        %v3827 = vld [vmem:[#allocation2 + $0x28] sm:$0xff]
        %v3828 = vld [vmem:[#allocation2 + $0x30] sm:$0xff]
        %v3829 = vld [vmem:[#allocation2 + $0x38] sm:$0xff]
        %v3830 = vld [vmem:[#allocation2 + $0x40] sm:$0xff]
        %v3831 = vld [vmem:[#allocation2 + $0x48] sm:$0xff]
        %v3832 = vld [vmem:[#allocation2 + $0x50] sm:$0xff]
        %v3833 = vld [vmem:[#allocation2 + $0x58] sm:$0xff]
        %v3834 = vld [vmem:[#allocation2 + $0x60] sm:$0xff]
        %v3835 = vld [vmem:[#allocation2 + $0x68] sm:$0xff]
        %v3836 = vld [vmem:[#allocation2 + $0x70] sm:$0xff]
        %v3837 = vld [vmem:[#allocation2 + $0x78] sm:$0xff]
        %v3838 = vld [vmem:[#allocation2 + $0x80] sm:$0xff]
        %v3839 = vld [vmem:[#allocation2 + $0x88] sm:$0xff]
        %v3840 = vld [vmem:[#allocation2 + $0x90] sm:$0xff]
        %v3841 = vld [vmem:[#allocation2 + $0x98] sm:$0xff]
        %v3842 = vld [vmem:[#allocation2 + $0xa0] sm:$0xff]
        %v3843 = vld [vmem:[#allocation2 + $0xa8] sm:$0xff]
        %v3844 = vld [vmem:[#allocation2 + $0xb0] sm:$0xff]
        %v3845 = vld [vmem:[#allocation2 + $0xb8] sm:$0xff]
        %v3846 = vld [vmem:[#allocation2 + $0xc0] sm:$0xff]
        %v3847 = vld [vmem:[#allocation2 + $0xc8] sm:$0xff]
        %v3848 = vld [vmem:[#allocation2 + $0xd0] sm:$0xff]
        %v3849 = vld [vmem:[#allocation2 + $0xd8] sm:$0xff]
        %v3850 = vld [vmem:[#allocation2 + $0xe0] sm:$0xff]
        %v3851 = vld [vmem:[#allocation2 + $0xe8] sm:$0xff]
        %v3852 = vld [vmem:[#allocation2 + $0xf0] sm:$0xff]
        %v3853 = vld [vmem:[#allocation2 + $0xf8] sm:$0xff]
        %s3854 = scalar_lea.vmem %s3, 768
        %v3855 = vld [vmem:[%s3854] sm:$0xf]
        %v3856 = vld [vmem:[%s3854 + $0x4] sm:$0xf]
        %v3857 = vld [vmem:[%s3854 + $0x8] sm:$0xf]
        %v3858 = vld [vmem:[%s3854 + $0xc] sm:$0xf]
        %v3859 = vld [vmem:[%s3854 + $0x10] sm:$0xf]
        %v3860 = vld [vmem:[%s3854 + $0x14] sm:$0xf]
        %v3861 = vld [vmem:[%s3854 + $0x18] sm:$0xf]
        %v3862 = vld [vmem:[%s3854 + $0x1c] sm:$0xf]
        %v3863 = vld [vmem:[%s3854 + $0x20] sm:$0xf]
        %v3864 = vld [vmem:[%s3854 + $0x24] sm:$0xf]
        %v3865 = vld [vmem:[%s3854 + $0x28] sm:$0xf]
        %v3866 = vld [vmem:[%s3854 + $0x2c] sm:$0xf]
        %v3867 = vld [vmem:[%s3854 + $0x30] sm:$0xf]
        %v3868 = vld [vmem:[%s3854 + $0x34] sm:$0xf]
        %v3869 = vld [vmem:[%s3854 + $0x38] sm:$0xf]
        %v3870 = vld [vmem:[%s3854 + $0x3c] sm:$0xf]
        %v3871 = vld [vmem:[%s3854 + $0x40] sm:$0xf]
        %v3872 = vld [vmem:[%s3854 + $0x44] sm:$0xf]
        %v3873 = vld [vmem:[%s3854 + $0x48] sm:$0xf]
        %v3874 = vld [vmem:[%s3854 + $0x4c] sm:$0xf]
        %v3875 = vld [vmem:[%s3854 + $0x50] sm:$0xf]
        %v3876 = vld [vmem:[%s3854 + $0x54] sm:$0xf]
        %v3877 = vld [vmem:[%s3854 + $0x58] sm:$0xf]
        %v3878 = vld [vmem:[%s3854 + $0x5c] sm:$0xf]
        %v3879 = vld [vmem:[%s3854 + $0x60] sm:$0xf]
        %v3880 = vld [vmem:[%s3854 + $0x64] sm:$0xf]
        %v3881 = vld [vmem:[%s3854 + $0x68] sm:$0xf]
        %v3882 = vld [vmem:[%s3854 + $0x6c] sm:$0xf]
        %v3883 = vld [vmem:[%s3854 + $0x70] sm:$0xf]
        %v3884 = vld [vmem:[%s3854 + $0x74] sm:$0xf]
        %v3885 = vld [vmem:[%s3854 + $0x78] sm:$0xf]
        %v3886 = vld [vmem:[%s3854 + $0x7c] sm:$0xf]
        %v3919 = vunpack.c.l.b16 %v3790
        %v3920 = vunpack.c.h.b16 %v3790
        %v3921 = vunpack.c.l.b16 %v3791
        %v3922 = vunpack.c.h.b16 %v3791
        %v3923 = vunpack.c.l.b16 %v3792
        %v3924 = vunpack.c.h.b16 %v3792
        %v3925 = vunpack.c.l.b16 %v3793
        %v3926 = vunpack.c.h.b16 %v3793
        %v3927 = vunpack.c.l.b16 %v3794
        %v3928 = vunpack.c.h.b16 %v3794
        %v3929 = vunpack.c.l.b16 %v3795
        %v3930 = vunpack.c.h.b16 %v3795
        %v3931 = vunpack.c.l.b16 %v3796
        %v3932 = vunpack.c.h.b16 %v3796
        %v3933 = vunpack.c.l.b16 %v3797
        %v3934 = vunpack.c.h.b16 %v3797
        %v3935 = vunpack.c.l.b16 %v3798
        %v3936 = vunpack.c.h.b16 %v3798
        %v3937 = vunpack.c.l.b16 %v3799
        %v3938 = vunpack.c.h.b16 %v3799
        %v3939 = vunpack.c.l.b16 %v3800
        %v3940 = vunpack.c.h.b16 %v3800
        %v3941 = vunpack.c.l.b16 %v3801
        %v3942 = vunpack.c.h.b16 %v3801
        %v3943 = vunpack.c.l.b16 %v3802
        %v3944 = vunpack.c.h.b16 %v3802
        %v3945 = vunpack.c.l.b16 %v3803
        %v3946 = vunpack.c.h.b16 %v3803
        %v3947 = vunpack.c.l.b16 %v3804
        %v3948 = vunpack.c.h.b16 %v3804
        %v3949 = vunpack.c.l.b16 %v3805
        %v3950 = vunpack.c.h.b16 %v3805
        %v3951 = vunpack.c.l.b16 %v3806
        %v3952 = vunpack.c.h.b16 %v3806
        %v3953 = vunpack.c.l.b16 %v3807
        %v3954 = vunpack.c.h.b16 %v3807
        %v3955 = vunpack.c.l.b16 %v3808
        %v3956 = vunpack.c.h.b16 %v3808
        %v3957 = vunpack.c.l.b16 %v3809
        %v3958 = vunpack.c.h.b16 %v3809
        %v3959 = vunpack.c.l.b16 %v3810
        %v3960 = vunpack.c.h.b16 %v3810
        %v3961 = vunpack.c.l.b16 %v3811
        %v3962 = vunpack.c.h.b16 %v3811
        %v3963 = vunpack.c.l.b16 %v3812
        %v3964 = vunpack.c.h.b16 %v3812
        %v3965 = vunpack.c.l.b16 %v3813
        %v3966 = vunpack.c.h.b16 %v3813
        %v3967 = vunpack.c.l.b16 %v3814
        %v3968 = vunpack.c.h.b16 %v3814
        %v3969 = vunpack.c.l.b16 %v3815
        %v3970 = vunpack.c.h.b16 %v3815
        %v3971 = vunpack.c.l.b16 %v3816
        %v3972 = vunpack.c.h.b16 %v3816
        %v3973 = vunpack.c.l.b16 %v3817
        %v3974 = vunpack.c.h.b16 %v3817
        %v3975 = vunpack.c.l.b16 %v3818
        %v3976 = vunpack.c.h.b16 %v3818
        %v3977 = vunpack.c.l.b16 %v3819
        %v3978 = vunpack.c.h.b16 %v3819
        %v3979 = vunpack.c.l.b16 %v3820
        %v3980 = vunpack.c.h.b16 %v3820
        %v3981 = vunpack.c.l.b16 %v3821
        %v3982 = vunpack.c.h.b16 %v3821
        %v3983 = vpack.c.b16 %v3921, %v3919
        %v3984 = vpack.c.b16 %v3922, %v3920
        %v3985 = vpack.c.b16 %v3925, %v3923
        %v3986 = vpack.c.b16 %v3926, %v3924
        %v3987 = vpack.c.b16 %v3929, %v3927
        %v3988 = vpack.c.b16 %v3930, %v3928
        %v3989 = vpack.c.b16 %v3933, %v3931
        %v3990 = vpack.c.b16 %v3934, %v3932
        %v3991 = vpack.c.b16 %v3937, %v3935
        %v3992 = vpack.c.b16 %v3938, %v3936
        %v3993 = vpack.c.b16 %v3941, %v3939
        %v3994 = vpack.c.b16 %v3942, %v3940
        %v3995 = vpack.c.b16 %v3945, %v3943
        %v3996 = vpack.c.b16 %v3946, %v3944
        %v3997 = vpack.c.b16 %v3949, %v3947
        %v3998 = vpack.c.b16 %v3950, %v3948
        %v3999 = vpack.c.b16 %v3953, %v3951
        %v4000 = vpack.c.b16 %v3954, %v3952
        %v4001 = vpack.c.b16 %v3957, %v3955
        %v4002 = vpack.c.b16 %v3958, %v3956
        %v4003 = vpack.c.b16 %v3961, %v3959
        %v4004 = vpack.c.b16 %v3962, %v3960
        %v4005 = vpack.c.b16 %v3965, %v3963
        %v4006 = vpack.c.b16 %v3966, %v3964
        %v4007 = vpack.c.b16 %v3969, %v3967
        %v4008 = vpack.c.b16 %v3970, %v3968
        %v4009 = vpack.c.b16 %v3973, %v3971
        %v4010 = vpack.c.b16 %v3974, %v3972
        %v4011 = vpack.c.b16 %v3977, %v3975
        %v4012 = vpack.c.b16 %v3978, %v3976
        %v4013 = vpack.c.b16 %v3981, %v3979
        %v4014 = vpack.c.b16 %v3982, %v3980
        %v4079 = vunpack.c.l.b16 %v3855
        %v4080 = vunpack.c.l.b16 %v3856
        %v4081 = vunpack.c.l.b16 %v3857
        %v4082 = vunpack.c.l.b16 %v3858
        %v4083 = vunpack.c.l.b16 %v3859
        %v4084 = vunpack.c.l.b16 %v3860
        %v4085 = vunpack.c.l.b16 %v3861
        %v4086 = vunpack.c.l.b16 %v3862
        %v4087 = vunpack.c.l.b16 %v3863
        %v4088 = vunpack.c.l.b16 %v3864
        %v4089 = vunpack.c.l.b16 %v3865
        %v4090 = vunpack.c.l.b16 %v3866
        %v4091 = vunpack.c.l.b16 %v3867
        %v4092 = vunpack.c.l.b16 %v3868
        %v4093 = vunpack.c.l.b16 %v3869
        %v4094 = vunpack.c.l.b16 %v3870
        %v4095 = vunpack.c.l.b16 %v3871
        %v4096 = vunpack.c.l.b16 %v3872
        %v4097 = vunpack.c.l.b16 %v3873
        %v4098 = vunpack.c.l.b16 %v3874
        %v4099 = vunpack.c.l.b16 %v3875
        %v4100 = vunpack.c.l.b16 %v3876
        %v4101 = vunpack.c.l.b16 %v3877
        %v4102 = vunpack.c.l.b16 %v3878
        %v4103 = vunpack.c.l.b16 %v3879
        %v4104 = vunpack.c.l.b16 %v3880
        %v4105 = vunpack.c.l.b16 %v3881
        %v4106 = vunpack.c.l.b16 %v3882
        %v4107 = vunpack.c.l.b16 %v3883
        %v4108 = vunpack.c.l.b16 %v3884
        %v4109 = vunpack.c.l.b16 %v3885
        %v4110 = vunpack.c.l.b16 %v3886
        %v4111 = vpack.c.b16 %v4080, %v4079
        %v4112 = vpack.c.b16 %v4082, %v4081
        %v4113 = vpack.c.b16 %v4084, %v4083
        %v4114 = vpack.c.b16 %v4086, %v4085
        %v4115 = vpack.c.b16 %v4088, %v4087
        %v4116 = vpack.c.b16 %v4090, %v4089
        %v4117 = vpack.c.b16 %v4092, %v4091
        %v4118 = vpack.c.b16 %v4094, %v4093
        %v4119 = vpack.c.b16 %v4096, %v4095
        %v4120 = vpack.c.b16 %v4098, %v4097
        %v4121 = vpack.c.b16 %v4100, %v4099
        %v4122 = vpack.c.b16 %v4102, %v4101
        %v4123 = vpack.c.b16 %v4104, %v4103
        %v4124 = vpack.c.b16 %v4106, %v4105
        %v4125 = vpack.c.b16 %v4108, %v4107
        %v4126 = vpack.c.b16 %v4110, %v4109
        %4143 = vmatprep.subr.bf16.mxu0 0
        %4144 = vmatpush1.bf16.msra.mxu0 %v4111
        %4145 = vmatprep.subr.bf16.mxu0 0
        %4146 = vmatpush1.bf16.msra.mxu0 %v4112
        %4147 = vmatprep.subr.bf16.mxu0 0
        %4148 = vmatpush1.bf16.msra.mxu0 %v4113
        %4149 = vmatprep.subr.bf16.mxu0 0
        %4150 = vmatpush1.bf16.msra.mxu0 %v4114
        %4151 = vmatprep.subr.bf16.mxu0 0
        %4152 = vmatpush1.bf16.msra.mxu0 %v4115
        %4153 = vmatprep.subr.bf16.mxu0 0
        %4154 = vmatpush1.bf16.msra.mxu0 %v4116
        %4155 = vmatprep.subr.bf16.mxu0 0
        %4156 = vmatpush1.bf16.msra.mxu0 %v4117
        %4157 = vmatprep.subr.bf16.mxu0 0
        %4158 = vmatpush1.bf16.msra.mxu0 %v4118
        %4159 = vmatprep.subr.bf16.mxu0 0
        %4160 = vmatpush1.bf16.msra.mxu0 %v4119
        %4161 = vmatprep.subr.bf16.mxu0 0
        %4162 = vmatpush1.bf16.msra.mxu0 %v4120
        %4163 = vmatprep.subr.bf16.mxu0 0
        %4164 = vmatpush1.bf16.msra.mxu0 %v4121
        %4165 = vmatprep.subr.bf16.mxu0 0
        %4166 = vmatpush1.bf16.msra.mxu0 %v4122
        %4167 = vmatprep.subr.bf16.mxu0 0
        %4168 = vmatpush1.bf16.msra.mxu0 %v4123
        %4169 = vmatprep.subr.bf16.mxu0 0
        %4170 = vmatpush1.bf16.msra.mxu0 %v4124
        %4171 = vmatprep.subr.bf16.mxu0 0
        %4172 = vmatpush1.bf16.msra.mxu0 %v4125
        %4173 = vmatprep.subr.bf16.mxu0 0
        %4174 = vmatpush1.bf16.msra.mxu0 %v4126
        %4175 = vmatprep.mubr.bf16.mxu0 %v3984
        %4176 = vmatmul.mubr.bf16.gmra.mrb[0].mxu0 %v3983
        %v4177 = vpop.f32.mrb[0].mxu0
        %v4178 = vadd.f32 0.0, %v4177
        %v4179 = vpop.f32.mrb[0].mxu0
        %v4180 = vpop.f32.mrb[0].mxu0
        %v4181 = vadd.f32 0.0, %v4180
        %v4182 = vpop.f32.mrb[0].mxu0
        %4183 = vmatprep.mubr.bf16.mxu0 %v3986
        %4184 = vmatmul.mubr.bf16.gmra.mrb[0].mxu0 %v3985
        %v4185 = vpop.f32.mrb[0].mxu0
        %v4186 = vadd.f32 0.0, %v4185
        %v4187 = vpop.f32.mrb[0].mxu0
        %v4188 = vpop.f32.mrb[0].mxu0
        %v4189 = vadd.f32 0.0, %v4188
        %v4190 = vpop.f32.mrb[0].mxu0
        %4191 = vmatprep.mubr.bf16.mxu0 %v3988
        %4192 = vmatmul.mubr.bf16.gmra.mrb[0].mxu0 %v3987
        %v4193 = vpop.f32.mrb[0].mxu0
        %v4194 = vadd.f32 0.0, %v4193
        %v4195 = vpop.f32.mrb[0].mxu0
        %v4196 = vpop.f32.mrb[0].mxu0
        %v4197 = vadd.f32 0.0, %v4196
        %v4198 = vpop.f32.mrb[0].mxu0
        %4199 = vmatprep.mubr.bf16.mxu0 %v3990
        %4200 = vmatmul.mubr.bf16.gmra.mrb[0].mxu0 %v3989
        %v4201 = vpop.f32.mrb[0].mxu0
        %v4202 = vadd.f32 0.0, %v4201
        %v4203 = vpop.f32.mrb[0].mxu0
        %v4204 = vpop.f32.mrb[0].mxu0
        %v4205 = vadd.f32 0.0, %v4204
        %v4206 = vpop.f32.mrb[0].mxu0
        %4207 = vmatprep.mubr.bf16.mxu0 %v3992
        %4208 = vmatmul.mubr.bf16.gmra.mrb[0].mxu0 %v3991
        %v4209 = vpop.f32.mrb[0].mxu0
        %v4210 = vadd.f32 0.0, %v4209
        %v4211 = vpop.f32.mrb[0].mxu0
        %v4212 = vpop.f32.mrb[0].mxu0
        %v4213 = vadd.f32 0.0, %v4212
        %v4214 = vpop.f32.mrb[0].mxu0
        %4215 = vmatprep.mubr.bf16.mxu0 %v3994
        %4216 = vmatmul.mubr.bf16.gmra.mrb[0].mxu0 %v3993
        %v4217 = vpop.f32.mrb[0].mxu0
        %v4218 = vadd.f32 0.0, %v4217
        %v4219 = vpop.f32.mrb[0].mxu0
        %v4220 = vpop.f32.mrb[0].mxu0
        %v4221 = vadd.f32 0.0, %v4220
        %v4222 = vpop.f32.mrb[0].mxu0
        %4223 = vmatprep.mubr.bf16.mxu0 %v3996
        %4224 = vmatmul.mubr.bf16.gmra.mrb[0].mxu0 %v3995
        %v4225 = vpop.f32.mrb[0].mxu0
        %v4226 = vadd.f32 0.0, %v4225
        %v4227 = vpop.f32.mrb[0].mxu0
        %v4228 = vpop.f32.mrb[0].mxu0
        %v4229 = vadd.f32 0.0, %v4228
        %v4230 = vpop.f32.mrb[0].mxu0
        %4231 = vmatprep.mubr.bf16.mxu0 %v3998
        %4232 = vmatmul.mubr.bf16.gmra.mrb[0].mxu0 %v3997
        %v4233 = vpop.f32.mrb[0].mxu0
        %v4234 = vadd.f32 0.0, %v4233
        %v4235 = vpop.f32.mrb[0].mxu0
        %v4236 = vpop.f32.mrb[0].mxu0
        %v4237 = vadd.f32 0.0, %v4236
        %v4238 = vpop.f32.mrb[0].mxu0
        %4239 = vmatprep.mubr.bf16.mxu0 %v4000
        %4240 = vmatmul.mubr.bf16.gmra.mrb[0].mxu0 %v3999
        %v4241 = vpop.f32.mrb[0].mxu0
        %v4242 = vadd.f32 0.0, %v4241
        %v4243 = vpop.f32.mrb[0].mxu0
        %v4244 = vpop.f32.mrb[0].mxu0
        %v4245 = vadd.f32 0.0, %v4244
        %v4246 = vpop.f32.mrb[0].mxu0
        %4247 = vmatprep.mubr.bf16.mxu0 %v4002
        %4248 = vmatmul.mubr.bf16.gmra.mrb[0].mxu0 %v4001
        %v4249 = vpop.f32.mrb[0].mxu0
        %v4250 = vadd.f32 0.0, %v4249
        %v4251 = vpop.f32.mrb[0].mxu0
        %v4252 = vpop.f32.mrb[0].mxu0
        %v4253 = vadd.f32 0.0, %v4252
        %v4254 = vpop.f32.mrb[0].mxu0
        %4255 = vmatprep.mubr.bf16.mxu0 %v4004
        %4256 = vmatmul.mubr.bf16.gmra.mrb[0].mxu0 %v4003
        %v4257 = vpop.f32.mrb[0].mxu0
        %v4258 = vadd.f32 0.0, %v4257
        %v4259 = vpop.f32.mrb[0].mxu0
        %v4260 = vpop.f32.mrb[0].mxu0
        %v4261 = vadd.f32 0.0, %v4260
        %v4262 = vpop.f32.mrb[0].mxu0
        %4263 = vmatprep.mubr.bf16.mxu0 %v4006
        %4264 = vmatmul.mubr.bf16.gmra.mrb[0].mxu0 %v4005
        %v4265 = vpop.f32.mrb[0].mxu0
        %v4266 = vadd.f32 0.0, %v4265
        %v4267 = vpop.f32.mrb[0].mxu0
        %v4268 = vpop.f32.mrb[0].mxu0
        %v4269 = vadd.f32 0.0, %v4268
        %v4270 = vpop.f32.mrb[0].mxu0
        %4271 = vmatprep.mubr.bf16.mxu0 %v4008
        %4272 = vmatmul.mubr.bf16.gmra.mrb[0].mxu0 %v4007
        %v4273 = vpop.f32.mrb[0].mxu0
        %v4274 = vadd.f32 0.0, %v4273
        %v4275 = vpop.f32.mrb[0].mxu0
        %v4276 = vpop.f32.mrb[0].mxu0
        %v4277 = vadd.f32 0.0, %v4276
        %v4278 = vpop.f32.mrb[0].mxu0
        %4279 = vmatprep.mubr.bf16.mxu0 %v4010
        %4280 = vmatmul.mubr.bf16.gmra.mrb[0].mxu0 %v4009
        %v4281 = vpop.f32.mrb[0].mxu0
        %v4282 = vadd.f32 0.0, %v4281
        %v4283 = vpop.f32.mrb[0].mxu0
        %v4284 = vpop.f32.mrb[0].mxu0
        %v4285 = vadd.f32 0.0, %v4284
        %v4286 = vpop.f32.mrb[0].mxu0
        %4287 = vmatprep.mubr.bf16.mxu0 %v4012
        %4288 = vmatmul.mubr.bf16.gmra.mrb[0].mxu0 %v4011
        %v4289 = vpop.f32.mrb[0].mxu0
        %v4290 = vadd.f32 0.0, %v4289
        %v4291 = vpop.f32.mrb[0].mxu0
        %v4292 = vpop.f32.mrb[0].mxu0
        %v4293 = vadd.f32 0.0, %v4292
        %v4294 = vpop.f32.mrb[0].mxu0
        %4295 = vmatprep.mubr.bf16.mxu0 %v4014
        %4296 = vmatmul.mubr.bf16.gmra.mrb[0].mxu0 %v4013
        %v4297 = vpop.f32.mrb[0].mxu0
        %v4298 = vadd.f32 0.0, %v4297
        %v4299 = vpop.f32.mrb[0].mxu0
        %v4300 = vpop.f32.mrb[0].mxu0
        %v4301 = vadd.f32 0.0, %v4300
        %v4302 = vpop.f32.mrb[0].mxu0
        %4303 = vdwg.mxu0
        %v4304 = vadd.f32 %v3822, %v4178
        %v4305 = vadd.f32 %v3823, %v4181
        %v4306 = vadd.f32 %v3824, %v4186
        %v4307 = vadd.f32 %v3825, %v4189
        %v4308 = vadd.f32 %v3826, %v4194
        %v4309 = vadd.f32 %v3827, %v4197
        %v4310 = vadd.f32 %v3828, %v4202
        %v4311 = vadd.f32 %v3829, %v4205
        %v4312 = vadd.f32 %v3830, %v4210
        %v4313 = vadd.f32 %v3831, %v4213
        %v4314 = vadd.f32 %v3832, %v4218
        %v4315 = vadd.f32 %v3833, %v4221
        %v4316 = vadd.f32 %v3834, %v4226
        %v4317 = vadd.f32 %v3835, %v4229
        %v4318 = vadd.f32 %v3836, %v4234
        %v4319 = vadd.f32 %v3837, %v4237
        %v4320 = vadd.f32 %v3838, %v4242
        %v4321 = vadd.f32 %v3839, %v4245
        %v4322 = vadd.f32 %v3840, %v4250
        %v4323 = vadd.f32 %v3841, %v4253
        %v4324 = vadd.f32 %v3842, %v4258
        %v4325 = vadd.f32 %v3843, %v4261
        %v4326 = vadd.f32 %v3844, %v4266
        %v4327 = vadd.f32 %v3845, %v4269
        %v4328 = vadd.f32 %v3846, %v4274
        %v4329 = vadd.f32 %v3847, %v4277
        %v4330 = vadd.f32 %v3848, %v4282
        %v4331 = vadd.f32 %v3849, %v4285
        %v4332 = vadd.f32 %v3850, %v4290
        %v4333 = vadd.f32 %v3851, %v4293
        %v4334 = vadd.f32 %v3852, %v4298
        %v4335 = vadd.f32 %v3853, %v4301
        %4336 = vst [vmem:[#allocation2] sm:$0xff] %v4304
        %4337 = vst [vmem:[#allocation2 + $0x8] sm:$0xff] %v4305
        %4338 = vst [vmem:[#allocation2 + $0x10] sm:$0xff] %v4306
        %4339 = vst [vmem:[#allocation2 + $0x18] sm:$0xff] %v4307
        %4340 = vst [vmem:[#allocation2 + $0x20] sm:$0xff] %v4308
        %4341 = vst [vmem:[#allocation2 + $0x28] sm:$0xff] %v4309
        %4342 = vst [vmem:[#allocation2 + $0x30] sm:$0xff] %v4310
        %4343 = vst [vmem:[#allocation2 + $0x38] sm:$0xff] %v4311
        %4344 = vst [vmem:[#allocation2 + $0x40] sm:$0xff] %v4312
        %4345 = vst [vmem:[#allocation2 + $0x48] sm:$0xff] %v4313
        %4346 = vst [vmem:[#allocation2 + $0x50] sm:$0xff] %v4314
        %4347 = vst [vmem:[#allocation2 + $0x58] sm:$0xff] %v4315
        %4348 = vst [vmem:[#allocation2 + $0x60] sm:$0xff] %v4316
        %4349 = vst [vmem:[#allocation2 + $0x68] sm:$0xff] %v4317
        %4350 = vst [vmem:[#allocation2 + $0x70] sm:$0xff] %v4318
        %4351 = vst [vmem:[#allocation2 + $0x78] sm:$0xff] %v4319
        %4352 = vst [vmem:[#allocation2 + $0x80] sm:$0xff] %v4320
        %4353 = vst [vmem:[#allocation2 + $0x88] sm:$0xff] %v4321
        %4354 = vst [vmem:[#allocation2 + $0x90] sm:$0xff] %v4322
        %4355 = vst [vmem:[#allocation2 + $0x98] sm:$0xff] %v4323
        %4356 = vst [vmem:[#allocation2 + $0xa0] sm:$0xff] %v4324
        %4357 = vst [vmem:[#allocation2 + $0xa8] sm:$0xff] %v4325
        %4358 = vst [vmem:[#allocation2 + $0xb0] sm:$0xff] %v4326
        %4359 = vst [vmem:[#allocation2 + $0xb8] sm:$0xff] %v4327
        %4360 = vst [vmem:[#allocation2 + $0xc0] sm:$0xff] %v4328
        %4361 = vst [vmem:[#allocation2 + $0xc8] sm:$0xff] %v4329
        %4362 = vst [vmem:[#allocation2 + $0xd0] sm:$0xff] %v4330
        %4363 = vst [vmem:[#allocation2 + $0xd8] sm:$0xff] %v4331
        %4364 = vst [vmem:[#allocation2 + $0xe0] sm:$0xff] %v4332
        %4365 = vst [vmem:[#allocation2 + $0xe8] sm:$0xff] %v4333
        %4366 = vst [vmem:[#allocation2 + $0xf0] sm:$0xff] %v4334
        %4367 = vst [vmem:[#allocation2 + $0xf8] sm:$0xff] %v4335
        %v4368 = vld [vmem:[%s284 + $0x20] sm:$0xff]
        %v4369 = vld [vmem:[%s284 + $0x28] sm:$0xff]
        %v4370 = vld [vmem:[%s284 + $0x30] sm:$0xff]
        %v4371 = vld [vmem:[%s284 + $0x38] sm:$0xff]
        %v4372 = vld [vmem:[%s284 + $0x40] sm:$0xff]
        %v4373 = vld [vmem:[%s284 + $0x48] sm:$0xff]
        %v4374 = vld [vmem:[%s284 + $0x50] sm:$0xff]
        %v4375 = vld [vmem:[%s284 + $0x58] sm:$0xff]
        %v4376 = vld [vmem:[%s284 + $0x60] sm:$0xff]
        %v4377 = vld [vmem:[%s284 + $0x68] sm:$0xff]
        %v4378 = vld [vmem:[%s284 + $0x70] sm:$0xff]
        %v4379 = vld [vmem:[%s284 + $0x78] sm:$0xff]
        %v4380 = vld [vmem:[%s284 + $0x80] sm:$0xff]
        %v4381 = vld [vmem:[%s284 + $0x88] sm:$0xff]
        %v4382 = vld [vmem:[%s284 + $0x90] sm:$0xff]
        %v4383 = vld [vmem:[%s284 + $0x98] sm:$0xff]
        %v4384 = vld [vmem:[%s284 + $0xa0] sm:$0xff]
        %v4385 = vld [vmem:[%s284 + $0xa8] sm:$0xff]
        %v4386 = vld [vmem:[%s284 + $0xb0] sm:$0xff]
        %v4387 = vld [vmem:[%s284 + $0xb8] sm:$0xff]
        %v4388 = vld [vmem:[%s284 + $0xc0] sm:$0xff]
        %v4389 = vld [vmem:[%s284 + $0xc8] sm:$0xff]
        %v4390 = vld [vmem:[%s284 + $0xd0] sm:$0xff]
        %v4391 = vld [vmem:[%s284 + $0xd8] sm:$0xff]
        %v4392 = vld [vmem:[%s284 + $0xe0] sm:$0xff]
        %v4393 = vld [vmem:[%s284 + $0xe8] sm:$0xff]
        %v4394 = vld [vmem:[%s284 + $0xf0] sm:$0xff]
        %v4395 = vld [vmem:[%s284 + $0xf8] sm:$0xff]
        %v4396 = vld [vmem:[%s284 + $0x100] sm:$0xff]
        %v4397 = vld [vmem:[%s284 + $0x108] sm:$0xff]
        %v4398 = vld [vmem:[%s284 + $0x110] sm:$0xff]
        %v4399 = vld [vmem:[%s284 + $0x118] sm:$0xff]
        %v4400 = vld [vmem:[#allocation2] sm:$0xff]
        %v4401 = vld [vmem:[#allocation2 + $0x8] sm:$0xff]
        %v4402 = vld [vmem:[#allocation2 + $0x10] sm:$0xff]
        %v4403 = vld [vmem:[#allocation2 + $0x18] sm:$0xff]
        %v4404 = vld [vmem:[#allocation2 + $0x20] sm:$0xff]
        %v4405 = vld [vmem:[#allocation2 + $0x28] sm:$0xff]
        %v4406 = vld [vmem:[#allocation2 + $0x30] sm:$0xff]
        %v4407 = vld [vmem:[#allocation2 + $0x38] sm:$0xff]
        %v4408 = vld [vmem:[#allocation2 + $0x40] sm:$0xff]
        %v4409 = vld [vmem:[#allocation2 + $0x48] sm:$0xff]
        %v4410 = vld [vmem:[#allocation2 + $0x50] sm:$0xff]
        %v4411 = vld [vmem:[#allocation2 + $0x58] sm:$0xff]
        %v4412 = vld [vmem:[#allocation2 + $0x60] sm:$0xff]
        %v4413 = vld [vmem:[#allocation2 + $0x68] sm:$0xff]
        %v4414 = vld [vmem:[#allocation2 + $0x70] sm:$0xff]
        %v4415 = vld [vmem:[#allocation2 + $0x78] sm:$0xff]
        %v4416 = vld [vmem:[#allocation2 + $0x80] sm:$0xff]
        %v4417 = vld [vmem:[#allocation2 + $0x88] sm:$0xff]
        %v4418 = vld [vmem:[#allocation2 + $0x90] sm:$0xff]
        %v4419 = vld [vmem:[#allocation2 + $0x98] sm:$0xff]
        %v4420 = vld [vmem:[#allocation2 + $0xa0] sm:$0xff]
        %v4421 = vld [vmem:[#allocation2 + $0xa8] sm:$0xff]
        %v4422 = vld [vmem:[#allocation2 + $0xb0] sm:$0xff]
        %v4423 = vld [vmem:[#allocation2 + $0xb8] sm:$0xff]
        %v4424 = vld [vmem:[#allocation2 + $0xc0] sm:$0xff]
        %v4425 = vld [vmem:[#allocation2 + $0xc8] sm:$0xff]
        %v4426 = vld [vmem:[#allocation2 + $0xd0] sm:$0xff]
        %v4427 = vld [vmem:[#allocation2 + $0xd8] sm:$0xff]
        %v4428 = vld [vmem:[#allocation2 + $0xe0] sm:$0xff]
        %v4429 = vld [vmem:[#allocation2 + $0xe8] sm:$0xff]
        %v4430 = vld [vmem:[#allocation2 + $0xf0] sm:$0xff]
        %v4431 = vld [vmem:[#allocation2 + $0xf8] sm:$0xff]
        %s4432 = scalar_lea.vmem %s3, 896
        %v4433 = vld [vmem:[%s4432] sm:$0xf]
        %v4434 = vld [vmem:[%s4432 + $0x4] sm:$0xf]
        %v4435 = vld [vmem:[%s4432 + $0x8] sm:$0xf]
        %v4436 = vld [vmem:[%s4432 + $0xc] sm:$0xf]
        %v4437 = vld [vmem:[%s4432 + $0x10] sm:$0xf]
        %v4438 = vld [vmem:[%s4432 + $0x14] sm:$0xf]
        %v4439 = vld [vmem:[%s4432 + $0x18] sm:$0xf]
        %v4440 = vld [vmem:[%s4432 + $0x1c] sm:$0xf]
        %v4441 = vld [vmem:[%s4432 + $0x20] sm:$0xf]
        %v4442 = vld [vmem:[%s4432 + $0x24] sm:$0xf]
        %v4443 = vld [vmem:[%s4432 + $0x28] sm:$0xf]
        %v4444 = vld [vmem:[%s4432 + $0x2c] sm:$0xf]
        %v4445 = vld [vmem:[%s4432 + $0x30] sm:$0xf]
        %v4446 = vld [vmem:[%s4432 + $0x34] sm:$0xf]
        %v4447 = vld [vmem:[%s4432 + $0x38] sm:$0xf]
        %v4448 = vld [vmem:[%s4432 + $0x3c] sm:$0xf]
        %v4449 = vld [vmem:[%s4432 + $0x40] sm:$0xf]
        %v4450 = vld [vmem:[%s4432 + $0x44] sm:$0xf]
        %v4451 = vld [vmem:[%s4432 + $0x48] sm:$0xf]
        %v4452 = vld [vmem:[%s4432 + $0x4c] sm:$0xf]
        %v4453 = vld [vmem:[%s4432 + $0x50] sm:$0xf]
        %v4454 = vld [vmem:[%s4432 + $0x54] sm:$0xf]
        %v4455 = vld [vmem:[%s4432 + $0x58] sm:$0xf]
        %v4456 = vld [vmem:[%s4432 + $0x5c] sm:$0xf]
        %v4457 = vld [vmem:[%s4432 + $0x60] sm:$0xf]
        %v4458 = vld [vmem:[%s4432 + $0x64] sm:$0xf]
        %v4459 = vld [vmem:[%s4432 + $0x68] sm:$0xf]
        %v4460 = vld [vmem:[%s4432 + $0x6c] sm:$0xf]
        %v4461 = vld [vmem:[%s4432 + $0x70] sm:$0xf]
        %v4462 = vld [vmem:[%s4432 + $0x74] sm:$0xf]
        %v4463 = vld [vmem:[%s4432 + $0x78] sm:$0xf]
        %v4464 = vld [vmem:[%s4432 + $0x7c] sm:$0xf]
        %v4497 = vunpack.c.l.b16 %v4368
        %v4498 = vunpack.c.h.b16 %v4368
        %v4499 = vunpack.c.l.b16 %v4369
        %v4500 = vunpack.c.h.b16 %v4369
        %v4501 = vunpack.c.l.b16 %v4370
        %v4502 = vunpack.c.h.b16 %v4370
        %v4503 = vunpack.c.l.b16 %v4371
        %v4504 = vunpack.c.h.b16 %v4371
        %v4505 = vunpack.c.l.b16 %v4372
        %v4506 = vunpack.c.h.b16 %v4372
        %v4507 = vunpack.c.l.b16 %v4373
        %v4508 = vunpack.c.h.b16 %v4373
        %v4509 = vunpack.c.l.b16 %v4374
        %v4510 = vunpack.c.h.b16 %v4374
        %v4511 = vunpack.c.l.b16 %v4375
        %v4512 = vunpack.c.h.b16 %v4375
        %v4513 = vunpack.c.l.b16 %v4376
        %v4514 = vunpack.c.h.b16 %v4376
        %v4515 = vunpack.c.l.b16 %v4377
        %v4516 = vunpack.c.h.b16 %v4377
        %v4517 = vunpack.c.l.b16 %v4378
        %v4518 = vunpack.c.h.b16 %v4378
        %v4519 = vunpack.c.l.b16 %v4379
        %v4520 = vunpack.c.h.b16 %v4379
        %v4521 = vunpack.c.l.b16 %v4380
        %v4522 = vunpack.c.h.b16 %v4380
        %v4523 = vunpack.c.l.b16 %v4381
        %v4524 = vunpack.c.h.b16 %v4381
        %v4525 = vunpack.c.l.b16 %v4382
        %v4526 = vunpack.c.h.b16 %v4382
        %v4527 = vunpack.c.l.b16 %v4383
        %v4528 = vunpack.c.h.b16 %v4383
        %v4529 = vunpack.c.l.b16 %v4384
        %v4530 = vunpack.c.h.b16 %v4384
        %v4531 = vunpack.c.l.b16 %v4385
        %v4532 = vunpack.c.h.b16 %v4385
        %v4533 = vunpack.c.l.b16 %v4386
        %v4534 = vunpack.c.h.b16 %v4386
        %v4535 = vunpack.c.l.b16 %v4387
        %v4536 = vunpack.c.h.b16 %v4387
        %v4537 = vunpack.c.l.b16 %v4388
        %v4538 = vunpack.c.h.b16 %v4388
        %v4539 = vunpack.c.l.b16 %v4389
        %v4540 = vunpack.c.h.b16 %v4389
        %v4541 = vunpack.c.l.b16 %v4390
        %v4542 = vunpack.c.h.b16 %v4390
        %v4543 = vunpack.c.l.b16 %v4391
        %v4544 = vunpack.c.h.b16 %v4391
        %v4545 = vunpack.c.l.b16 %v4392
        %v4546 = vunpack.c.h.b16 %v4392
        %v4547 = vunpack.c.l.b16 %v4393
        %v4548 = vunpack.c.h.b16 %v4393
        %v4549 = vunpack.c.l.b16 %v4394
        %v4550 = vunpack.c.h.b16 %v4394
        %v4551 = vunpack.c.l.b16 %v4395
        %v4552 = vunpack.c.h.b16 %v4395
        %v4553 = vunpack.c.l.b16 %v4396
        %v4554 = vunpack.c.h.b16 %v4396
        %v4555 = vunpack.c.l.b16 %v4397
        %v4556 = vunpack.c.h.b16 %v4397
        %v4557 = vunpack.c.l.b16 %v4398
        %v4558 = vunpack.c.h.b16 %v4398
        %v4559 = vunpack.c.l.b16 %v4399
        %v4560 = vunpack.c.h.b16 %v4399
        %v4561 = vpack.c.b16 %v4499, %v4497
        %v4562 = vpack.c.b16 %v4500, %v4498
        %v4563 = vpack.c.b16 %v4503, %v4501
        %v4564 = vpack.c.b16 %v4504, %v4502
        %v4565 = vpack.c.b16 %v4507, %v4505
        %v4566 = vpack.c.b16 %v4508, %v4506
        %v4567 = vpack.c.b16 %v4511, %v4509
        %v4568 = vpack.c.b16 %v4512, %v4510
        %v4569 = vpack.c.b16 %v4515, %v4513
        %v4570 = vpack.c.b16 %v4516, %v4514
        %v4571 = vpack.c.b16 %v4519, %v4517
        %v4572 = vpack.c.b16 %v4520, %v4518
        %v4573 = vpack.c.b16 %v4523, %v4521
        %v4574 = vpack.c.b16 %v4524, %v4522
        %v4575 = vpack.c.b16 %v4527, %v4525
        %v4576 = vpack.c.b16 %v4528, %v4526
        %v4577 = vpack.c.b16 %v4531, %v4529
        %v4578 = vpack.c.b16 %v4532, %v4530
        %v4579 = vpack.c.b16 %v4535, %v4533
        %v4580 = vpack.c.b16 %v4536, %v4534
        %v4581 = vpack.c.b16 %v4539, %v4537
        %v4582 = vpack.c.b16 %v4540, %v4538
        %v4583 = vpack.c.b16 %v4543, %v4541
        %v4584 = vpack.c.b16 %v4544, %v4542
        %v4585 = vpack.c.b16 %v4547, %v4545
        %v4586 = vpack.c.b16 %v4548, %v4546
        %v4587 = vpack.c.b16 %v4551, %v4549
        %v4588 = vpack.c.b16 %v4552, %v4550
        %v4589 = vpack.c.b16 %v4555, %v4553
        %v4590 = vpack.c.b16 %v4556, %v4554
        %v4591 = vpack.c.b16 %v4559, %v4557
        %v4592 = vpack.c.b16 %v4560, %v4558
        %v4657 = vunpack.c.l.b16 %v4433
        %v4658 = vunpack.c.l.b16 %v4434
        %v4659 = vunpack.c.l.b16 %v4435
        %v4660 = vunpack.c.l.b16 %v4436
        %v4661 = vunpack.c.l.b16 %v4437
        %v4662 = vunpack.c.l.b16 %v4438
        %v4663 = vunpack.c.l.b16 %v4439
        %v4664 = vunpack.c.l.b16 %v4440
        %v4665 = vunpack.c.l.b16 %v4441
        %v4666 = vunpack.c.l.b16 %v4442
        %v4667 = vunpack.c.l.b16 %v4443
        %v4668 = vunpack.c.l.b16 %v4444
        %v4669 = vunpack.c.l.b16 %v4445
        %v4670 = vunpack.c.l.b16 %v4446
        %v4671 = vunpack.c.l.b16 %v4447
        %v4672 = vunpack.c.l.b16 %v4448
        %v4673 = vunpack.c.l.b16 %v4449
        %v4674 = vunpack.c.l.b16 %v4450
        %v4675 = vunpack.c.l.b16 %v4451
        %v4676 = vunpack.c.l.b16 %v4452
        %v4677 = vunpack.c.l.b16 %v4453
        %v4678 = vunpack.c.l.b16 %v4454
        %v4679 = vunpack.c.l.b16 %v4455
        %v4680 = vunpack.c.l.b16 %v4456
        %v4681 = vunpack.c.l.b16 %v4457
        %v4682 = vunpack.c.l.b16 %v4458
        %v4683 = vunpack.c.l.b16 %v4459
        %v4684 = vunpack.c.l.b16 %v4460
        %v4685 = vunpack.c.l.b16 %v4461
        %v4686 = vunpack.c.l.b16 %v4462
        %v4687 = vunpack.c.l.b16 %v4463
        %v4688 = vunpack.c.l.b16 %v4464
        %v4689 = vpack.c.b16 %v4658, %v4657
        %v4690 = vpack.c.b16 %v4660, %v4659
        %v4691 = vpack.c.b16 %v4662, %v4661
        %v4692 = vpack.c.b16 %v4664, %v4663
        %v4693 = vpack.c.b16 %v4666, %v4665
        %v4694 = vpack.c.b16 %v4668, %v4667
        %v4695 = vpack.c.b16 %v4670, %v4669
        %v4696 = vpack.c.b16 %v4672, %v4671
        %v4697 = vpack.c.b16 %v4674, %v4673
        %v4698 = vpack.c.b16 %v4676, %v4675
        %v4699 = vpack.c.b16 %v4678, %v4677
        %v4700 = vpack.c.b16 %v4680, %v4679
        %v4701 = vpack.c.b16 %v4682, %v4681
        %v4702 = vpack.c.b16 %v4684, %v4683
        %v4703 = vpack.c.b16 %v4686, %v4685
        %v4704 = vpack.c.b16 %v4688, %v4687
        %4721 = vmatprep.subr.bf16.mxu0 0
        %4722 = vmatpush1.bf16.msra.mxu0 %v4689
        %4723 = vmatprep.subr.bf16.mxu0 0
        %4724 = vmatpush1.bf16.msra.mxu0 %v4690
        %4725 = vmatprep.subr.bf16.mxu0 0
        %4726 = vmatpush1.bf16.msra.mxu0 %v4691
        %4727 = vmatprep.subr.bf16.mxu0 0
        %4728 = vmatpush1.bf16.msra.mxu0 %v4692
        %4729 = vmatprep.subr.bf16.mxu0 0
        %4730 = vmatpush1.bf16.msra.mxu0 %v4693
        %4731 = vmatprep.subr.bf16.mxu0 0
        %4732 = vmatpush1.bf16.msra.mxu0 %v4694
        %4733 = vmatprep.subr.bf16.mxu0 0
        %4734 = vmatpush1.bf16.msra.mxu0 %v4695
        %4735 = vmatprep.subr.bf16.mxu0 0
        %4736 = vmatpush1.bf16.msra.mxu0 %v4696
        %4737 = vmatprep.subr.bf16.mxu0 0
        %4738 = vmatpush1.bf16.msra.mxu0 %v4697
        %4739 = vmatprep.subr.bf16.mxu0 0
        %4740 = vmatpush1.bf16.msra.mxu0 %v4698
        %4741 = vmatprep.subr.bf16.mxu0 0
        %4742 = vmatpush1.bf16.msra.mxu0 %v4699
        %4743 = vmatprep.subr.bf16.mxu0 0
        %4744 = vmatpush1.bf16.msra.mxu0 %v4700
        %4745 = vmatprep.subr.bf16.mxu0 0
        %4746 = vmatpush1.bf16.msra.mxu0 %v4701
        %4747 = vmatprep.subr.bf16.mxu0 0
        %4748 = vmatpush1.bf16.msra.mxu0 %v4702
        %4749 = vmatprep.subr.bf16.mxu0 0
        %4750 = vmatpush1.bf16.msra.mxu0 %v4703
        %4751 = vmatprep.subr.bf16.mxu0 0
        %4752 = vmatpush1.bf16.msra.mxu0 %v4704
        %4753 = vmatprep.mubr.bf16.mxu0 %v4562
        %4754 = vmatmul.mubr.bf16.gmra.mrb[0].mxu0 %v4561
        %v4755 = vpop.f32.mrb[0].mxu0
        %v4756 = vadd.f32 0.0, %v4755
        %v4757 = vpop.f32.mrb[0].mxu0
        %v4758 = vpop.f32.mrb[0].mxu0
        %v4759 = vadd.f32 0.0, %v4758
        %v4760 = vpop.f32.mrb[0].mxu0
        %4761 = vmatprep.mubr.bf16.mxu0 %v4564
        %4762 = vmatmul.mubr.bf16.gmra.mrb[0].mxu0 %v4563
        %v4763 = vpop.f32.mrb[0].mxu0
        %v4764 = vadd.f32 0.0, %v4763
        %v4765 = vpop.f32.mrb[0].mxu0
        %v4766 = vpop.f32.mrb[0].mxu0
        %v4767 = vadd.f32 0.0, %v4766
        %v4768 = vpop.f32.mrb[0].mxu0
        %4769 = vmatprep.mubr.bf16.mxu0 %v4566
        %4770 = vmatmul.mubr.bf16.gmra.mrb[0].mxu0 %v4565
        %v4771 = vpop.f32.mrb[0].mxu0
        %v4772 = vadd.f32 0.0, %v4771
        %v4773 = vpop.f32.mrb[0].mxu0
        %v4774 = vpop.f32.mrb[0].mxu0
        %v4775 = vadd.f32 0.0, %v4774
        %v4776 = vpop.f32.mrb[0].mxu0
        %4777 = vmatprep.mubr.bf16.mxu0 %v4568
        %4778 = vmatmul.mubr.bf16.gmra.mrb[0].mxu0 %v4567
        %v4779 = vpop.f32.mrb[0].mxu0
        %v4780 = vadd.f32 0.0, %v4779
        %v4781 = vpop.f32.mrb[0].mxu0
        %v4782 = vpop.f32.mrb[0].mxu0
        %v4783 = vadd.f32 0.0, %v4782
        %v4784 = vpop.f32.mrb[0].mxu0
        %4785 = vmatprep.mubr.bf16.mxu0 %v4570
        %4786 = vmatmul.mubr.bf16.gmra.mrb[0].mxu0 %v4569
        %v4787 = vpop.f32.mrb[0].mxu0
        %v4788 = vadd.f32 0.0, %v4787
        %v4789 = vpop.f32.mrb[0].mxu0
        %v4790 = vpop.f32.mrb[0].mxu0
        %v4791 = vadd.f32 0.0, %v4790
        %v4792 = vpop.f32.mrb[0].mxu0
        %4793 = vmatprep.mubr.bf16.mxu0 %v4572
        %4794 = vmatmul.mubr.bf16.gmra.mrb[0].mxu0 %v4571
        %v4795 = vpop.f32.mrb[0].mxu0
        %v4796 = vadd.f32 0.0, %v4795
        %v4797 = vpop.f32.mrb[0].mxu0
        %v4798 = vpop.f32.mrb[0].mxu0
        %v4799 = vadd.f32 0.0, %v4798
        %v4800 = vpop.f32.mrb[0].mxu0
        %4801 = vmatprep.mubr.bf16.mxu0 %v4574
        %4802 = vmatmul.mubr.bf16.gmra.mrb[0].mxu0 %v4573
        %v4803 = vpop.f32.mrb[0].mxu0
        %v4804 = vadd.f32 0.0, %v4803
        %v4805 = vpop.f32.mrb[0].mxu0
        %v4806 = vpop.f32.mrb[0].mxu0
        %v4807 = vadd.f32 0.0, %v4806
        %v4808 = vpop.f32.mrb[0].mxu0
        %4809 = vmatprep.mubr.bf16.mxu0 %v4576
        %4810 = vmatmul.mubr.bf16.gmra.mrb[0].mxu0 %v4575
        %v4811 = vpop.f32.mrb[0].mxu0
        %v4812 = vadd.f32 0.0, %v4811
        %v4813 = vpop.f32.mrb[0].mxu0
        %v4814 = vpop.f32.mrb[0].mxu0
        %v4815 = vadd.f32 0.0, %v4814
        %v4816 = vpop.f32.mrb[0].mxu0
        %4817 = vmatprep.mubr.bf16.mxu0 %v4578
        %4818 = vmatmul.mubr.bf16.gmra.mrb[0].mxu0 %v4577
        %v4819 = vpop.f32.mrb[0].mxu0
        %v4820 = vadd.f32 0.0, %v4819
        %v4821 = vpop.f32.mrb[0].mxu0
        %v4822 = vpop.f32.mrb[0].mxu0
        %v4823 = vadd.f32 0.0, %v4822
        %v4824 = vpop.f32.mrb[0].mxu0
        %4825 = vmatprep.mubr.bf16.mxu0 %v4580
        %4826 = vmatmul.mubr.bf16.gmra.mrb[0].mxu0 %v4579
        %v4827 = vpop.f32.mrb[0].mxu0
        %v4828 = vadd.f32 0.0, %v4827
        %v4829 = vpop.f32.mrb[0].mxu0
        %v4830 = vpop.f32.mrb[0].mxu0
        %v4831 = vadd.f32 0.0, %v4830
        %v4832 = vpop.f32.mrb[0].mxu0
        %4833 = vmatprep.mubr.bf16.mxu0 %v4582
        %4834 = vmatmul.mubr.bf16.gmra.mrb[0].mxu0 %v4581
        %v4835 = vpop.f32.mrb[0].mxu0
        %v4836 = vadd.f32 0.0, %v4835
        %v4837 = vpop.f32.mrb[0].mxu0
        %v4838 = vpop.f32.mrb[0].mxu0
        %v4839 = vadd.f32 0.0, %v4838
        %v4840 = vpop.f32.mrb[0].mxu0
        %4841 = vmatprep.mubr.bf16.mxu0 %v4584
        %4842 = vmatmul.mubr.bf16.gmra.mrb[0].mxu0 %v4583
        %v4843 = vpop.f32.mrb[0].mxu0
        %v4844 = vadd.f32 0.0, %v4843
        %v4845 = vpop.f32.mrb[0].mxu0
        %v4846 = vpop.f32.mrb[0].mxu0
        %v4847 = vadd.f32 0.0, %v4846
        %v4848 = vpop.f32.mrb[0].mxu0
        %4849 = vmatprep.mubr.bf16.mxu0 %v4586
        %4850 = vmatmul.mubr.bf16.gmra.mrb[0].mxu0 %v4585
        %v4851 = vpop.f32.mrb[0].mxu0
        %v4852 = vadd.f32 0.0, %v4851
        %v4853 = vpop.f32.mrb[0].mxu0
        %v4854 = vpop.f32.mrb[0].mxu0
        %v4855 = vadd.f32 0.0, %v4854
        %v4856 = vpop.f32.mrb[0].mxu0
        %4857 = vmatprep.mubr.bf16.mxu0 %v4588
        %4858 = vmatmul.mubr.bf16.gmra.mrb[0].mxu0 %v4587
        %v4859 = vpop.f32.mrb[0].mxu0
        %v4860 = vadd.f32 0.0, %v4859
        %v4861 = vpop.f32.mrb[0].mxu0
        %v4862 = vpop.f32.mrb[0].mxu0
        %v4863 = vadd.f32 0.0, %v4862
        %v4864 = vpop.f32.mrb[0].mxu0
        %4865 = vmatprep.mubr.bf16.mxu0 %v4590
        %4866 = vmatmul.mubr.bf16.gmra.mrb[0].mxu0 %v4589
        %v4867 = vpop.f32.mrb[0].mxu0
        %v4868 = vadd.f32 0.0, %v4867
        %v4869 = vpop.f32.mrb[0].mxu0
        %v4870 = vpop.f32.mrb[0].mxu0
        %v4871 = vadd.f32 0.0, %v4870
        %v4872 = vpop.f32.mrb[0].mxu0
        %4873 = vmatprep.mubr.bf16.mxu0 %v4592
        %4874 = vmatmul.mubr.bf16.gmra.mrb[0].mxu0 %v4591
        %v4875 = vpop.f32.mrb[0].mxu0
        %v4876 = vadd.f32 0.0, %v4875
        %v4877 = vpop.f32.mrb[0].mxu0
        %v4878 = vpop.f32.mrb[0].mxu0
        %v4879 = vadd.f32 0.0, %v4878
        %v4880 = vpop.f32.mrb[0].mxu0
        %4881 = vdwg.mxu0
        %v4882 = vadd.f32 %v4400, %v4756
        %v4883 = vadd.f32 %v4401, %v4759
        %v4884 = vadd.f32 %v4402, %v4764
        %v4885 = vadd.f32 %v4403, %v4767
        %v4886 = vadd.f32 %v4404, %v4772
        %v4887 = vadd.f32 %v4405, %v4775
        %v4888 = vadd.f32 %v4406, %v4780
        %v4889 = vadd.f32 %v4407, %v4783
        %v4890 = vadd.f32 %v4408, %v4788
        %v4891 = vadd.f32 %v4409, %v4791
        %v4892 = vadd.f32 %v4410, %v4796
        %v4893 = vadd.f32 %v4411, %v4799
        %v4894 = vadd.f32 %v4412, %v4804
        %v4895 = vadd.f32 %v4413, %v4807
        %v4896 = vadd.f32 %v4414, %v4812
        %v4897 = vadd.f32 %v4415, %v4815
        %v4898 = vadd.f32 %v4416, %v4820
        %v4899 = vadd.f32 %v4417, %v4823
        %v4900 = vadd.f32 %v4418, %v4828
        %v4901 = vadd.f32 %v4419, %v4831
        %v4902 = vadd.f32 %v4420, %v4836
        %v4903 = vadd.f32 %v4421, %v4839
        %v4904 = vadd.f32 %v4422, %v4844
        %v4905 = vadd.f32 %v4423, %v4847
        %v4906 = vadd.f32 %v4424, %v4852
        %v4907 = vadd.f32 %v4425, %v4855
        %v4908 = vadd.f32 %v4426, %v4860
        %v4909 = vadd.f32 %v4427, %v4863
        %v4910 = vadd.f32 %v4428, %v4868
        %v4911 = vadd.f32 %v4429, %v4871
        %v4912 = vadd.f32 %v4430, %v4876
        %v4913 = vadd.f32 %v4431, %v4879
        %4914 = vst [vmem:[#allocation2] sm:$0xff] %v4882
        %4915 = vst [vmem:[#allocation2 + $0x8] sm:$0xff] %v4883
        %4916 = vst [vmem:[#allocation2 + $0x10] sm:$0xff] %v4884
        %4917 = vst [vmem:[#allocation2 + $0x18] sm:$0xff] %v4885
        %4918 = vst [vmem:[#allocation2 + $0x20] sm:$0xff] %v4886
        %4919 = vst [vmem:[#allocation2 + $0x28] sm:$0xff] %v4887
        %4920 = vst [vmem:[#allocation2 + $0x30] sm:$0xff] %v4888
        %4921 = vst [vmem:[#allocation2 + $0x38] sm:$0xff] %v4889
        %4922 = vst [vmem:[#allocation2 + $0x40] sm:$0xff] %v4890
        %4923 = vst [vmem:[#allocation2 + $0x48] sm:$0xff] %v4891
        %4924 = vst [vmem:[#allocation2 + $0x50] sm:$0xff] %v4892
        %4925 = vst [vmem:[#allocation2 + $0x58] sm:$0xff] %v4893
        %4926 = vst [vmem:[#allocation2 + $0x60] sm:$0xff] %v4894
        %4927 = vst [vmem:[#allocation2 + $0x68] sm:$0xff] %v4895
        %4928 = vst [vmem:[#allocation2 + $0x70] sm:$0xff] %v4896
        %4929 = vst [vmem:[#allocation2 + $0x78] sm:$0xff] %v4897
        %4930 = vst [vmem:[#allocation2 + $0x80] sm:$0xff] %v4898
        %4931 = vst [vmem:[#allocation2 + $0x88] sm:$0xff] %v4899
        %4932 = vst [vmem:[#allocation2 + $0x90] sm:$0xff] %v4900
        %4933 = vst [vmem:[#allocation2 + $0x98] sm:$0xff] %v4901
        %4934 = vst [vmem:[#allocation2 + $0xa0] sm:$0xff] %v4902
        %4935 = vst [vmem:[#allocation2 + $0xa8] sm:$0xff] %v4903
        %4936 = vst [vmem:[#allocation2 + $0xb0] sm:$0xff] %v4904
        %4937 = vst [vmem:[#allocation2 + $0xb8] sm:$0xff] %v4905
        %4938 = vst [vmem:[#allocation2 + $0xc0] sm:$0xff] %v4906
        %4939 = vst [vmem:[#allocation2 + $0xc8] sm:$0xff] %v4907
        %4940 = vst [vmem:[#allocation2 + $0xd0] sm:$0xff] %v4908
        %4941 = vst [vmem:[#allocation2 + $0xd8] sm:$0xff] %v4909
        %4942 = vst [vmem:[#allocation2 + $0xe0] sm:$0xff] %v4910
        %4943 = vst [vmem:[#allocation2 + $0xe8] sm:$0xff] %v4911
        %4944 = vst [vmem:[#allocation2 + $0xf0] sm:$0xff] %v4912
        %4945 = vst [vmem:[#allocation2 + $0xf8] sm:$0xff] %v4913
        %v4946 = vld [vmem:[%s289 + $0x20] sm:$0xff]
        %v4947 = vld [vmem:[%s289 + $0x28] sm:$0xff]
        %v4948 = vld [vmem:[%s289 + $0x30] sm:$0xff]
        %v4949 = vld [vmem:[%s289 + $0x38] sm:$0xff]
        %v4950 = vld [vmem:[%s289 + $0x40] sm:$0xff]
        %v4951 = vld [vmem:[%s289 + $0x48] sm:$0xff]
        %v4952 = vld [vmem:[%s289 + $0x50] sm:$0xff]
        %v4953 = vld [vmem:[%s289 + $0x58] sm:$0xff]
        %v4954 = vld [vmem:[%s289 + $0x60] sm:$0xff]
        %v4955 = vld [vmem:[%s289 + $0x68] sm:$0xff]
        %v4956 = vld [vmem:[%s289 + $0x70] sm:$0xff]
        %v4957 = vld [vmem:[%s289 + $0x78] sm:$0xff]
        %v4958 = vld [vmem:[%s289 + $0x80] sm:$0xff]
        %v4959 = vld [vmem:[%s289 + $0x88] sm:$0xff]
        %v4960 = vld [vmem:[%s289 + $0x90] sm:$0xff]
        %v4961 = vld [vmem:[%s289 + $0x98] sm:$0xff]
        %v4962 = vld [vmem:[%s289 + $0xa0] sm:$0xff]
        %v4963 = vld [vmem:[%s289 + $0xa8] sm:$0xff]
        %v4964 = vld [vmem:[%s289 + $0xb0] sm:$0xff]
        %v4965 = vld [vmem:[%s289 + $0xb8] sm:$0xff]
        %v4966 = vld [vmem:[%s289 + $0xc0] sm:$0xff]
        %v4967 = vld [vmem:[%s289 + $0xc8] sm:$0xff]
        %v4968 = vld [vmem:[%s289 + $0xd0] sm:$0xff]
        %v4969 = vld [vmem:[%s289 + $0xd8] sm:$0xff]
        %v4970 = vld [vmem:[%s289 + $0xe0] sm:$0xff]
        %v4971 = vld [vmem:[%s289 + $0xe8] sm:$0xff]
        %v4972 = vld [vmem:[%s289 + $0xf0] sm:$0xff]
        %v4973 = vld [vmem:[%s289 + $0xf8] sm:$0xff]
        %v4974 = vld [vmem:[%s289 + $0x100] sm:$0xff]
        %v4975 = vld [vmem:[%s289 + $0x108] sm:$0xff]
        %v4976 = vld [vmem:[%s289 + $0x110] sm:$0xff]
        %v4977 = vld [vmem:[%s289 + $0x118] sm:$0xff]
        %v4978 = vld [vmem:[#allocation2] sm:$0xff]
        %v4979 = vld [vmem:[#allocation2 + $0x8] sm:$0xff]
        %v4980 = vld [vmem:[#allocation2 + $0x10] sm:$0xff]
        %v4981 = vld [vmem:[#allocation2 + $0x18] sm:$0xff]
        %v4982 = vld [vmem:[#allocation2 + $0x20] sm:$0xff]
        %v4983 = vld [vmem:[#allocation2 + $0x28] sm:$0xff]
        %v4984 = vld [vmem:[#allocation2 + $0x30] sm:$0xff]
        %v4985 = vld [vmem:[#allocation2 + $0x38] sm:$0xff]
        %v4986 = vld [vmem:[#allocation2 + $0x40] sm:$0xff]
        %v4987 = vld [vmem:[#allocation2 + $0x48] sm:$0xff]
        %v4988 = vld [vmem:[#allocation2 + $0x50] sm:$0xff]
        %v4989 = vld [vmem:[#allocation2 + $0x58] sm:$0xff]
        %v4990 = vld [vmem:[#allocation2 + $0x60] sm:$0xff]
        %v4991 = vld [vmem:[#allocation2 + $0x68] sm:$0xff]
        %v4992 = vld [vmem:[#allocation2 + $0x70] sm:$0xff]
        %v4993 = vld [vmem:[#allocation2 + $0x78] sm:$0xff]
        %v4994 = vld [vmem:[#allocation2 + $0x80] sm:$0xff]
        %v4995 = vld [vmem:[#allocation2 + $0x88] sm:$0xff]
        %v4996 = vld [vmem:[#allocation2 + $0x90] sm:$0xff]
        %v4997 = vld [vmem:[#allocation2 + $0x98] sm:$0xff]
        %v4998 = vld [vmem:[#allocation2 + $0xa0] sm:$0xff]
        %v4999 = vld [vmem:[#allocation2 + $0xa8] sm:$0xff]
        %v5000 = vld [vmem:[#allocation2 + $0xb0] sm:$0xff]
        %v5001 = vld [vmem:[#allocation2 + $0xb8] sm:$0xff]
        %v5002 = vld [vmem:[#allocation2 + $0xc0] sm:$0xff]
        %v5003 = vld [vmem:[#allocation2 + $0xc8] sm:$0xff]
        %v5004 = vld [vmem:[#allocation2 + $0xd0] sm:$0xff]
        %v5005 = vld [vmem:[#allocation2 + $0xd8] sm:$0xff]
        %v5006 = vld [vmem:[#allocation2 + $0xe0] sm:$0xff]
        %v5007 = vld [vmem:[#allocation2 + $0xe8] sm:$0xff]
        %v5008 = vld [vmem:[#allocation2 + $0xf0] sm:$0xff]
        %v5009 = vld [vmem:[#allocation2 + $0xf8] sm:$0xff]
        %s5010 = scalar_lea.vmem %s3, 1024
        %v5011 = vld [vmem:[%s5010] sm:$0xf]
        %v5012 = vld [vmem:[%s5010 + $0x4] sm:$0xf]
        %v5013 = vld [vmem:[%s5010 + $0x8] sm:$0xf]
        %v5014 = vld [vmem:[%s5010 + $0xc] sm:$0xf]
        %v5015 = vld [vmem:[%s5010 + $0x10] sm:$0xf]
        %v5016 = vld [vmem:[%s5010 + $0x14] sm:$0xf]
        %v5017 = vld [vmem:[%s5010 + $0x18] sm:$0xf]
        %v5018 = vld [vmem:[%s5010 + $0x1c] sm:$0xf]
        %v5019 = vld [vmem:[%s5010 + $0x20] sm:$0xf]
        %v5020 = vld [vmem:[%s5010 + $0x24] sm:$0xf]
        %v5021 = vld [vmem:[%s5010 + $0x28] sm:$0xf]
        %v5022 = vld [vmem:[%s5010 + $0x2c] sm:$0xf]
        %v5023 = vld [vmem:[%s5010 + $0x30] sm:$0xf]
        %v5024 = vld [vmem:[%s5010 + $0x34] sm:$0xf]
        %v5025 = vld [vmem:[%s5010 + $0x38] sm:$0xf]
        %v5026 = vld [vmem:[%s5010 + $0x3c] sm:$0xf]
        %v5027 = vld [vmem:[%s5010 + $0x40] sm:$0xf]
        %v5028 = vld [vmem:[%s5010 + $0x44] sm:$0xf]
        %v5029 = vld [vmem:[%s5010 + $0x48] sm:$0xf]
        %v5030 = vld [vmem:[%s5010 + $0x4c] sm:$0xf]
        %v5031 = vld [vmem:[%s5010 + $0x50] sm:$0xf]
        %v5032 = vld [vmem:[%s5010 + $0x54] sm:$0xf]
        %v5033 = vld [vmem:[%s5010 + $0x58] sm:$0xf]
        %v5034 = vld [vmem:[%s5010 + $0x5c] sm:$0xf]
        %v5035 = vld [vmem:[%s5010 + $0x60] sm:$0xf]
        %v5036 = vld [vmem:[%s5010 + $0x64] sm:$0xf]
        %v5037 = vld [vmem:[%s5010 + $0x68] sm:$0xf]
        %v5038 = vld [vmem:[%s5010 + $0x6c] sm:$0xf]
        %v5039 = vld [vmem:[%s5010 + $0x70] sm:$0xf]
        %v5040 = vld [vmem:[%s5010 + $0x74] sm:$0xf]
        %v5041 = vld [vmem:[%s5010 + $0x78] sm:$0xf]
        %v5042 = vld [vmem:[%s5010 + $0x7c] sm:$0xf]
        %v5075 = vunpack.c.l.b16 %v4946
        %v5076 = vunpack.c.h.b16 %v4946
        %v5077 = vunpack.c.l.b16 %v4947
        %v5078 = vunpack.c.h.b16 %v4947
        %v5079 = vunpack.c.l.b16 %v4948
        %v5080 = vunpack.c.h.b16 %v4948
        %v5081 = vunpack.c.l.b16 %v4949
        %v5082 = vunpack.c.h.b16 %v4949
        %v5083 = vunpack.c.l.b16 %v4950
        %v5084 = vunpack.c.h.b16 %v4950
        %v5085 = vunpack.c.l.b16 %v4951
        %v5086 = vunpack.c.h.b16 %v4951
        %v5087 = vunpack.c.l.b16 %v4952
        %v5088 = vunpack.c.h.b16 %v4952
        %v5089 = vunpack.c.l.b16 %v4953
        %v5090 = vunpack.c.h.b16 %v4953
        %v5091 = vunpack.c.l.b16 %v4954
        %v5092 = vunpack.c.h.b16 %v4954
        %v5093 = vunpack.c.l.b16 %v4955
        %v5094 = vunpack.c.h.b16 %v4955
        %v5095 = vunpack.c.l.b16 %v4956
        %v5096 = vunpack.c.h.b16 %v4956
        %v5097 = vunpack.c.l.b16 %v4957
        %v5098 = vunpack.c.h.b16 %v4957
        %v5099 = vunpack.c.l.b16 %v4958
        %v5100 = vunpack.c.h.b16 %v4958
        %v5101 = vunpack.c.l.b16 %v4959
        %v5102 = vunpack.c.h.b16 %v4959
        %v5103 = vunpack.c.l.b16 %v4960
        %v5104 = vunpack.c.h.b16 %v4960
        %v5105 = vunpack.c.l.b16 %v4961
        %v5106 = vunpack.c.h.b16 %v4961
        %v5107 = vunpack.c.l.b16 %v4962
        %v5108 = vunpack.c.h.b16 %v4962
        %v5109 = vunpack.c.l.b16 %v4963
        %v5110 = vunpack.c.h.b16 %v4963
        %v5111 = vunpack.c.l.b16 %v4964
        %v5112 = vunpack.c.h.b16 %v4964
        %v5113 = vunpack.c.l.b16 %v4965
        %v5114 = vunpack.c.h.b16 %v4965
        %v5115 = vunpack.c.l.b16 %v4966
        %v5116 = vunpack.c.h.b16 %v4966
        %v5117 = vunpack.c.l.b16 %v4967
        %v5118 = vunpack.c.h.b16 %v4967
        %v5119 = vunpack.c.l.b16 %v4968
        %v5120 = vunpack.c.h.b16 %v4968
        %v5121 = vunpack.c.l.b16 %v4969
        %v5122 = vunpack.c.h.b16 %v4969
        %v5123 = vunpack.c.l.b16 %v4970
        %v5124 = vunpack.c.h.b16 %v4970
        %v5125 = vunpack.c.l.b16 %v4971
        %v5126 = vunpack.c.h.b16 %v4971
        %v5127 = vunpack.c.l.b16 %v4972
        %v5128 = vunpack.c.h.b16 %v4972
        %v5129 = vunpack.c.l.b16 %v4973
        %v5130 = vunpack.c.h.b16 %v4973
        %v5131 = vunpack.c.l.b16 %v4974
        %v5132 = vunpack.c.h.b16 %v4974
        %v5133 = vunpack.c.l.b16 %v4975
        %v5134 = vunpack.c.h.b16 %v4975
        %v5135 = vunpack.c.l.b16 %v4976
        %v5136 = vunpack.c.h.b16 %v4976
        %v5137 = vunpack.c.l.b16 %v4977
        %v5138 = vunpack.c.h.b16 %v4977
        %v5139 = vpack.c.b16 %v5077, %v5075
        %v5140 = vpack.c.b16 %v5078, %v5076
        %v5141 = vpack.c.b16 %v5081, %v5079
        %v5142 = vpack.c.b16 %v5082, %v5080
        %v5143 = vpack.c.b16 %v5085, %v5083
        %v5144 = vpack.c.b16 %v5086, %v5084
        %v5145 = vpack.c.b16 %v5089, %v5087
        %v5146 = vpack.c.b16 %v5090, %v5088
        %v5147 = vpack.c.b16 %v5093, %v5091
        %v5148 = vpack.c.b16 %v5094, %v5092
        %v5149 = vpack.c.b16 %v5097, %v5095
        %v5150 = vpack.c.b16 %v5098, %v5096
        %v5151 = vpack.c.b16 %v5101, %v5099
        %v5152 = vpack.c.b16 %v5102, %v5100
        %v5153 = vpack.c.b16 %v5105, %v5103
        %v5154 = vpack.c.b16 %v5106, %v5104
        %v5155 = vpack.c.b16 %v5109, %v5107
        %v5156 = vpack.c.b16 %v5110, %v5108
        %v5157 = vpack.c.b16 %v5113, %v5111
        %v5158 = vpack.c.b16 %v5114, %v5112
        %v5159 = vpack.c.b16 %v5117, %v5115
        %v5160 = vpack.c.b16 %v5118, %v5116
        %v5161 = vpack.c.b16 %v5121, %v5119
        %v5162 = vpack.c.b16 %v5122, %v5120
        %v5163 = vpack.c.b16 %v5125, %v5123
        %v5164 = vpack.c.b16 %v5126, %v5124
        %v5165 = vpack.c.b16 %v5129, %v5127
        %v5166 = vpack.c.b16 %v5130, %v5128
        %v5167 = vpack.c.b16 %v5133, %v5131
        %v5168 = vpack.c.b16 %v5134, %v5132
        %v5169 = vpack.c.b16 %v5137, %v5135
        %v5170 = vpack.c.b16 %v5138, %v5136
        %v5235 = vunpack.c.l.b16 %v5011
        %v5236 = vunpack.c.l.b16 %v5012
        %v5237 = vunpack.c.l.b16 %v5013
        %v5238 = vunpack.c.l.b16 %v5014
        %v5239 = vunpack.c.l.b16 %v5015
        %v5240 = vunpack.c.l.b16 %v5016
        %v5241 = vunpack.c.l.b16 %v5017
        %v5242 = vunpack.c.l.b16 %v5018
        %v5243 = vunpack.c.l.b16 %v5019
        %v5244 = vunpack.c.l.b16 %v5020
        %v5245 = vunpack.c.l.b16 %v5021
        %v5246 = vunpack.c.l.b16 %v5022
        %v5247 = vunpack.c.l.b16 %v5023
        %v5248 = vunpack.c.l.b16 %v5024
        %v5249 = vunpack.c.l.b16 %v5025
        %v5250 = vunpack.c.l.b16 %v5026
        %v5251 = vunpack.c.l.b16 %v5027
        %v5252 = vunpack.c.l.b16 %v5028
        %v5253 = vunpack.c.l.b16 %v5029
        %v5254 = vunpack.c.l.b16 %v5030
        %v5255 = vunpack.c.l.b16 %v5031
        %v5256 = vunpack.c.l.b16 %v5032
        %v5257 = vunpack.c.l.b16 %v5033
        %v5258 = vunpack.c.l.b16 %v5034
        %v5259 = vunpack.c.l.b16 %v5035
        %v5260 = vunpack.c.l.b16 %v5036
        %v5261 = vunpack.c.l.b16 %v5037
        %v5262 = vunpack.c.l.b16 %v5038
        %v5263 = vunpack.c.l.b16 %v5039
        %v5264 = vunpack.c.l.b16 %v5040
        %v5265 = vunpack.c.l.b16 %v5041
        %v5266 = vunpack.c.l.b16 %v5042
        %v5267 = vpack.c.b16 %v5236, %v5235
        %v5268 = vpack.c.b16 %v5238, %v5237
        %v5269 = vpack.c.b16 %v5240, %v5239
        %v5270 = vpack.c.b16 %v5242, %v5241
        %v5271 = vpack.c.b16 %v5244, %v5243
        %v5272 = vpack.c.b16 %v5246, %v5245
        %v5273 = vpack.c.b16 %v5248, %v5247
        %v5274 = vpack.c.b16 %v5250, %v5249
        %v5275 = vpack.c.b16 %v5252, %v5251
        %v5276 = vpack.c.b16 %v5254, %v5253
        %v5277 = vpack.c.b16 %v5256, %v5255
        %v5278 = vpack.c.b16 %v5258, %v5257
        %v5279 = vpack.c.b16 %v5260, %v5259
        %v5280 = vpack.c.b16 %v5262, %v5261
        %v5281 = vpack.c.b16 %v5264, %v5263
        %v5282 = vpack.c.b16 %v5266, %v5265
        %5299 = vmatprep.subr.bf16.mxu0 0
        %5300 = vmatpush1.bf16.msra.mxu0 %v5267
        %5301 = vmatprep.subr.bf16.mxu0 0
        %5302 = vmatpush1.bf16.msra.mxu0 %v5268
        %5303 = vmatprep.subr.bf16.mxu0 0
        %5304 = vmatpush1.bf16.msra.mxu0 %v5269
        %5305 = vmatprep.subr.bf16.mxu0 0
        %5306 = vmatpush1.bf16.msra.mxu0 %v5270
        %5307 = vmatprep.subr.bf16.mxu0 0
        %5308 = vmatpush1.bf16.msra.mxu0 %v5271
        %5309 = vmatprep.subr.bf16.mxu0 0
        %5310 = vmatpush1.bf16.msra.mxu0 %v5272
        %5311 = vmatprep.subr.bf16.mxu0 0
        %5312 = vmatpush1.bf16.msra.mxu0 %v5273
        %5313 = vmatprep.subr.bf16.mxu0 0
        %5314 = vmatpush1.bf16.msra.mxu0 %v5274
        %5315 = vmatprep.subr.bf16.mxu0 0
        %5316 = vmatpush1.bf16.msra.mxu0 %v5275
        %5317 = vmatprep.subr.bf16.mxu0 0
        %5318 = vmatpush1.bf16.msra.mxu0 %v5276
        %5319 = vmatprep.subr.bf16.mxu0 0
        %5320 = vmatpush1.bf16.msra.mxu0 %v5277
        %5321 = vmatprep.subr.bf16.mxu0 0
        %5322 = vmatpush1.bf16.msra.mxu0 %v5278
        %5323 = vmatprep.subr.bf16.mxu0 0
        %5324 = vmatpush1.bf16.msra.mxu0 %v5279
        %5325 = vmatprep.subr.bf16.mxu0 0
        %5326 = vmatpush1.bf16.msra.mxu0 %v5280
        %5327 = vmatprep.subr.bf16.mxu0 0
        %5328 = vmatpush1.bf16.msra.mxu0 %v5281
        %5329 = vmatprep.subr.bf16.mxu0 0
        %5330 = vmatpush1.bf16.msra.mxu0 %v5282
        %5331 = vmatprep.mubr.bf16.mxu0 %v5140
        %5332 = vmatmul.mubr.bf16.gmra.mrb[0].mxu0 %v5139
        %v5333 = vpop.f32.mrb[0].mxu0
        %v5334 = vadd.f32 0.0, %v5333
        %v5335 = vpop.f32.mrb[0].mxu0
        %v5336 = vpop.f32.mrb[0].mxu0
        %v5337 = vadd.f32 0.0, %v5336
        %v5338 = vpop.f32.mrb[0].mxu0
        %5339 = vmatprep.mubr.bf16.mxu0 %v5142
        %5340 = vmatmul.mubr.bf16.gmra.mrb[0].mxu0 %v5141
        %v5341 = vpop.f32.mrb[0].mxu0
        %v5342 = vadd.f32 0.0, %v5341
        %v5343 = vpop.f32.mrb[0].mxu0
        %v5344 = vpop.f32.mrb[0].mxu0
        %v5345 = vadd.f32 0.0, %v5344
        %v5346 = vpop.f32.mrb[0].mxu0
        %5347 = vmatprep.mubr.bf16.mxu0 %v5144
        %5348 = vmatmul.mubr.bf16.gmra.mrb[0].mxu0 %v5143
        %v5349 = vpop.f32.mrb[0].mxu0
        %v5350 = vadd.f32 0.0, %v5349
        %v5351 = vpop.f32.mrb[0].mxu0
        %v5352 = vpop.f32.mrb[0].mxu0
        %v5353 = vadd.f32 0.0, %v5352
        %v5354 = vpop.f32.mrb[0].mxu0
        %5355 = vmatprep.mubr.bf16.mxu0 %v5146
        %5356 = vmatmul.mubr.bf16.gmra.mrb[0].mxu0 %v5145
        %v5357 = vpop.f32.mrb[0].mxu0
        %v5358 = vadd.f32 0.0, %v5357
        %v5359 = vpop.f32.mrb[0].mxu0
        %v5360 = vpop.f32.mrb[0].mxu0
        %v5361 = vadd.f32 0.0, %v5360
        %v5362 = vpop.f32.mrb[0].mxu0
        %5363 = vmatprep.mubr.bf16.mxu0 %v5148
        %5364 = vmatmul.mubr.bf16.gmra.mrb[0].mxu0 %v5147
        %v5365 = vpop.f32.mrb[0].mxu0
        %v5366 = vadd.f32 0.0, %v5365
        %v5367 = vpop.f32.mrb[0].mxu0
        %v5368 = vpop.f32.mrb[0].mxu0
        %v5369 = vadd.f32 0.0, %v5368
        %v5370 = vpop.f32.mrb[0].mxu0
        %5371 = vmatprep.mubr.bf16.mxu0 %v5150
        %5372 = vmatmul.mubr.bf16.gmra.mrb[0].mxu0 %v5149
        %v5373 = vpop.f32.mrb[0].mxu0
        %v5374 = vadd.f32 0.0, %v5373
        %v5375 = vpop.f32.mrb[0].mxu0
        %v5376 = vpop.f32.mrb[0].mxu0
        %v5377 = vadd.f32 0.0, %v5376
        %v5378 = vpop.f32.mrb[0].mxu0
        %5379 = vmatprep.mubr.bf16.mxu0 %v5152
        %5380 = vmatmul.mubr.bf16.gmra.mrb[0].mxu0 %v5151
        %v5381 = vpop.f32.mrb[0].mxu0
        %v5382 = vadd.f32 0.0, %v5381
        %v5383 = vpop.f32.mrb[0].mxu0
        %v5384 = vpop.f32.mrb[0].mxu0
        %v5385 = vadd.f32 0.0, %v5384
        %v5386 = vpop.f32.mrb[0].mxu0
        %5387 = vmatprep.mubr.bf16.mxu0 %v5154
        %5388 = vmatmul.mubr.bf16.gmra.mrb[0].mxu0 %v5153
        %v5389 = vpop.f32.mrb[0].mxu0
        %v5390 = vadd.f32 0.0, %v5389
        %v5391 = vpop.f32.mrb[0].mxu0
        %v5392 = vpop.f32.mrb[0].mxu0
        %v5393 = vadd.f32 0.0, %v5392
        %v5394 = vpop.f32.mrb[0].mxu0
        %5395 = vmatprep.mubr.bf16.mxu0 %v5156
        %5396 = vmatmul.mubr.bf16.gmra.mrb[0].mxu0 %v5155
        %v5397 = vpop.f32.mrb[0].mxu0
        %v5398 = vadd.f32 0.0, %v5397
        %v5399 = vpop.f32.mrb[0].mxu0
        %v5400 = vpop.f32.mrb[0].mxu0
        %v5401 = vadd.f32 0.0, %v5400
        %v5402 = vpop.f32.mrb[0].mxu0
        %5403 = vmatprep.mubr.bf16.mxu0 %v5158
        %5404 = vmatmul.mubr.bf16.gmra.mrb[0].mxu0 %v5157
        %v5405 = vpop.f32.mrb[0].mxu0
        %v5406 = vadd.f32 0.0, %v5405
        %v5407 = vpop.f32.mrb[0].mxu0
        %v5408 = vpop.f32.mrb[0].mxu0
        %v5409 = vadd.f32 0.0, %v5408
        %v5410 = vpop.f32.mrb[0].mxu0
        %5411 = vmatprep.mubr.bf16.mxu0 %v5160
        %5412 = vmatmul.mubr.bf16.gmra.mrb[0].mxu0 %v5159
        %v5413 = vpop.f32.mrb[0].mxu0
        %v5414 = vadd.f32 0.0, %v5413
        %v5415 = vpop.f32.mrb[0].mxu0
        %v5416 = vpop.f32.mrb[0].mxu0
        %v5417 = vadd.f32 0.0, %v5416
        %v5418 = vpop.f32.mrb[0].mxu0
        %5419 = vmatprep.mubr.bf16.mxu0 %v5162
        %5420 = vmatmul.mubr.bf16.gmra.mrb[0].mxu0 %v5161
        %v5421 = vpop.f32.mrb[0].mxu0
        %v5422 = vadd.f32 0.0, %v5421
        %v5423 = vpop.f32.mrb[0].mxu0
        %v5424 = vpop.f32.mrb[0].mxu0
        %v5425 = vadd.f32 0.0, %v5424
        %v5426 = vpop.f32.mrb[0].mxu0
        %5427 = vmatprep.mubr.bf16.mxu0 %v5164
        %5428 = vmatmul.mubr.bf16.gmra.mrb[0].mxu0 %v5163
        %v5429 = vpop.f32.mrb[0].mxu0
        %v5430 = vadd.f32 0.0, %v5429
        %v5431 = vpop.f32.mrb[0].mxu0
        %v5432 = vpop.f32.mrb[0].mxu0
        %v5433 = vadd.f32 0.0, %v5432
        %v5434 = vpop.f32.mrb[0].mxu0
        %5435 = vmatprep.mubr.bf16.mxu0 %v5166
        %5436 = vmatmul.mubr.bf16.gmra.mrb[0].mxu0 %v5165
        %v5437 = vpop.f32.mrb[0].mxu0
        %v5438 = vadd.f32 0.0, %v5437
        %v5439 = vpop.f32.mrb[0].mxu0
        %v5440 = vpop.f32.mrb[0].mxu0
        %v5441 = vadd.f32 0.0, %v5440
        %v5442 = vpop.f32.mrb[0].mxu0
        %5443 = vmatprep.mubr.bf16.mxu0 %v5168
        %5444 = vmatmul.mubr.bf16.gmra.mrb[0].mxu0 %v5167
        %v5445 = vpop.f32.mrb[0].mxu0
        %v5446 = vadd.f32 0.0, %v5445
        %v5447 = vpop.f32.mrb[0].mxu0
        %v5448 = vpop.f32.mrb[0].mxu0
        %v5449 = vadd.f32 0.0, %v5448
        %v5450 = vpop.f32.mrb[0].mxu0
        %5451 = vmatprep.mubr.bf16.mxu0 %v5170
        %5452 = vmatmul.mubr.bf16.gmra.mrb[0].mxu0 %v5169
        %v5453 = vpop.f32.mrb[0].mxu0
        %v5454 = vadd.f32 0.0, %v5453
        %v5455 = vpop.f32.mrb[0].mxu0
        %v5456 = vpop.f32.mrb[0].mxu0
        %v5457 = vadd.f32 0.0, %v5456
        %v5458 = vpop.f32.mrb[0].mxu0
        %5459 = vdwg.mxu0
        %v5460 = vadd.f32 %v4978, %v5334
        %v5461 = vadd.f32 %v4979, %v5337
        %v5462 = vadd.f32 %v4980, %v5342
        %v5463 = vadd.f32 %v4981, %v5345
        %v5464 = vadd.f32 %v4982, %v5350
        %v5465 = vadd.f32 %v4983, %v5353
        %v5466 = vadd.f32 %v4984, %v5358
        %v5467 = vadd.f32 %v4985, %v5361
        %v5468 = vadd.f32 %v4986, %v5366
        %v5469 = vadd.f32 %v4987, %v5369
        %v5470 = vadd.f32 %v4988, %v5374
        %v5471 = vadd.f32 %v4989, %v5377
        %v5472 = vadd.f32 %v4990, %v5382
        %v5473 = vadd.f32 %v4991, %v5385
        %v5474 = vadd.f32 %v4992, %v5390
        %v5475 = vadd.f32 %v4993, %v5393
        %v5476 = vadd.f32 %v4994, %v5398
        %v5477 = vadd.f32 %v4995, %v5401
        %v5478 = vadd.f32 %v4996, %v5406
        %v5479 = vadd.f32 %v4997, %v5409
        %v5480 = vadd.f32 %v4998, %v5414
        %v5481 = vadd.f32 %v4999, %v5417
        %v5482 = vadd.f32 %v5000, %v5422
        %v5483 = vadd.f32 %v5001, %v5425
        %v5484 = vadd.f32 %v5002, %v5430
        %v5485 = vadd.f32 %v5003, %v5433
        %v5486 = vadd.f32 %v5004, %v5438
        %v5487 = vadd.f32 %v5005, %v5441
        %v5488 = vadd.f32 %v5006, %v5446
        %v5489 = vadd.f32 %v5007, %v5449
        %v5490 = vadd.f32 %v5008, %v5454
        %v5491 = vadd.f32 %v5009, %v5457
        %5492 = vst [vmem:[#allocation2] sm:$0xff] %v5460
        %5493 = vst [vmem:[#allocation2 + $0x8] sm:$0xff] %v5461
        %5494 = vst [vmem:[#allocation2 + $0x10] sm:$0xff] %v5462
        %5495 = vst [vmem:[#allocation2 + $0x18] sm:$0xff] %v5463
        %5496 = vst [vmem:[#allocation2 + $0x20] sm:$0xff] %v5464
        %5497 = vst [vmem:[#allocation2 + $0x28] sm:$0xff] %v5465
        %5498 = vst [vmem:[#allocation2 + $0x30] sm:$0xff] %v5466
        %5499 = vst [vmem:[#allocation2 + $0x38] sm:$0xff] %v5467
        %5500 = vst [vmem:[#allocation2 + $0x40] sm:$0xff] %v5468
        %5501 = vst [vmem:[#allocation2 + $0x48] sm:$0xff] %v5469
        %5502 = vst [vmem:[#allocation2 + $0x50] sm:$0xff] %v5470
        %5503 = vst [vmem:[#allocation2 + $0x58] sm:$0xff] %v5471
        %5504 = vst [vmem:[#allocation2 + $0x60] sm:$0xff] %v5472
        %5505 = vst [vmem:[#allocation2 + $0x68] sm:$0xff] %v5473
        %5506 = vst [vmem:[#allocation2 + $0x70] sm:$0xff] %v5474
        %5507 = vst [vmem:[#allocation2 + $0x78] sm:$0xff] %v5475
        %5508 = vst [vmem:[#allocation2 + $0x80] sm:$0xff] %v5476
        %5509 = vst [vmem:[#allocation2 + $0x88] sm:$0xff] %v5477
        %5510 = vst [vmem:[#allocation2 + $0x90] sm:$0xff] %v5478
        %5511 = vst [vmem:[#allocation2 + $0x98] sm:$0xff] %v5479
        %5512 = vst [vmem:[#allocation2 + $0xa0] sm:$0xff] %v5480
        %5513 = vst [vmem:[#allocation2 + $0xa8] sm:$0xff] %v5481
        %5514 = vst [vmem:[#allocation2 + $0xb0] sm:$0xff] %v5482
        %5515 = vst [vmem:[#allocation2 + $0xb8] sm:$0xff] %v5483
        %5516 = vst [vmem:[#allocation2 + $0xc0] sm:$0xff] %v5484
        %5517 = vst [vmem:[#allocation2 + $0xc8] sm:$0xff] %v5485
        %5518 = vst [vmem:[#allocation2 + $0xd0] sm:$0xff] %v5486
        %5519 = vst [vmem:[#allocation2 + $0xd8] sm:$0xff] %v5487
        %5520 = vst [vmem:[#allocation2 + $0xe0] sm:$0xff] %v5488
        %5521 = vst [vmem:[#allocation2 + $0xe8] sm:$0xff] %v5489
        %5522 = vst [vmem:[#allocation2 + $0xf0] sm:$0xff] %v5490
        %5523 = vst [vmem:[#allocation2 + $0xf8] sm:$0xff] %v5491
        %v5524 = vld [vmem:[%s4] sm:$0x1]
        %v5525 = vld [vmem:[%s5] sm:$0x1]
        %v5526 = vld [vmem:[#allocation2] ss:$2 sm:$0xff]
        %s5527 = scalar_lea.vmem [#allocation2], 1
        %v5528 = vld [vmem:[%s5527] ss:$2 sm:$0xff]
        %v5529 = vmax.f32 %v5526, %v5528
        %s5530 = scalar_lea.vmem [#allocation2], 16
        %v5531 = vld [vmem:[%s5530] ss:$2 sm:$0xff]
        %v5532 = vmax.f32 %v5529, %v5531
        %s5533 = scalar_lea.vmem [#allocation2], 17
        %v5534 = vld [vmem:[%s5533] ss:$2 sm:$0xff]
        %v5535 = vmax.f32 %v5532, %v5534
        %v5537 = vlaneseq
        %v5538 = vshrl.u32 %v5537, 7
        %v5539 = vsub.s32 0, %v5538
        %v5540 = vrot.slane %v5524, %v5539
        %v5542 = vmul.f32 %v5535, %v5540
        %v5544 = vlaneseq
        %v5545 = vshrl.u32 %v5544, 7
        %v5546 = vsub.s32 0, %v5545
        %v5547 = vrot.slane %v5525, %v5546
        %v5549 = vadd.f32 %v5542, %v5547
        %5550 = vst [vmem:[%s274] sm:$0xff] %v5549
        %s5551 = scalar_lea.vmem [#allocation2], 32
        %v5552 = vld [vmem:[%s5551] ss:$2 sm:$0xff]
        %s5553 = scalar_lea.vmem [#allocation2], 33
        %v5554 = vld [vmem:[%s5553] ss:$2 sm:$0xff]
        %v5555 = vmax.f32 %v5552, %v5554
        %s5556 = scalar_lea.vmem [#allocation2], 48
        %v5557 = vld [vmem:[%s5556] ss:$2 sm:$0xff]
        %v5558 = vmax.f32 %v5555, %v5557
        %s5559 = scalar_lea.vmem [#allocation2], 49
        %v5560 = vld [vmem:[%s5559] ss:$2 sm:$0xff]
        %v5561 = vmax.f32 %v5558, %v5560
        %v5562 = vmul.f32 %v5561, %v5540
        %v5563 = vadd.f32 %v5562, %v5547
        %s5564 = scalar_lea.vmem %s274, 8 [#allocation3]
        %5565 = vst [vmem:[%s5564] sm:$0xff] %v5563
        %s5566 = scalar_lea.vmem [#allocation2], 64
        %v5567 = vld [vmem:[%s5566] ss:$2 sm:$0xff]
        %s5568 = scalar_lea.vmem [#allocation2], 65
        %v5569 = vld [vmem:[%s5568] ss:$2 sm:$0xff]
        %v5570 = vmax.f32 %v5567, %v5569
        %s5571 = scalar_lea.vmem [#allocation2], 80
        %v5572 = vld [vmem:[%s5571] ss:$2 sm:$0xff]
        %v5573 = vmax.f32 %v5570, %v5572
        %s5574 = scalar_lea.vmem [#allocation2], 81
        %v5575 = vld [vmem:[%s5574] ss:$2 sm:$0xff]
        %v5576 = vmax.f32 %v5573, %v5575
        %v5577 = vmul.f32 %v5576, %v5540
        %v5578 = vadd.f32 %v5577, %v5547
        %s5579 = scalar_lea.vmem %s274, 16 [#allocation3]
        %5580 = vst [vmem:[%s5579] sm:$0xff] %v5578
        %s5581 = scalar_lea.vmem [#allocation2], 96
        %v5582 = vld [vmem:[%s5581] ss:$2 sm:$0xff]
        %s5583 = scalar_lea.vmem [#allocation2], 97
        %v5584 = vld [vmem:[%s5583] ss:$2 sm:$0xff]
        %v5585 = vmax.f32 %v5582, %v5584
        %s5586 = scalar_lea.vmem [#allocation2], 112
        %v5587 = vld [vmem:[%s5586] ss:$2 sm:$0xff]
        %v5588 = vmax.f32 %v5585, %v5587
        %s5589 = scalar_lea.vmem [#allocation2], 113
        %v5590 = vld [vmem:[%s5589] ss:$2 sm:$0xff]
        %v5591 = vmax.f32 %v5588, %v5590
        %v5592 = vmul.f32 %v5591, %v5540
        %v5593 = vadd.f32 %v5592, %v5547
        %s5594 = scalar_lea.vmem %s274, 24 [#allocation3]
        %5595 = vst [vmem:[%s5594] sm:$0xff] %v5593
        %s5596 = scalar_lea.vmem [#allocation2], 128
        %v5597 = vld [vmem:[%s5596] ss:$2 sm:$0xff]
        %s5598 = scalar_lea.vmem [#allocation2], 129
        %v5599 = vld [vmem:[%s5598] ss:$2 sm:$0xff]
        %v5600 = vmax.f32 %v5597, %v5599
        %s5601 = scalar_lea.vmem [#allocation2], 144
        %v5602 = vld [vmem:[%s5601] ss:$2 sm:$0xff]
        %v5603 = vmax.f32 %v5600, %v5602
        %s5604 = scalar_lea.vmem [#allocation2], 145
        %v5605 = vld [vmem:[%s5604] ss:$2 sm:$0xff]
        %v5606 = vmax.f32 %v5603, %v5605
        %v5607 = vmul.f32 %v5606, %v5540
        %v5608 = vadd.f32 %v5607, %v5547
        %s5609 = scalar_lea.vmem %s274, 32 [#allocation3]
        %5610 = vst [vmem:[%s5609] sm:$0xff] %v5608
        %s5611 = scalar_lea.vmem [#allocation2], 160
        %v5612 = vld [vmem:[%s5611] ss:$2 sm:$0xff]
        %s5613 = scalar_lea.vmem [#allocation2], 161
        %v5614 = vld [vmem:[%s5613] ss:$2 sm:$0xff]
        %v5615 = vmax.f32 %v5612, %v5614
        %s5616 = scalar_lea.vmem [#allocation2], 176
        %v5617 = vld [vmem:[%s5616] ss:$2 sm:$0xff]
        %v5618 = vmax.f32 %v5615, %v5617
        %s5619 = scalar_lea.vmem [#allocation2], 177
        %v5620 = vld [vmem:[%s5619] ss:$2 sm:$0xff]
        %v5621 = vmax.f32 %v5618, %v5620
        %v5622 = vmul.f32 %v5621, %v5540
        %v5623 = vadd.f32 %v5622, %v5547
        %s5624 = scalar_lea.vmem %s274, 40 [#allocation3]
        %5625 = vst [vmem:[%s5624] sm:$0xff] %v5623
        %s5626 = scalar_lea.vmem [#allocation2], 192
        %v5627 = vld [vmem:[%s5626] ss:$2 sm:$0xff]
        %s5628 = scalar_lea.vmem [#allocation2], 193
        %v5629 = vld [vmem:[%s5628] ss:$2 sm:$0xff]
        %v5630 = vmax.f32 %v5627, %v5629
        %s5631 = scalar_lea.vmem [#allocation2], 208
        %v5632 = vld [vmem:[%s5631] ss:$2 sm:$0xff]
        %v5633 = vmax.f32 %v5630, %v5632
        %s5634 = scalar_lea.vmem [#allocation2], 209
        %v5635 = vld [vmem:[%s5634] ss:$2 sm:$0xff]
        %v5636 = vmax.f32 %v5633, %v5635
        %v5637 = vmul.f32 %v5636, %v5540
        %v5638 = vadd.f32 %v5637, %v5547
        %s5639 = scalar_lea.vmem %s274, 48 [#allocation3]
        %5640 = vst [vmem:[%s5639] sm:$0xff] %v5638
        %s5641 = scalar_lea.vmem [#allocation2], 224
        %v5642 = vld [vmem:[%s5641] ss:$2 sm:$0xff]
        %s5643 = scalar_lea.vmem [#allocation2], 225
        %v5644 = vld [vmem:[%s5643] ss:$2 sm:$0xff]
        %v5645 = vmax.f32 %v5642, %v5644
        %s5646 = scalar_lea.vmem [#allocation2], 240
        %v5647 = vld [vmem:[%s5646] ss:$2 sm:$0xff]
        %v5648 = vmax.f32 %v5645, %v5647
        %s5649 = scalar_lea.vmem [#allocation2], 241
        %v5650 = vld [vmem:[%s5649] ss:$2 sm:$0xff]
        %v5651 = vmax.f32 %v5648, %v5650
        %v5652 = vmul.f32 %v5651, %v5540
        %v5653 = vadd.f32 %v5652, %v5547
        %s5654 = scalar_lea.vmem %s274, 56 [#allocation3]
        %5655 = vst [vmem:[%s5654] sm:$0xff] %v5653
        %s5656 = sand.u32 %s169, 1
        %s5657 = scalar_lea.sflag [#allocation4], %s5656
        %s5658 = sand.u32 %s169, 1
        %s5659 = smul.addr %s5658, 64
        %s5660 = scalar_lea.vmem [#allocation3], %s5659
        // Predicated region
        $region45: #{transition_down_pallas.1} parent=43 // pred_check
          %p5661 = pneg %p179
        $region46: #{transition_down_pallas.1} parent=43 // pred_check_branch
          %5663 = sbr.rel (%p5661) target = $region48
        $region47: #{transition_down_pallas.1} parent=43 // pred_region
          %s5665 = ssub.s32 1024, 1024
          %5666 = vsyncadd %s5657, %s5665
          %s5667 = smul.addr %s20, 8
          %s5668 = smul.addr %s5667, 128
          %s5669 = scalar_lea.hbm %s6, %s5668
          %s5670 = sshll.u32 %s5660, 4
          %s5671 = int_to_ptr.vmem [resolvable:$true] %s5670
          %5676 = dma.vmem_to_hbm [thread:$0]  %s5671, 1024, %s5669, %s5657, 128, 128, 8
        $region48: #{transition_down_pallas.1} parent=43 // pred_fallthru
          _
      $region44: #{transition_down_pallas.1} parent=5 // pred_fallthru
        _
      %p5677 = scmp.le.s32.totalorder 2, %s15
      // Predicated region
      $region49: #{transition_down_pallas.1} parent=5 // pred_check
        %p5678 = pneg %p5677
      $region50: #{transition_down_pallas.1} parent=5 // pred_check_branch
        %5680 = sbr.rel (%p5678) target = $region52
      $region51: #{transition_down_pallas.1} parent=5 // pred_region
        %s5681 = ssub.s32 %s15, 2
        // Predicated region
        $region53: #{transition_down_pallas.1} parent=51 // pred_check
          %p5682 = pneg %p185
        $region54: #{transition_down_pallas.1} parent=51 // pred_check_branch
          %5684 = sbr.rel (%p5682) target = $region56
        $region55: #{transition_down_pallas.1} parent=51 // pred_region
          %s5685 = sand.u32 %s170, 1
          %s5686 = scalar_lea.sflag [#allocation4], %s5685
          %s5687 = sand.u32 %s170, 1
          %s5688 = smul.addr %s5687, 64
          %s5689 = scalar_lea.vmem [#allocation3], %s5688
          %5690 = dma.done %s5686, 1024
        $region56: #{transition_down_pallas.1} parent=51 // pred_fallthru
          _
      $region52: #{transition_down_pallas.1} parent=5 // pred_fallthru
        _
    $region6: #{transition_down_pallas.1} parent=1 // loop_footer
      %s19 = sadd.s32 1, %s15
    $region7: #{transition_down_pallas.1} parent=1 // loop_footer_branch
      %14 = sbr.rel target = $region3
    $region8: #{transition_down_pallas.1} parent=1 // loop_exit
      _
    %5691 = vsyncpa [#allocation4], 1
    %s5692 = scalar_lea.sflag [#allocation4], 1
    %5693 = vsyncpa %s5692, 1

</llo_original>
